<compile_context>
chip_gen: v7x
topology: tpu7x:2x2x1
jax: 0.10.0
libtpu: 0.0.40
codegen_flags: <defaults>
</compile_context>

<pallas_src>
import numpy as np
import jax
import jax.numpy as jnp
from jax.experimental import pallas as pl
from jax.experimental.pallas import tpu as pltpu

NEG_SLOPE = 0.2
EPS = 1e-5

H1 = 6            # conv1 output height
BLK = 256         # lanes per conv1 output-row block (250 used, padded to 256)
NPAD = H1 * BLK   # 1536
C2 = 50           # conv1 output channels
WIDTH = 5         # conv1 output width
NOUT = 64         # final 8x8 output, lane col = ho*8 + wo


def _leaky(v):
    return jnp.where(v >= 0, v, NEG_SLOPE * v)


# ----------------------------------------------------------------------------- kernel
def resblock_kernel(x_ref, wcat_ref, bcat_ref, g1_ref, be1_ref,
                    A1a_ref, b1a_ref, A1b_ref, b1b_ref,
                    P_ref, Pt_ref, g2_ref, be2_ref,
                    M2_ref, bsum_ref, out_ref):
    B = x_ref.shape[0]
    bf16 = jnp.bfloat16

    # ---- fused entry linears (path1 | path2): one MXU push ------------------------
    # (K stays 100: padding K to 128 would need an extra un-fused wrapper op; the
    #  masked K tail is negligible in this DMA-bound regime.)
    x16 = x_ref[...].astype(bf16)
    hcat = jnp.dot(x16, wcat_ref[...], preferred_element_type=jnp.float32) + bcat_ref[...]
    h1 = hcat[:, :128]      # path1 (100 real features + 28 zero lanes)
    h2 = hcat[:, 128:]      # path2

    # ---- path1: BatchNorm1d (training-mode batch stats) + LeakyReLU ---------------
    mu1 = jnp.mean(h1, axis=0, keepdims=True)
    var1 = jnp.mean((h1 - mu1) * (h1 - mu1), axis=0, keepdims=True)
    h1 = _leaky((h1 - mu1) * jax.lax.rsqrt(var1 + EPS) * g1_ref[...] + be1_ref[...])
    # ---- path2: LeakyReLU (upsample = replication, folded into A1b) ---------------
    h2 = _leaky(h2)

    # ---- ConvTranspose2d #1 of both paths: one wide matmul each --------------------
    # column layout: col = ho*256 + co*5 + wo   (250 used per 256-lane block)
    ra = jnp.dot(h1.astype(bf16), A1a_ref[...],
                 preferred_element_type=jnp.float32) + b1a_ref[...]            # [B,1536]
    yb = _leaky(jnp.dot(h2.astype(bf16), A1b_ref[...],
                        preferred_element_type=jnp.float32) + b1b_ref[...])    # [B,1536]

    # ---- BatchNorm2d (path1): per-channel stats over (N, H, W) --------------------
    # Sum the six lane-aligned 256-wide row blocks first (pure VPU adds), then ONE
    # small f32 pooling matmul produces mean and mean-square together.
    inv_cnt = 1.0 / float(B * H1 * WIDTH)
    s = jnp.sum(ra, axis=0, keepdims=True)                                     # [1,1536]
    ss = jnp.sum(ra * ra, axis=0, keepdims=True)                               # [1,1536]
    acc_s = s[:, 0:BLK]
    acc_ss = ss[:, 0:BLK]
    for ho in range(1, H1):
        acc_s = acc_s + s[:, ho * BLK:(ho + 1) * BLK]
        acc_ss = acc_ss + ss[:, ho * BLK:(ho + 1) * BLK]
    acc2 = jnp.concatenate([acc_s, acc_ss], axis=0)                            # [2,256]
    pooled = jnp.dot(acc2, P_ref[...], preferred_element_type=jnp.float32) * inv_cnt  # [2,64]
    mean_c = pooled[0:1]
    var_c = jnp.maximum(pooled[1:2] - mean_c * mean_c, 0.0)   # clamp one-pass variance
    scale_c = g2_ref[...] * jax.lax.rsqrt(var_c + EPS)                          # [1,64]
    shift_c = be2_ref[...] - mean_c * scale_c                                   # [1,64]
    # Broadcast channel scale/shift to one 256-lane block (one tiny matmul), then
    # lane-replicate it 6x (cheap vreg concat) to match the ra layout.
    sc_sh = jnp.concatenate([scale_c, shift_c], axis=0)                         # [2,64]
    bro = jnp.dot(sc_sh, Pt_ref[...], preferred_element_type=jnp.float32)       # [2,256]
    scale_r = jnp.concatenate([bro[0:1]] * H1, axis=1)                          # [1,1536]
    shift_r = jnp.concatenate([bro[1:2]] * H1, axis=1)                          # [1,1536]
    ya = _leaky(ra * scale_r + shift_r)

    # ---- ConvTranspose2d #2 of both paths + residual add: ONE fused matmul ---------
    ycat = jnp.concatenate([ya, yb], axis=1).astype(bf16)                       # [B,3072]
    out64 = jnp.dot(ycat, M2_ref[...], preferred_element_type=jnp.float32) + bsum_ref[...]
    out_ref[...] = _leaky(out64)      # single lane-dense [B,64] store


# ----------------------------------------------------------------------------- wrapper
def resblock_pallas(x, kparams):
    B = x.shape[0]
    n_in = 1 + len(kparams)
    out64 = pl.pallas_call(
        resblock_kernel,
        out_shape=jax.ShapeDtypeStruct((B, NOUT), jnp.float32),
        in_specs=[pl.BlockSpec(memory_space=pltpu.MemorySpace.VMEM)] * n_in,
        out_specs=pl.BlockSpec(memory_space=pltpu.MemorySpace.VMEM),
    )(x, *kparams)
    # lane-dense (B, 64) -> PyTorch NCHW [B, 1, 8, 8]   (col = ho*8 + wo)
    return out64.reshape(B, 1, 8, 8)


resblock_pallas_jit = jax.jit(resblock_pallas)


# -------------------------------------------------------------- parameter preparation
def build_kernel_params(p):
    W3 = np.asarray(p["W3"], np.float32)    # [100, 50, 3, 5]
    W2b = np.asarray(p["W2b"], np.float32)  # [100, 50, 3, 5]
    W5 = np.asarray(p["W5"], np.float32)    # [50, 1, 3, 4]
    W3b = np.asarray(p["W3b"], np.float32)  # [50, 1, 3, 4]
    bf16 = jnp.bfloat16

    # fused entry linear: path1 in lanes 0..99, path2 in lanes 128..227
    Wcat = np.zeros((100, 256), np.float32)
    Wcat[:, :100] = np.asarray(p["W1c"], np.float32).T
    Wcat[:, 128:228] = np.asarray(p["W2c"], np.float32).T
    bcat = np.zeros((1, 256), np.float32)
    bcat[0, :100] = np.asarray(p["b1c"], np.float32)
    bcat[0, 128:228] = np.asarray(p["b2c"], np.float32)
    g1 = np.zeros((1, 128), np.float32); g1[0, :100] = np.asarray(p["g1"], np.float32)
    be1 = np.zeros((1, 128), np.float32); be1[0, :100] = np.asarray(p["be1"], np.float32)

    def build_A_big(W):
        # ConvTranspose (Cin=100,Cout=50,(3,5)) on replicated H_in=4 -> [128, 6*256]
        A = np.zeros((128, NPAD), np.float32)
        for ho in range(H1):
            blk = np.zeros((100, C2, WIDTH), np.float32)
            for kh in range(3):
                if 0 <= ho - kh <= 3:
                    blk += W[:, :, kh, :]
            A[:100, ho * BLK:ho * BLK + C2 * WIDTH] = blk.reshape(100, -1)  # col = co*5+wo
        return A

    def build_bias_big(b):
        bb = np.zeros((1, NPAD), np.float32)
        rep = np.repeat(np.asarray(b, np.float32), WIDTH)      # [250], col = co*5+wo
        for ho in range(H1):
            bb[0, ho * BLK:ho * BLK + C2 * WIDTH] = rep
        return bb

    def build_M_big(W):
        # ConvTranspose (50,1,(3,4)) on 6x5 input -> [1536, 64], out col = ho*8 + wo
        M = np.zeros((NPAD, NOUT), np.float32)
        Cin, _, KH, KW = W.shape
        for hi in range(H1):
            for ci in range(Cin):
                for wi in range(WIDTH):
                    col = hi * BLK + ci * WIDTH + wi
                    for kh in range(KH):
                        for kw in range(KW):
                            M[col, (hi + kh) * 8 + (wi + kw)] += W[ci, 0, kh, kw]
        return M

    # small per-block channel-pooling matrices for BN2d (shrunk from [1536,64] to [256,64])
    P = np.zeros((BLK, NOUT), np.float32)
    for co in range(C2):
        P[co * WIDTH:(co + 1) * WIDTH, co] = 1.0
    Pt = np.ascontiguousarray(P.T)                              # [64, 256]

    g2 = np.zeros((1, NOUT), np.float32); g2[0, :C2] = np.asarray(p["g2"], np.float32)
    be2 = np.zeros((1, NOUT), np.float32); be2[0, :C2] = np.asarray(p["be2"], np.float32)

    # stacked second-conv matrix: [M2a ; M2b]  -> one fused final matmul + add
    M_stack = np.concatenate([build_M_big(W5), build_M_big(W3b)], axis=0)   # [3072, 64]

    bsum = np.full((1, NOUT),
                   float(np.asarray(p["b5"])[0] + np.asarray(p["b3b"])[0]), np.float32)

    return [
        jnp.asarray(Wcat, bf16), jnp.asarray(bcat),
        jnp.asarray(g1), jnp.asarray(be1),
        jnp.asarray(build_A_big(W3), bf16), jnp.asarray(build_bias_big(p["b3"])),
        jnp.asarray(build_A_big(W2b), bf16), jnp.asarray(build_bias_big(p["b2b"])),
        jnp.asarray(P), jnp.asarray(Pt),
        jnp.asarray(g2), jnp.asarray(be2),
        jnp.asarray(M_stack, bf16),
        jnp.asarray(bsum),
    ]


# ------------------------------------------------------------------ pure-JAX reference
def _conv_transpose(x, w, b):
    # x: [B,Cin,H,W], w: [Cin,Cout,KH,KW] (PyTorch ConvTranspose2d layout), stride 1, no pad
    B, Ci, H, W = x.shape
    _, Co, KH, KW = w.shape
    out = jnp.zeros((B, Co, H + KH - 1, W + KW - 1), jnp.float32)
    for kh in range(KH):
        for kw in range(KW):
            out = out.at[:, :, kh:kh + H, kw:kw + W].add(
                jnp.einsum("bchw,cd->bdhw", x, w[:, :, kh, kw]))
    return out + b[None, :, None, None]


def reference_forward(x, p):
    B = x.shape[0]
    h1 = x @ p["W1c"].T + p["b1c"]
    mu = jnp.mean(h1, axis=0); var = jnp.mean((h1 - mu) ** 2, axis=0)
    h1 = (h1 - mu) / jnp.sqrt(var + EPS) * p["g1"] + p["be1"]
    h1 = _leaky(h1)
    x1 = jnp.broadcast_to(h1[:, :, None, None], (B, 100, 4, 1))        # upsample x4 (len-1)
    y1 = _conv_transpose(x1, p["W3"], p["b3"])                          # [B,50,6,5]
    mu2 = jnp.mean(y1, axis=(0, 2, 3))
    var2 = jnp.mean((y1 - mu2[None, :, None, None]) ** 2, axis=(0, 2, 3))
    y1 = ((y1 - mu2[None, :, None, None]) / jnp.sqrt(var2 + EPS)[None, :, None, None]
          * p["g2"][None, :, None, None] + p["be2"][None, :, None, None])
    y1 = _leaky(y1)
    z1 = _conv_transpose(y1, p["W5"], p["b5"])                          # [B,1,8,8]

    h2 = x @ p["W2c"].T + p["b2c"]
    x2 = _leaky(jnp.broadcast_to(h2[:, :, None], (B, 100, 4)))[:, :, :, None]
    y2 = _leaky(_conv_transpose(x2, p["W2b"], p["b2b"]))
    z2 = _conv_transpose(y2, p["W3b"], p["b3b"])
    return _leaky(z1 + z2)


# ----------------------------------------------------------------------------- main
if __name__ == "__main__":
    key = jax.random.PRNGKey(0)
    keys = jax.random.split(key, 20)
    # B=16 fills one full bf16 sublane tile per MXU push (perf-review item), while
    # staying a small, module-consistent shape.
    B = 16
    f32 = jnp.float32

    x = jax.random.normal(keys[0], (B, 100), f32)

    p = {
        "W1c": 0.1 * jax.random.normal(keys[1], (100, 100), f32),   # map1c_linear
        "b1c": 0.1 * jax.random.normal(keys[2], (100,), f32),
        "g1":  1.0 + 0.1 * jax.random.normal(keys[3], (100,), f32), # map1_bn
        "be1": 0.1 * jax.random.normal(keys[4], (100,), f32),
        "W3":  0.1 * jax.random.normal(keys[5], (100, 50, 3, 5), f32),  # map3_conv
        "b3":  0.1 * jax.random.normal(keys[6], (50,), f32),
        "g2":  1.0 + 0.1 * jax.random.normal(keys[7], (50,), f32),  # map4_bn
        "be2": 0.1 * jax.random.normal(keys[8], (50,), f32),
        "W5":  0.1 * jax.random.normal(keys[9], (50, 1, 3, 4), f32),    # map5_conv
        "b5":  0.1 * jax.random.normal(keys[10], (1,), f32),
        "W2c": 0.1 * jax.random.normal(keys[11], (100, 100), f32),  # map2c_linear
        "b2c": 0.1 * jax.random.normal(keys[12], (100,), f32),
        "W2b": 0.1 * jax.random.normal(keys[13], (100, 50, 3, 5), f32), # map2b_conv
        "b2b": 0.1 * jax.random.normal(keys[14], (50,), f32),
        "W3b": 0.1 * jax.random.normal(keys[15], (50, 1, 3, 4), f32),   # map3b_conv
        "b3b": 0.1 * jax.random.normal(keys[16], (1,), f32),
    }

    # Built once; reuse these device arrays across calls so weight prep is amortized.
    kparams = build_kernel_params(p)

    out = jax.block_until_ready(resblock_pallas_jit(x, kparams))        # [B,1,8,8]
    ref = jax.block_until_ready(reference_forward(x, p))

    assert out.shape == (B, 1, 8, 8), out.shape
    # tolerance covers bf16 MXU inputs (f32 accumulation); observed error is O(1e-3).
    np.testing.assert_allclose(np.asarray(out), np.asarray(ref), rtol=2e-2, atol=2e-2)
    print("KERNEL_OK")
</pallas_src>

<mosaic_0001>
module attributes {stable_mosaic.version = 11 : i64} {
  func.func @resblock_kernel(%arg0: memref<16x100xf32, #tpu.memory_space<vmem>>, %arg1: memref<100x256xbf16, #tpu.memory_space<vmem>>, %arg2: memref<1x256xf32, #tpu.memory_space<vmem>>, %arg3: memref<1x128xf32, #tpu.memory_space<vmem>>, %arg4: memref<1x128xf32, #tpu.memory_space<vmem>>, %arg5: memref<128x1536xbf16, #tpu.memory_space<vmem>>, %arg6: memref<1x1536xf32, #tpu.memory_space<vmem>>, %arg7: memref<128x1536xbf16, #tpu.memory_space<vmem>>, %arg8: memref<1x1536xf32, #tpu.memory_space<vmem>>, %arg9: memref<256x64xf32, #tpu.memory_space<vmem>>, %arg10: memref<64x256xf32, #tpu.memory_space<vmem>>, %arg11: memref<1x64xf32, #tpu.memory_space<vmem>>, %arg12: memref<1x64xf32, #tpu.memory_space<vmem>>, %arg13: memref<3072x64xbf16, #tpu.memory_space<vmem>>, %arg14: memref<1x64xf32, #tpu.memory_space<vmem>>, %arg15: memref<16x64xf32, #tpu.memory_space<vmem>>) attributes {dimension_semantics = [], scalar_prefetch = 0 : i64, scratch_operands = 0 : i64, tpu.core_type = #tpu.core_type<tc>} {
    %c0 = arith.constant 0 : index
    %c0_0 = arith.constant 0 : index
    %0 = vector.load %arg0[%c0, %c0_0] : memref<16x100xf32, #tpu.memory_space<vmem>>, vector<16x100xf32>
    %1 = arith.truncf %0 : vector<16x100xf32> to vector<16x100xbf16>
    %c0_1 = arith.constant 0 : index
    %c0_2 = arith.constant 0 : index
    %2 = vector.load %arg1[%c0_1, %c0_2] : memref<100x256xbf16, #tpu.memory_space<vmem>>, vector<100x256xbf16>
    %cst = arith.constant dense<0.000000e+00> : vector<16x256xf32>
    %3 = tpu.matmul %1, %2, %cst {dimension_numbers = #tpu.dot_dimension_numbers<[1], [0], [0], [1], [0, 0, 1, 1], [], []>} : vector<16x100xbf16>, vector<100x256xbf16>, vector<16x256xf32> -> vector<16x256xf32>
    %c0_3 = arith.constant 0 : index
    %c0_4 = arith.constant 0 : index
    %4 = vector.load %arg2[%c0_3, %c0_4] : memref<1x256xf32, #tpu.memory_space<vmem>>, vector<1x256xf32>
    %5 = vector.broadcast %4 : vector<1x256xf32> to vector<16x256xf32>
    %6 = arith.addf %3, %5 : vector<16x256xf32>
    %7 = vector.extract_strided_slice %6 {offsets = [0, 0], sizes = [16, 128], strides = [1, 1]} : vector<16x256xf32> to vector<16x128xf32>
    %8 = vector.extract_strided_slice %6 {offsets = [0, 128], sizes = [16, 128], strides = [1, 1]} : vector<16x256xf32> to vector<16x128xf32>
    %cst_5 = arith.constant dense<0.000000e+00> : vector<128xf32>
    %9 = vector.multi_reduction <add>, %7, %cst_5 [0] : vector<16x128xf32> to vector<128xf32>
    %10 = vector.shape_cast %9 : vector<128xf32> to vector<1x128xf32>
    %cst_6 = arith.constant 1.600000e+01 : f32
    %11 = vector.broadcast %cst_6 : f32 to vector<1x128xf32>
    %12 = arith.divf %10, %11 : vector<1x128xf32>
    %13 = vector.broadcast %12 : vector<1x128xf32> to vector<16x128xf32>
    %14 = arith.subf %7, %13 : vector<16x128xf32>
    %15 = vector.broadcast %12 : vector<1x128xf32> to vector<16x128xf32>
    %16 = arith.subf %7, %15 : vector<16x128xf32>
    %17 = arith.mulf %14, %16 : vector<16x128xf32>
    %cst_7 = arith.constant dense<0.000000e+00> : vector<128xf32>
    %18 = vector.multi_reduction <add>, %17, %cst_7 [0] : vector<16x128xf32> to vector<128xf32>
    %19 = vector.shape_cast %18 : vector<128xf32> to vector<1x128xf32>
    %cst_8 = arith.constant 1.600000e+01 : f32
    %20 = vector.broadcast %cst_8 : f32 to vector<1x128xf32>
    %21 = arith.divf %19, %20 : vector<1x128xf32>
    %22 = vector.broadcast %12 : vector<1x128xf32> to vector<16x128xf32>
    %23 = arith.subf %7, %22 : vector<16x128xf32>
    %cst_9 = arith.constant 9.99999974E-6 : f32
    %24 = vector.broadcast %cst_9 : f32 to vector<1x128xf32>
    %25 = arith.addf %21, %24 : vector<1x128xf32>
    %26 = math.rsqrt %25 : vector<1x128xf32>
    %27 = vector.broadcast %26 : vector<1x128xf32> to vector<16x128xf32>
    %28 = arith.mulf %23, %27 : vector<16x128xf32>
    %c0_10 = arith.constant 0 : index
    %c0_11 = arith.constant 0 : index
    %29 = vector.load %arg3[%c0_10, %c0_11] : memref<1x128xf32, #tpu.memory_space<vmem>>, vector<1x128xf32>
    %30 = vector.broadcast %29 : vector<1x128xf32> to vector<16x128xf32>
    %31 = arith.mulf %28, %30 : vector<16x128xf32>
    %c0_12 = arith.constant 0 : index
    %c0_13 = arith.constant 0 : index
    %32 = vector.load %arg4[%c0_12, %c0_13] : memref<1x128xf32, #tpu.memory_space<vmem>>, vector<1x128xf32>
    %33 = vector.broadcast %32 : vector<1x128xf32> to vector<16x128xf32>
    %34 = arith.addf %31, %33 : vector<16x128xf32>
    %cst_14 = arith.constant 0.000000e+00 : f32
    %35 = vector.broadcast %cst_14 : f32 to vector<16x128xf32>
    %36 = arith.cmpf oge, %34, %35 : vector<16x128xf32>
    %cst_15 = arith.constant 2.000000e-01 : f32
    %37 = vector.broadcast %cst_15 : f32 to vector<16x128xf32>
    %38 = arith.mulf %37, %34 : vector<16x128xf32>
    %39 = arith.select %36, %34, %38 : vector<16x128xi1>, vector<16x128xf32>
    %cst_16 = arith.constant 0.000000e+00 : f32
    %40 = vector.broadcast %cst_16 : f32 to vector<16x128xf32>
    %41 = arith.cmpf oge, %8, %40 : vector<16x128xf32>
    %cst_17 = arith.constant 2.000000e-01 : f32
    %42 = vector.broadcast %cst_17 : f32 to vector<16x128xf32>
    %43 = arith.mulf %42, %8 : vector<16x128xf32>
    %44 = arith.select %41, %8, %43 : vector<16x128xi1>, vector<16x128xf32>
    %45 = arith.truncf %39 : vector<16x128xf32> to vector<16x128xbf16>
    %c0_18 = arith.constant 0 : index
    %c0_19 = arith.constant 0 : index
    %46 = vector.load %arg5[%c0_18, %c0_19] : memref<128x1536xbf16, #tpu.memory_space<vmem>>, vector<128x1536xbf16>
    %cst_20 = arith.constant dense<0.000000e+00> : vector<16x1536xf32>
    %47 = tpu.matmul %45, %46, %cst_20 {dimension_numbers = #tpu.dot_dimension_numbers<[1], [0], [0], [1], [0, 0, 1, 1], [], []>} : vector<16x128xbf16>, vector<128x1536xbf16>, vector<16x1536xf32> -> vector<16x1536xf32>
    %c0_21 = arith.constant 0 : index
    %c0_22 = arith.constant 0 : index
    %48 = vector.load %arg6[%c0_21, %c0_22] : memref<1x1536xf32, #tpu.memory_space<vmem>>, vector<1x1536xf32>
    %49 = vector.broadcast %48 : vector<1x1536xf32> to vector<16x1536xf32>
    %50 = arith.addf %47, %49 : vector<16x1536xf32>
    %51 = arith.truncf %44 : vector<16x128xf32> to vector<16x128xbf16>
    %c0_23 = arith.constant 0 : index
    %c0_24 = arith.constant 0 : index
    %52 = vector.load %arg7[%c0_23, %c0_24] : memref<128x1536xbf16, #tpu.memory_space<vmem>>, vector<128x1536xbf16>
    %cst_25 = arith.constant dense<0.000000e+00> : vector<16x1536xf32>
    %53 = tpu.matmul %51, %52, %cst_25 {dimension_numbers = #tpu.dot_dimension_numbers<[1], [0], [0], [1], [0, 0, 1, 1], [], []>} : vector<16x128xbf16>, vector<128x1536xbf16>, vector<16x1536xf32> -> vector<16x1536xf32>
    %c0_26 = arith.constant 0 : index
    %c0_27 = arith.constant 0 : index
    %54 = vector.load %arg8[%c0_26, %c0_27] : memref<1x1536xf32, #tpu.memory_space<vmem>>, vector<1x1536xf32>
    %55 = vector.broadcast %54 : vector<1x1536xf32> to vector<16x1536xf32>
    %56 = arith.addf %53, %55 : vector<16x1536xf32>
    %cst_28 = arith.constant 0.000000e+00 : f32
    %57 = vector.broadcast %cst_28 : f32 to vector<16x1536xf32>
    %58 = arith.cmpf oge, %56, %57 : vector<16x1536xf32>
    %cst_29 = arith.constant 2.000000e-01 : f32
    %59 = vector.broadcast %cst_29 : f32 to vector<16x1536xf32>
    %60 = arith.mulf %59, %56 : vector<16x1536xf32>
    %61 = arith.select %58, %56, %60 : vector<16x1536xi1>, vector<16x1536xf32>
    %cst_30 = arith.constant dense<0.000000e+00> : vector<1536xf32>
    %62 = vector.multi_reduction <add>, %50, %cst_30 [0] : vector<16x1536xf32> to vector<1536xf32>
    %63 = vector.shape_cast %62 : vector<1536xf32> to vector<1x1536xf32>
    %64 = arith.mulf %50, %50 : vector<16x1536xf32>
    %cst_31 = arith.constant dense<0.000000e+00> : vector<1536xf32>
    %65 = vector.multi_reduction <add>, %64, %cst_31 [0] : vector<16x1536xf32> to vector<1536xf32>
    %66 = vector.shape_cast %65 : vector<1536xf32> to vector<1x1536xf32>
    %67 = vector.extract_strided_slice %63 {offsets = [0, 0], sizes = [1, 256], strides = [1, 1]} : vector<1x1536xf32> to vector<1x256xf32>
    %68 = vector.extract_strided_slice %66 {offsets = [0, 0], sizes = [1, 256], strides = [1, 1]} : vector<1x1536xf32> to vector<1x256xf32>
    %69 = vector.extract_strided_slice %63 {offsets = [0, 256], sizes = [1, 256], strides = [1, 1]} : vector<1x1536xf32> to vector<1x256xf32>
    %70 = arith.addf %67, %69 : vector<1x256xf32>
    %71 = vector.extract_strided_slice %66 {offsets = [0, 256], sizes = [1, 256], strides = [1, 1]} : vector<1x1536xf32> to vector<1x256xf32>
    %72 = arith.addf %68, %71 : vector<1x256xf32>
    %73 = vector.extract_strided_slice %63 {offsets = [0, 512], sizes = [1, 256], strides = [1, 1]} : vector<1x1536xf32> to vector<1x256xf32>
    %74 = arith.addf %70, %73 : vector<1x256xf32>
    %75 = vector.extract_strided_slice %66 {offsets = [0, 512], sizes = [1, 256], strides = [1, 1]} : vector<1x1536xf32> to vector<1x256xf32>
    %76 = arith.addf %72, %75 : vector<1x256xf32>
    %77 = vector.extract_strided_slice %63 {offsets = [0, 768], sizes = [1, 256], strides = [1, 1]} : vector<1x1536xf32> to vector<1x256xf32>
    %78 = arith.addf %74, %77 : vector<1x256xf32>
    %79 = vector.extract_strided_slice %66 {offsets = [0, 768], sizes = [1, 256], strides = [1, 1]} : vector<1x1536xf32> to vector<1x256xf32>
    %80 = arith.addf %76, %79 : vector<1x256xf32>
    %81 = vector.extract_strided_slice %63 {offsets = [0, 1024], sizes = [1, 256], strides = [1, 1]} : vector<1x1536xf32> to vector<1x256xf32>
    %82 = arith.addf %78, %81 : vector<1x256xf32>
    %83 = vector.extract_strided_slice %66 {offsets = [0, 1024], sizes = [1, 256], strides = [1, 1]} : vector<1x1536xf32> to vector<1x256xf32>
    %84 = arith.addf %80, %83 : vector<1x256xf32>
    %85 = vector.extract_strided_slice %63 {offsets = [0, 1280], sizes = [1, 256], strides = [1, 1]} : vector<1x1536xf32> to vector<1x256xf32>
    %86 = arith.addf %82, %85 : vector<1x256xf32>
    %87 = vector.extract_strided_slice %66 {offsets = [0, 1280], sizes = [1, 256], strides = [1, 1]} : vector<1x1536xf32> to vector<1x256xf32>
    %88 = arith.addf %84, %87 : vector<1x256xf32>
    %89 = tpu.concatenate %86, %88 in 0 : vector<1x256xf32>, vector<1x256xf32> -> vector<2x256xf32>
    %c0_32 = arith.constant 0 : index
    %c0_33 = arith.constant 0 : index
    %90 = vector.load %arg9[%c0_32, %c0_33] : memref<256x64xf32, #tpu.memory_space<vmem>>, vector<256x64xf32>
    %cst_34 = arith.constant dense<0.000000e+00> : vector<2x64xf32>
    %91 = tpu.matmul %89, %90, %cst_34 {dimension_numbers = #tpu.dot_dimension_numbers<[1], [0], [0], [1], [0, 0, 1, 1], [], []>} : vector<2x256xf32>, vector<256x64xf32>, vector<2x64xf32> -> vector<2x64xf32>
    %cst_35 = arith.constant 0.00208333344 : f32
    %92 = vector.broadcast %cst_35 : f32 to vector<2x64xf32>
    %93 = arith.mulf %91, %92 : vector<2x64xf32>
    %94 = vector.extract_strided_slice %93 {offsets = [0, 0], sizes = [1, 64], strides = [1, 1]} : vector<2x64xf32> to vector<1x64xf32>
    %95 = vector.extract_strided_slice %93 {offsets = [1, 0], sizes = [1, 64], strides = [1, 1]} : vector<2x64xf32> to vector<1x64xf32>
    %96 = arith.mulf %94, %94 : vector<1x64xf32>
    %97 = arith.subf %95, %96 : vector<1x64xf32>
    %cst_36 = arith.constant 0.000000e+00 : f32
    %98 = vector.broadcast %cst_36 : f32 to vector<1x64xf32>
    %99 = arith.maximumf %97, %98 : vector<1x64xf32>
    %c0_37 = arith.constant 0 : index
    %c0_38 = arith.constant 0 : index
    %100 = vector.load %arg11[%c0_37, %c0_38] : memref<1x64xf32, #tpu.memory_space<vmem>>, vector<1x64xf32>
    %cst_39 = arith.constant 9.99999974E-6 : f32
    %101 = vector.broadcast %cst_39 : f32 to vector<1x64xf32>
    %102 = arith.addf %99, %101 : vector<1x64xf32>
    %103 = math.rsqrt %102 : vector<1x64xf32>
    %104 = arith.mulf %100, %103 : vector<1x64xf32>
    %c0_40 = arith.constant 0 : index
    %c0_41 = arith.constant 0 : index
    %105 = vector.load %arg12[%c0_40, %c0_41] : memref<1x64xf32, #tpu.memory_space<vmem>>, vector<1x64xf32>
    %106 = arith.mulf %94, %104 : vector<1x64xf32>
    %107 = arith.subf %105, %106 : vector<1x64xf32>
    %108 = tpu.concatenate %104, %107 in 0 : vector<1x64xf32>, vector<1x64xf32> -> vector<2x64xf32>
    %c0_42 = arith.constant 0 : index
    %c0_43 = arith.constant 0 : index
    %109 = vector.load %arg10[%c0_42, %c0_43] : memref<64x256xf32, #tpu.memory_space<vmem>>, vector<64x256xf32>
    %cst_44 = arith.constant dense<0.000000e+00> : vector<2x256xf32>
    %110 = tpu.matmul %108, %109, %cst_44 {dimension_numbers = #tpu.dot_dimension_numbers<[1], [0], [0], [1], [0, 0, 1, 1], [], []>} : vector<2x64xf32>, vector<64x256xf32>, vector<2x256xf32> -> vector<2x256xf32>
    %111 = vector.extract_strided_slice %110 {offsets = [0, 0], sizes = [1, 256], strides = [1, 1]} : vector<2x256xf32> to vector<1x256xf32>
    %112 = tpu.concatenate %111, %111, %111, %111, %111, %111 in 1 : vector<1x256xf32>, vector<1x256xf32>, vector<1x256xf32>, vector<1x256xf32>, vector<1x256xf32>, vector<1x256xf32> -> vector<1x1536xf32>
    %113 = vector.extract_strided_slice %110 {offsets = [1, 0], sizes = [1, 256], strides = [1, 1]} : vector<2x256xf32> to vector<1x256xf32>
    %114 = tpu.concatenate %113, %113, %113, %113, %113, %113 in 1 : vector<1x256xf32>, vector<1x256xf32>, vector<1x256xf32>, vector<1x256xf32>, vector<1x256xf32>, vector<1x256xf32> -> vector<1x1536xf32>
    %115 = vector.broadcast %112 : vector<1x1536xf32> to vector<16x1536xf32>
    %116 = arith.mulf %50, %115 : vector<16x1536xf32>
    %117 = vector.broadcast %114 : vector<1x1536xf32> to vector<16x1536xf32>
    %118 = arith.addf %116, %117 : vector<16x1536xf32>
    %cst_45 = arith.constant 0.000000e+00 : f32
    %119 = vector.broadcast %cst_45 : f32 to vector<16x1536xf32>
    %120 = arith.cmpf oge, %118, %119 : vector<16x1536xf32>
    %cst_46 = arith.constant 2.000000e-01 : f32
    %121 = vector.broadcast %cst_46 : f32 to vector<16x1536xf32>
    %122 = arith.mulf %121, %118 : vector<16x1536xf32>
    %123 = arith.select %120, %118, %122 : vector<16x1536xi1>, vector<16x1536xf32>
    %124 = tpu.concatenate %123, %61 in 1 : vector<16x1536xf32>, vector<16x1536xf32> -> vector<16x3072xf32>
    %125 = arith.truncf %124 : vector<16x3072xf32> to vector<16x3072xbf16>
    %c0_47 = arith.constant 0 : index
    %c0_48 = arith.constant 0 : index
    %126 = vector.load %arg13[%c0_47, %c0_48] : memref<3072x64xbf16, #tpu.memory_space<vmem>>, vector<3072x64xbf16>
    %cst_49 = arith.constant dense<0.000000e+00> : vector<16x64xf32>
    %127 = tpu.matmul %125, %126, %cst_49 {dimension_numbers = #tpu.dot_dimension_numbers<[1], [0], [0], [1], [0, 0, 1, 1], [], []>} : vector<16x3072xbf16>, vector<3072x64xbf16>, vector<16x64xf32> -> vector<16x64xf32>
    %c0_50 = arith.constant 0 : index
    %c0_51 = arith.constant 0 : index
    %128 = vector.load %arg14[%c0_50, %c0_51] : memref<1x64xf32, #tpu.memory_space<vmem>>, vector<1x64xf32>
    %129 = vector.broadcast %128 : vector<1x64xf32> to vector<16x64xf32>
    %130 = arith.addf %127, %129 : vector<16x64xf32>
    %cst_52 = arith.constant 0.000000e+00 : f32
    %131 = vector.broadcast %cst_52 : f32 to vector<16x64xf32>
    %132 = arith.cmpf oge, %130, %131 : vector<16x64xf32>
    %cst_53 = arith.constant 2.000000e-01 : f32
    %133 = vector.broadcast %cst_53 : f32 to vector<16x64xf32>
    %134 = arith.mulf %133, %130 : vector<16x64xf32>
    %135 = arith.select %132, %130, %134 : vector<16x64xi1>, vector<16x64xf32>
    %c0_54 = arith.constant 0 : index
    %c0_55 = arith.constant 0 : index
    %136 = vector.load %arg15[%c0_54, %c0_55] : memref<16x64xf32, #tpu.memory_space<vmem>>, vector<16x64xf32>
    tpu.vector_store %arg15[%c0_54, %c0_55], %135 {strides = array<i32>} : memref<16x64xf32, #tpu.memory_space<vmem>>, vector<16x64xf32>,
    return
  }
}

</mosaic_0001>

<llo_original>
// kernel: resblock_pallas.1
$region0: #{resblock_pallas.1}
  #allocation0 [shape = 'u32[]', space=smem, size = 0x4, offset = 0x4, fixed_abs, tag = 'smem constant byte address 0x4 - core index']
  #allocation1 [shape = 'u32[144,128]{1,0:T(1,128)}', space=vmem, size = 0x12000, scoped, tag = 'internal scratch']
  %s0 = inlined_call_operand.vmem [shape: f32[16,100], index: 0, kind: input, shape index: {}]
  %s1 = inlined_call_operand.vmem [shape: bf16[100,256], index: 1, kind: input, shape index: {}]
  %s2 = inlined_call_operand.vmem [shape: f32[1,256], index: 2, kind: input, shape index: {}]
  %s3 = inlined_call_operand.vmem [shape: f32[1,128], index: 3, kind: input, shape index: {}]
  %s4 = inlined_call_operand.vmem [shape: f32[1,128], index: 4, kind: input, shape index: {}]
  %s5 = inlined_call_operand.vmem [shape: bf16[128,1536], index: 5, kind: input, shape index: {}]
  %s6 = inlined_call_operand.vmem [shape: f32[1,1536], index: 6, kind: input, shape index: {}]
  %s7 = inlined_call_operand.vmem [shape: bf16[128,1536], index: 7, kind: input, shape index: {}]
  %s8 = inlined_call_operand.vmem [shape: f32[1,1536], index: 8, kind: input, shape index: {}]
  %s9 = inlined_call_operand.vmem [shape: f32[256,64], index: 9, kind: input, shape index: {}]
  %s10 = inlined_call_operand.vmem [shape: f32[64,256], index: 10, kind: input, shape index: {}]
  %s11 = inlined_call_operand.vmem [shape: f32[1,64], index: 11, kind: input, shape index: {}]
  %s12 = inlined_call_operand.vmem [shape: f32[1,64], index: 12, kind: input, shape index: {}]
  %s13 = inlined_call_operand.vmem [shape: bf16[3072,64], index: 13, kind: input, shape index: {}]
  %s14 = inlined_call_operand.vmem [shape: f32[1,64], index: 14, kind: input, shape index: {}]
  %s15 = inlined_call_operand.vmem [shape: f32[16,64], index: 15, kind: output, shape index: {}]
  %s16 = sld [smem:[#allocation0]]
  $region70: #{resblock_pallas.1} parent=0
    _
  %s18 = ssub.s32 1, %s16
  %s19 = scalar_select 0, %s18, %s16
  // Predicated region
  $region2: #{resblock_pallas.1} parent=0 // pred_check
    _
  $region3: #{resblock_pallas.1} parent=0 // pred_check_branch
    %21 = sbr.rel (0) target = $region5
  $region4: #{resblock_pallas.1} parent=0 // pred_region
    _
  $region5: #{resblock_pallas.1} parent=0 // pred_fallthru
    _
  // Predicated region
  $region6: #{resblock_pallas.1} parent=0 // pred_check
    _
  $region7: #{resblock_pallas.1} parent=0 // pred_check_branch
    %23 = sbr.rel (0) target = $region9
  $region8: #{resblock_pallas.1} parent=0 // pred_region
    _
  $region9: #{resblock_pallas.1} parent=0 // pred_fallthru
    _
  // Predicated region
  $region10: #{resblock_pallas.1} parent=0 // pred_check
    _
  $region11: #{resblock_pallas.1} parent=0 // pred_check_branch
    %25 = sbr.rel (0) target = $region13
  $region12: #{resblock_pallas.1} parent=0 // pred_region
    _
  $region13: #{resblock_pallas.1} parent=0 // pred_fallthru
    _
  // Predicated region
  $region14: #{resblock_pallas.1} parent=0 // pred_check
    _
  $region15: #{resblock_pallas.1} parent=0 // pred_check_branch
    %27 = sbr.rel (0) target = $region17
  $region16: #{resblock_pallas.1} parent=0 // pred_region
    _
  $region17: #{resblock_pallas.1} parent=0 // pred_fallthru
    _
  // Predicated region
  $region18: #{resblock_pallas.1} parent=0 // pred_check
    _
  $region19: #{resblock_pallas.1} parent=0 // pred_check_branch
    %29 = sbr.rel (0) target = $region21
  $region20: #{resblock_pallas.1} parent=0 // pred_region
    _
  $region21: #{resblock_pallas.1} parent=0 // pred_fallthru
    _
  // Predicated region
  $region22: #{resblock_pallas.1} parent=0 // pred_check
    _
  $region23: #{resblock_pallas.1} parent=0 // pred_check_branch
    %31 = sbr.rel (0) target = $region25
  $region24: #{resblock_pallas.1} parent=0 // pred_region
    _
  $region25: #{resblock_pallas.1} parent=0 // pred_fallthru
    _
  // Predicated region
  $region26: #{resblock_pallas.1} parent=0 // pred_check
    _
  $region27: #{resblock_pallas.1} parent=0 // pred_check_branch
    %33 = sbr.rel (0) target = $region29
  $region28: #{resblock_pallas.1} parent=0 // pred_region
    _
  $region29: #{resblock_pallas.1} parent=0 // pred_fallthru
    _
  // Predicated region
  $region30: #{resblock_pallas.1} parent=0 // pred_check
    _
  $region31: #{resblock_pallas.1} parent=0 // pred_check_branch
    %35 = sbr.rel (0) target = $region33
  $region32: #{resblock_pallas.1} parent=0 // pred_region
    _
  $region33: #{resblock_pallas.1} parent=0 // pred_fallthru
    _
  // Predicated region
  $region34: #{resblock_pallas.1} parent=0 // pred_check
    _
  $region35: #{resblock_pallas.1} parent=0 // pred_check_branch
    %37 = sbr.rel (0) target = $region37
  $region36: #{resblock_pallas.1} parent=0 // pred_region
    _
  $region37: #{resblock_pallas.1} parent=0 // pred_fallthru
    _
  // Predicated region
  $region38: #{resblock_pallas.1} parent=0 // pred_check
    _
  $region39: #{resblock_pallas.1} parent=0 // pred_check_branch
    %39 = sbr.rel (0) target = $region41
  $region40: #{resblock_pallas.1} parent=0 // pred_region
    _
  $region41: #{resblock_pallas.1} parent=0 // pred_fallthru
    _
  // Predicated region
  $region42: #{resblock_pallas.1} parent=0 // pred_check
    _
  $region43: #{resblock_pallas.1} parent=0 // pred_check_branch
    %41 = sbr.rel (0) target = $region45
  $region44: #{resblock_pallas.1} parent=0 // pred_region
    _
  $region45: #{resblock_pallas.1} parent=0 // pred_fallthru
    _
  // Predicated region
  $region46: #{resblock_pallas.1} parent=0 // pred_check
    _
  $region47: #{resblock_pallas.1} parent=0 // pred_check_branch
    %43 = sbr.rel (0) target = $region49
  $region48: #{resblock_pallas.1} parent=0 // pred_region
    _
  $region49: #{resblock_pallas.1} parent=0 // pred_fallthru
    _
  // Predicated region
  $region50: #{resblock_pallas.1} parent=0 // pred_check
    _
  $region51: #{resblock_pallas.1} parent=0 // pred_check_branch
    %45 = sbr.rel (0) target = $region53
  $region52: #{resblock_pallas.1} parent=0 // pred_region
    _
  $region53: #{resblock_pallas.1} parent=0 // pred_fallthru
    _
  // Predicated region
  $region54: #{resblock_pallas.1} parent=0 // pred_check
    _
  $region55: #{resblock_pallas.1} parent=0 // pred_check_branch
    %47 = sbr.rel (0) target = $region57
  $region56: #{resblock_pallas.1} parent=0 // pred_region
    _
  $region57: #{resblock_pallas.1} parent=0 // pred_fallthru
    _
  // Predicated region
  $region58: #{resblock_pallas.1} parent=0 // pred_check
    _
  $region59: #{resblock_pallas.1} parent=0 // pred_check_branch
    %49 = sbr.rel (0) target = $region61
  $region60: #{resblock_pallas.1} parent=0 // pred_region
    _
  $region61: #{resblock_pallas.1} parent=0 // pred_fallthru
    _
  %v51 = vld [vmem:[%s0] sm:$0xff]
  %v52 = vld [vmem:[%s0 + $0x8] sm:$0xff]
  %v53 = vpack.c.bf16 %v52, %v51
  %v54 = vld [vmem:[%s1] sm:$0xff]
  %v55 = vld [vmem:[%s1 + $0x8] sm:$0xff]
  %v56 = vld [vmem:[%s1 + $0x10] sm:$0xff]
  %v57 = vld [vmem:[%s1 + $0x18] sm:$0xff]
  %v58 = vld [vmem:[%s1 + $0x20] sm:$0xff]
  %v59 = vld [vmem:[%s1 + $0x28] sm:$0xff]
  %v60 = vld [vmem:[%s1 + $0x30] sm:$0xff]
  %v61 = vld [vmem:[%s1 + $0x38] sm:$0xff]
  %v62 = vld [vmem:[%s1 + $0x40] sm:$0xff]
  %v63 = vld [vmem:[%s1 + $0x48] sm:$0xff]
  %v64 = vld [vmem:[%s1 + $0x50] sm:$0xff]
  %v65 = vld [vmem:[%s1 + $0x58] sm:$0xff]
  %v66 = vld [vmem:[%s1 + $0x60] sm:$0x33]
  %v67 = vld [vmem:[%s2] sm:$0x3]
  %v69 = vlaneseq
  %v70 = vshrl.u32 %v69, 7
  %v71 = vsub.s32 0, %v70
  %v72 = vrot.slane %v67, %v71
  %v73 = vlaneseq
  %v74 = vshrl.u32 %v73, 7
  %v75 = vsub.s32 1, %v74
  %v76 = vrot.slane %v67, %v75
  %v92 = vunpack.c.l.b16 %v54
  %v93 = vunpack.c.h.b16 %v54
  %v94 = vunpack.c.l.b16 %v55
  %v95 = vunpack.c.h.b16 %v55
  %v96 = vunpack.c.l.b16 %v56
  %v97 = vunpack.c.h.b16 %v56
  %v98 = vunpack.c.l.b16 %v57
  %v99 = vunpack.c.h.b16 %v57
  %v100 = vunpack.c.l.b16 %v58
  %v101 = vunpack.c.h.b16 %v58
  %v102 = vunpack.c.l.b16 %v59
  %v103 = vunpack.c.h.b16 %v59
  %v104 = vunpack.c.l.b16 %v60
  %v105 = vunpack.c.h.b16 %v60
  %v106 = vunpack.c.l.b16 %v61
  %v107 = vunpack.c.h.b16 %v61
  %v108 = vunpack.c.l.b16 %v62
  %v109 = vunpack.c.h.b16 %v62
  %v110 = vunpack.c.l.b16 %v63
  %v111 = vunpack.c.h.b16 %v63
  %v112 = vunpack.c.l.b16 %v64
  %v113 = vunpack.c.h.b16 %v64
  %v114 = vunpack.c.l.b16 %v65
  %v115 = vunpack.c.h.b16 %v65
  %v116 = vunpack.c.l.b16 %v66
  %v117 = vunpack.c.h.b16 %v66
  %v118 = vpack.c.b16 %v94, %v92
  %v119 = vpack.c.b16 %v95, %v93
  %v120 = vpack.c.b16 %v98, %v96
  %v121 = vpack.c.b16 %v99, %v97
  %v122 = vpack.c.b16 %v102, %v100
  %v123 = vpack.c.b16 %v103, %v101
  %v124 = vpack.c.b16 %v106, %v104
  %v125 = vpack.c.b16 %v107, %v105
  %v126 = vpack.c.b16 %v110, %v108
  %v127 = vpack.c.b16 %v111, %v109
  %v128 = vpack.c.b16 %v114, %v112
  %v129 = vpack.c.b16 %v115, %v113
  %v130 = vpack.c.b16 %v116, %v116
  %v131 = vpack.c.b16 %v117, %v117
  %vm144 = vcmask 818176
  %v146 = vsel %vm144, %v53, 0
  %vm148 = vcmask 1041408
  %v150 = vsel %vm148, %v130, 0
  %v153 = vsel %vm148, %v131, 0
  %155 = vmatprep.subr.bf16.mxu0 %v119
  %156 = vmatpush1.bf16.msra.mxu0 %v118
  %157 = vmatprep.subr.bf16.mxu0 %v121
  %158 = vmatpush1.bf16.msra.mxu0 %v120
  %159 = vmatprep.subr.bf16.mxu0 %v123
  %160 = vmatpush1.bf16.msra.mxu0 %v122
  %161 = vmatprep.subr.bf16.mxu0 %v125
  %162 = vmatpush1.bf16.msra.mxu0 %v124
  %163 = vmatprep.subr.bf16.mxu0 %v127
  %164 = vmatpush1.bf16.msra.mxu0 %v126
  %165 = vmatprep.subr.bf16.mxu0 %v129
  %166 = vmatpush1.bf16.msra.mxu0 %v128
  %167 = vmatprep.subr.bf16.mxu0 %v153
  %168 = vmatpush1.bf16.msra.mxu0 %v150
  %169 = vmatprep.subr.bf16.mxu0 0
  %170 = vmatpush1.bf16.msra.mxu0 0
  %171 = vmatprep.subr.bf16.mxu0 0
  %172 = vmatpush1.bf16.msra.mxu0 0
  %173 = vmatprep.subr.bf16.mxu0 0
  %174 = vmatpush1.bf16.msra.mxu0 0
  %175 = vmatprep.subr.bf16.mxu0 0
  %176 = vmatpush1.bf16.msra.mxu0 0
  %177 = vmatprep.subr.bf16.mxu0 0
  %178 = vmatpush1.bf16.msra.mxu0 0
  %179 = vmatprep.subr.bf16.mxu0 0
  %180 = vmatpush1.bf16.msra.mxu0 0
  %181 = vmatprep.subr.bf16.mxu0 0
  %182 = vmatpush1.bf16.msra.mxu0 0
  %183 = vmatprep.subr.bf16.mxu0 0
  %184 = vmatpush1.bf16.msra.mxu0 0
  %185 = vmatprep.subr.bf16.mxu0 0
  %186 = vmatpush1.bf16.msra.mxu0 0
  %187 = vmatprep.mubr.bf16.mxu0 0
  %188 = vmatmul.mubr.bf16.gmra.mrb[0].mxu0 %v146
  %v189 = vpop.f32.mrb[0].mxu0
  %v190 = vadd.f32 %v72, %v189
  %v191 = vpop.f32.mrb[0].mxu0
  %v192 = vadd.f32 %v76, %v191
  %v193 = vpop.f32.mrb[0].mxu0
  %v194 = vadd.f32 %v72, %v193
  %v195 = vpop.f32.mrb[0].mxu0
  %v196 = vadd.f32 %v76, %v195
  %197 = vdwg.mxu0
  %v198 = vadd.f32 %v190, %v194
  %v199 = vrot.slane %v198, 4
  %v200 = vadd.f32 %v198, %v199
  %v201 = vrot.slane %v200, 2
  %v202 = vadd.f32 %v200, %v201
  %v203 = vrot.slane %v202, 1
  %v204 = vadd.f32 %v202, %v203
  %v205 = vrcp.pop 16.0
  %v206 = vmul.f32 %v204, %v205
  %v207 = vsub.f32 %v190, %v206
  %v208 = vsub.f32 %v194, %v206
  %v209 = vmul.f32 %v207, %v207
  %v210 = vmul.f32 %v208, %v208
  %v211 = vadd.f32 %v209, %v210
  %v212 = vrot.slane %v211, 4
  %v213 = vadd.f32 %v211, %v212
  %v214 = vrot.slane %v213, 2
  %v215 = vadd.f32 %v213, %v214
  %v216 = vrot.slane %v215, 1
  %v217 = vadd.f32 %v215, %v216
  %v218 = vmul.f32 %v217, %v205
  %v219 = vadd.f32 %v218, 1e-05
  %v220 = vrsqrt.pop %v219
  %v221 = vmul.f32 %v207, %v220
  %v222 = vmul.f32 %v208, %v220
  %v223 = vld [vmem:[%s3] sm:$0x1]
  %v225 = vlaneseq
  %v226 = vshrl.u32 %v225, 7
  %v227 = vsub.s32 0, %v226
  %v228 = vrot.slane %v223, %v227
  %v230 = vmul.f32 %v221, %v228
  %v231 = vmul.f32 %v222, %v228
  %v232 = vld [vmem:[%s4] sm:$0x1]
  %v234 = vlaneseq
  %v235 = vshrl.u32 %v234, 7
  %v236 = vsub.s32 0, %v235
  %v237 = vrot.slane %v232, %v236
  %v239 = vadd.f32 %v230, %v237
  %v240 = vadd.f32 %v231, %v237
  %vm241 = vcmp.ge.f32.partialorder %v239, 0.0
  %vm242 = vcmp.ge.f32.partialorder %v240, 0.0
  %v243 = vmul.f32 %v239, 0.2
  %v244 = vmul.f32 %v240, 0.2
  %v245 = vsel %vm241, %v239, %v243
  %v246 = vsel %vm242, %v240, %v244
  %vm247 = vcmp.ge.f32.partialorder %v192, 0.0
  %vm248 = vcmp.ge.f32.partialorder %v196, 0.0
  %v249 = vmul.f32 %v192, 0.2
  %v250 = vmul.f32 %v196, 0.2
  %v251 = vsel %vm247, %v192, %v249
  %v252 = vsel %vm248, %v196, %v250
  %v253 = vpack.c.bf16 %v246, %v245
  %v254 = vld [vmem:[%s5] sm:$0xff]
  %v255 = vld [vmem:[%s5 + $0x8] sm:$0xff]
  %v256 = vld [vmem:[%s5 + $0x10] sm:$0xff]
  %v257 = vld [vmem:[%s5 + $0x18] sm:$0xff]
  %v258 = vld [vmem:[%s5 + $0x20] sm:$0xff]
  %v259 = vld [vmem:[%s5 + $0x28] sm:$0xff]
  %v260 = vld [vmem:[%s5 + $0x30] sm:$0xff]
  %v261 = vld [vmem:[%s5 + $0x38] sm:$0xff]
  %v262 = vld [vmem:[%s5 + $0x40] sm:$0xff]
  %v263 = vld [vmem:[%s5 + $0x48] sm:$0xff]
  %v264 = vld [vmem:[%s5 + $0x50] sm:$0xff]
  %v265 = vld [vmem:[%s5 + $0x58] sm:$0xff]
  %v266 = vld [vmem:[%s5 + $0x60] sm:$0xff]
  %v267 = vld [vmem:[%s5 + $0x68] sm:$0xff]
  %v268 = vld [vmem:[%s5 + $0x70] sm:$0xff]
  %v269 = vld [vmem:[%s5 + $0x78] sm:$0xff]
  %v270 = vld [vmem:[%s5 + $0x80] sm:$0xff]
  %v271 = vld [vmem:[%s5 + $0x88] sm:$0xff]
  %v272 = vld [vmem:[%s5 + $0x90] sm:$0xff]
  %v273 = vld [vmem:[%s5 + $0x98] sm:$0xff]
  %v274 = vld [vmem:[%s5 + $0xa0] sm:$0xff]
  %v275 = vld [vmem:[%s5 + $0xa8] sm:$0xff]
  %v276 = vld [vmem:[%s5 + $0xb0] sm:$0xff]
  %v277 = vld [vmem:[%s5 + $0xb8] sm:$0xff]
  %v278 = vld [vmem:[%s5 + $0xc0] sm:$0xff]
  %v279 = vld [vmem:[%s5 + $0xc8] sm:$0xff]
  %v280 = vld [vmem:[%s5 + $0xd0] sm:$0xff]
  %v281 = vld [vmem:[%s5 + $0xd8] sm:$0xff]
  %v282 = vld [vmem:[%s5 + $0xe0] sm:$0xff]
  %v283 = vld [vmem:[%s5 + $0xe8] sm:$0xff]
  %v284 = vld [vmem:[%s5 + $0xf0] sm:$0xff]
  %v285 = vld [vmem:[%s5 + $0xf8] sm:$0xff]
  %v286 = vld [vmem:[%s5 + $0x100] sm:$0xff]
  %v287 = vld [vmem:[%s5 + $0x108] sm:$0xff]
  %v288 = vld [vmem:[%s5 + $0x110] sm:$0xff]
  %v289 = vld [vmem:[%s5 + $0x118] sm:$0xff]
  %v290 = vld [vmem:[%s5 + $0x120] sm:$0xff]
  %v291 = vld [vmem:[%s5 + $0x128] sm:$0xff]
  %v292 = vld [vmem:[%s5 + $0x130] sm:$0xff]
  %v293 = vld [vmem:[%s5 + $0x138] sm:$0xff]
  %v294 = vld [vmem:[%s5 + $0x140] sm:$0xff]
  %v295 = vld [vmem:[%s5 + $0x148] sm:$0xff]
  %v296 = vld [vmem:[%s5 + $0x150] sm:$0xff]
  %v297 = vld [vmem:[%s5 + $0x158] sm:$0xff]
  %v298 = vld [vmem:[%s5 + $0x160] sm:$0xff]
  %v299 = vld [vmem:[%s5 + $0x168] sm:$0xff]
  %v300 = vld [vmem:[%s5 + $0x170] sm:$0xff]
  %v301 = vld [vmem:[%s5 + $0x178] sm:$0xff]
  %v302 = vld [vmem:[%s5 + $0x180] sm:$0xff]
  %v303 = vld [vmem:[%s5 + $0x188] sm:$0xff]
  %v304 = vld [vmem:[%s5 + $0x190] sm:$0xff]
  %v305 = vld [vmem:[%s5 + $0x198] sm:$0xff]
  %v306 = vld [vmem:[%s5 + $0x1a0] sm:$0xff]
  %v307 = vld [vmem:[%s5 + $0x1a8] sm:$0xff]
  %v308 = vld [vmem:[%s5 + $0x1b0] sm:$0xff]
  %v309 = vld [vmem:[%s5 + $0x1b8] sm:$0xff]
  %v310 = vld [vmem:[%s5 + $0x1c0] sm:$0xff]
  %v311 = vld [vmem:[%s5 + $0x1c8] sm:$0xff]
  %v312 = vld [vmem:[%s5 + $0x1d0] sm:$0xff]
  %v313 = vld [vmem:[%s5 + $0x1d8] sm:$0xff]
  %v314 = vld [vmem:[%s5 + $0x1e0] sm:$0xff]
  %v315 = vld [vmem:[%s5 + $0x1e8] sm:$0xff]
  %v316 = vld [vmem:[%s5 + $0x1f0] sm:$0xff]
  %v317 = vld [vmem:[%s5 + $0x1f8] sm:$0xff]
  %v318 = vld [vmem:[%s5 + $0x200] sm:$0xff]
  %v319 = vld [vmem:[%s5 + $0x208] sm:$0xff]
  %v320 = vld [vmem:[%s5 + $0x210] sm:$0xff]
  %v321 = vld [vmem:[%s5 + $0x218] sm:$0xff]
  %v322 = vld [vmem:[%s5 + $0x220] sm:$0xff]
  %v323 = vld [vmem:[%s5 + $0x228] sm:$0xff]
  %v324 = vld [vmem:[%s5 + $0x230] sm:$0xff]
  %v325 = vld [vmem:[%s5 + $0x238] sm:$0xff]
  %v326 = vld [vmem:[%s5 + $0x240] sm:$0xff]
  %v327 = vld [vmem:[%s5 + $0x248] sm:$0xff]
  %v328 = vld [vmem:[%s5 + $0x250] sm:$0xff]
  %v329 = vld [vmem:[%s5 + $0x258] sm:$0xff]
  %v330 = vld [vmem:[%s5 + $0x260] sm:$0xff]
  %v331 = vld [vmem:[%s5 + $0x268] sm:$0xff]
  %v332 = vld [vmem:[%s5 + $0x270] sm:$0xff]
  %v333 = vld [vmem:[%s5 + $0x278] sm:$0xff]
  %v334 = vld [vmem:[%s5 + $0x280] sm:$0xff]
  %v335 = vld [vmem:[%s5 + $0x288] sm:$0xff]
  %v336 = vld [vmem:[%s5 + $0x290] sm:$0xff]
  %v337 = vld [vmem:[%s5 + $0x298] sm:$0xff]
  %v338 = vld [vmem:[%s5 + $0x2a0] sm:$0xff]
  %v339 = vld [vmem:[%s5 + $0x2a8] sm:$0xff]
  %v340 = vld [vmem:[%s5 + $0x2b0] sm:$0xff]
  %v341 = vld [vmem:[%s5 + $0x2b8] sm:$0xff]
  %v342 = vld [vmem:[%s5 + $0x2c0] sm:$0xff]
  %v343 = vld [vmem:[%s5 + $0x2c8] sm:$0xff]
  %v344 = vld [vmem:[%s5 + $0x2d0] sm:$0xff]
  %v345 = vld [vmem:[%s5 + $0x2d8] sm:$0xff]
  %v346 = vld [vmem:[%s5 + $0x2e0] sm:$0xff]
  %v347 = vld [vmem:[%s5 + $0x2e8] sm:$0xff]
  %v348 = vld [vmem:[%s5 + $0x2f0] sm:$0xff]
  %v349 = vld [vmem:[%s5 + $0x2f8] sm:$0xff]
  %v350 = vld [vmem:[%s6] sm:$0xff]
  %v351 = vld [vmem:[%s6 + $0x8] sm:$0xf]
  %v354 = vlaneseq
  %v355 = vshrl.u32 %v354, 7
  %v356 = vsub.s32 0, %v355
  %v357 = vrot.slane %v350, %v356
  %v358 = vlaneseq
  %v359 = vshrl.u32 %v358, 7
  %v360 = vsub.s32 1, %v359
  %v361 = vrot.slane %v350, %v360
  %v362 = vlaneseq
  %v363 = vshrl.u32 %v362, 7
  %v364 = vsub.s32 2, %v363
  %v365 = vrot.slane %v350, %v364
  %v366 = vlaneseq
  %v367 = vshrl.u32 %v366, 7
  %v368 = vsub.s32 3, %v367
  %v369 = vrot.slane %v350, %v368
  %v370 = vlaneseq
  %v371 = vshrl.u32 %v370, 7
  %v372 = vsub.s32 4, %v371
  %v373 = vrot.slane %v350, %v372
  %v374 = vlaneseq
  %v375 = vshrl.u32 %v374, 7
  %v376 = vsub.s32 5, %v375
  %v377 = vrot.slane %v350, %v376
  %v378 = vlaneseq
  %v379 = vshrl.u32 %v378, 7
  %v380 = vsub.s32 6, %v379
  %v381 = vrot.slane %v350, %v380
  %v382 = vlaneseq
  %v383 = vshrl.u32 %v382, 7
  %v384 = vsub.s32 7, %v383
  %v385 = vrot.slane %v350, %v384
  %v386 = vlaneseq
  %v387 = vshrl.u32 %v386, 7
  %v388 = vsub.s32 0, %v387
  %v389 = vrot.slane %v351, %v388
  %v390 = vlaneseq
  %v391 = vshrl.u32 %v390, 7
  %v392 = vsub.s32 1, %v391
  %v393 = vrot.slane %v351, %v392
  %v394 = vlaneseq
  %v395 = vshrl.u32 %v394, 7
  %v396 = vsub.s32 2, %v395
  %v397 = vrot.slane %v351, %v396
  %v398 = vlaneseq
  %v399 = vshrl.u32 %v398, 7
  %v400 = vsub.s32 3, %v399
  %v401 = vrot.slane %v351, %v400
  %v510 = vunpack.c.l.b16 %v254
  %v511 = vunpack.c.h.b16 %v254
  %v512 = vunpack.c.l.b16 %v255
  %v513 = vunpack.c.h.b16 %v255
  %v514 = vunpack.c.l.b16 %v256
  %v515 = vunpack.c.h.b16 %v256
  %v516 = vunpack.c.l.b16 %v257
  %v517 = vunpack.c.h.b16 %v257
  %v518 = vunpack.c.l.b16 %v258
  %v519 = vunpack.c.h.b16 %v258
  %v520 = vunpack.c.l.b16 %v259
  %v521 = vunpack.c.h.b16 %v259
  %v522 = vunpack.c.l.b16 %v260
  %v523 = vunpack.c.h.b16 %v260
  %v524 = vunpack.c.l.b16 %v261
  %v525 = vunpack.c.h.b16 %v261
  %v526 = vunpack.c.l.b16 %v262
  %v527 = vunpack.c.h.b16 %v262
  %v528 = vunpack.c.l.b16 %v263
  %v529 = vunpack.c.h.b16 %v263
  %v530 = vunpack.c.l.b16 %v264
  %v531 = vunpack.c.h.b16 %v264
  %v532 = vunpack.c.l.b16 %v265
  %v533 = vunpack.c.h.b16 %v265
  %v534 = vunpack.c.l.b16 %v266
  %v535 = vunpack.c.h.b16 %v266
  %v536 = vunpack.c.l.b16 %v267
  %v537 = vunpack.c.h.b16 %v267
  %v538 = vunpack.c.l.b16 %v268
  %v539 = vunpack.c.h.b16 %v268
  %v540 = vunpack.c.l.b16 %v269
  %v541 = vunpack.c.h.b16 %v269
  %v542 = vunpack.c.l.b16 %v270
  %v543 = vunpack.c.h.b16 %v270
  %v544 = vunpack.c.l.b16 %v271
  %v545 = vunpack.c.h.b16 %v271
  %v546 = vunpack.c.l.b16 %v272
  %v547 = vunpack.c.h.b16 %v272
  %v548 = vunpack.c.l.b16 %v273
  %v549 = vunpack.c.h.b16 %v273
  %v550 = vunpack.c.l.b16 %v274
  %v551 = vunpack.c.h.b16 %v274
  %v552 = vunpack.c.l.b16 %v275
  %v553 = vunpack.c.h.b16 %v275
  %v554 = vunpack.c.l.b16 %v276
  %v555 = vunpack.c.h.b16 %v276
  %v556 = vunpack.c.l.b16 %v277
  %v557 = vunpack.c.h.b16 %v277
  %v558 = vunpack.c.l.b16 %v278
  %v559 = vunpack.c.h.b16 %v278
  %v560 = vunpack.c.l.b16 %v279
  %v561 = vunpack.c.h.b16 %v279
  %v562 = vunpack.c.l.b16 %v280
  %v563 = vunpack.c.h.b16 %v280
  %v564 = vunpack.c.l.b16 %v281
  %v565 = vunpack.c.h.b16 %v281
  %v566 = vunpack.c.l.b16 %v282
  %v567 = vunpack.c.h.b16 %v282
  %v568 = vunpack.c.l.b16 %v283
  %v569 = vunpack.c.h.b16 %v283
  %v570 = vunpack.c.l.b16 %v284
  %v571 = vunpack.c.h.b16 %v284
  %v572 = vunpack.c.l.b16 %v285
  %v573 = vunpack.c.h.b16 %v285
  %v574 = vunpack.c.l.b16 %v286
  %v575 = vunpack.c.h.b16 %v286
  %v576 = vunpack.c.l.b16 %v287
  %v577 = vunpack.c.h.b16 %v287
  %v578 = vunpack.c.l.b16 %v288
  %v579 = vunpack.c.h.b16 %v288
  %v580 = vunpack.c.l.b16 %v289
  %v581 = vunpack.c.h.b16 %v289
  %v582 = vunpack.c.l.b16 %v290
  %v583 = vunpack.c.h.b16 %v290
  %v584 = vunpack.c.l.b16 %v291
  %v585 = vunpack.c.h.b16 %v291
  %v586 = vunpack.c.l.b16 %v292
  %v587 = vunpack.c.h.b16 %v292
  %v588 = vunpack.c.l.b16 %v293
  %v589 = vunpack.c.h.b16 %v293
  %v590 = vunpack.c.l.b16 %v294
  %v591 = vunpack.c.h.b16 %v294
  %v592 = vunpack.c.l.b16 %v295
  %v593 = vunpack.c.h.b16 %v295
  %v594 = vunpack.c.l.b16 %v296
  %v595 = vunpack.c.h.b16 %v296
  %v596 = vunpack.c.l.b16 %v297
  %v597 = vunpack.c.h.b16 %v297
  %v598 = vunpack.c.l.b16 %v298
  %v599 = vunpack.c.h.b16 %v298
  %v600 = vunpack.c.l.b16 %v299
  %v601 = vunpack.c.h.b16 %v299
  %v602 = vunpack.c.l.b16 %v300
  %v603 = vunpack.c.h.b16 %v300
  %v604 = vunpack.c.l.b16 %v301
  %v605 = vunpack.c.h.b16 %v301
  %v606 = vunpack.c.l.b16 %v302
  %v607 = vunpack.c.h.b16 %v302
  %v608 = vunpack.c.l.b16 %v303
  %v609 = vunpack.c.h.b16 %v303
  %v610 = vunpack.c.l.b16 %v304
  %v611 = vunpack.c.h.b16 %v304
  %v612 = vunpack.c.l.b16 %v305
  %v613 = vunpack.c.h.b16 %v305
  %v614 = vunpack.c.l.b16 %v306
  %v615 = vunpack.c.h.b16 %v306
  %v616 = vunpack.c.l.b16 %v307
  %v617 = vunpack.c.h.b16 %v307
  %v618 = vunpack.c.l.b16 %v308
  %v619 = vunpack.c.h.b16 %v308
  %v620 = vunpack.c.l.b16 %v309
  %v621 = vunpack.c.h.b16 %v309
  %v622 = vunpack.c.l.b16 %v310
  %v623 = vunpack.c.h.b16 %v310
  %v624 = vunpack.c.l.b16 %v311
  %v625 = vunpack.c.h.b16 %v311
  %v626 = vunpack.c.l.b16 %v312
  %v627 = vunpack.c.h.b16 %v312
  %v628 = vunpack.c.l.b16 %v313
  %v629 = vunpack.c.h.b16 %v313
  %v630 = vunpack.c.l.b16 %v314
  %v631 = vunpack.c.h.b16 %v314
  %v632 = vunpack.c.l.b16 %v315
  %v633 = vunpack.c.h.b16 %v315
  %v634 = vunpack.c.l.b16 %v316
  %v635 = vunpack.c.h.b16 %v316
  %v636 = vunpack.c.l.b16 %v317
  %v637 = vunpack.c.h.b16 %v317
  %v638 = vunpack.c.l.b16 %v318
  %v639 = vunpack.c.h.b16 %v318
  %v640 = vunpack.c.l.b16 %v319
  %v641 = vunpack.c.h.b16 %v319
  %v642 = vunpack.c.l.b16 %v320
  %v643 = vunpack.c.h.b16 %v320
  %v644 = vunpack.c.l.b16 %v321
  %v645 = vunpack.c.h.b16 %v321
  %v646 = vunpack.c.l.b16 %v322
  %v647 = vunpack.c.h.b16 %v322
  %v648 = vunpack.c.l.b16 %v323
  %v649 = vunpack.c.h.b16 %v323
  %v650 = vunpack.c.l.b16 %v324
  %v651 = vunpack.c.h.b16 %v324
  %v652 = vunpack.c.l.b16 %v325
  %v653 = vunpack.c.h.b16 %v325
  %v654 = vunpack.c.l.b16 %v326
  %v655 = vunpack.c.h.b16 %v326
  %v656 = vunpack.c.l.b16 %v327
  %v657 = vunpack.c.h.b16 %v327
  %v658 = vunpack.c.l.b16 %v328
  %v659 = vunpack.c.h.b16 %v328
  %v660 = vunpack.c.l.b16 %v329
  %v661 = vunpack.c.h.b16 %v329
  %v662 = vunpack.c.l.b16 %v330
  %v663 = vunpack.c.h.b16 %v330
  %v664 = vunpack.c.l.b16 %v331
  %v665 = vunpack.c.h.b16 %v331
  %v666 = vunpack.c.l.b16 %v332
  %v667 = vunpack.c.h.b16 %v332
  %v668 = vunpack.c.l.b16 %v333
  %v669 = vunpack.c.h.b16 %v333
  %v670 = vunpack.c.l.b16 %v334
  %v671 = vunpack.c.h.b16 %v334
  %v672 = vunpack.c.l.b16 %v335
  %v673 = vunpack.c.h.b16 %v335
  %v674 = vunpack.c.l.b16 %v336
  %v675 = vunpack.c.h.b16 %v336
  %v676 = vunpack.c.l.b16 %v337
  %v677 = vunpack.c.h.b16 %v337
  %v678 = vunpack.c.l.b16 %v338
  %v679 = vunpack.c.h.b16 %v338
  %v680 = vunpack.c.l.b16 %v339
  %v681 = vunpack.c.h.b16 %v339
  %v682 = vunpack.c.l.b16 %v340
  %v683 = vunpack.c.h.b16 %v340
  %v684 = vunpack.c.l.b16 %v341
  %v685 = vunpack.c.h.b16 %v341
  %v686 = vunpack.c.l.b16 %v342
  %v687 = vunpack.c.h.b16 %v342
  %v688 = vunpack.c.l.b16 %v343
  %v689 = vunpack.c.h.b16 %v343
  %v690 = vunpack.c.l.b16 %v344
  %v691 = vunpack.c.h.b16 %v344
  %v692 = vunpack.c.l.b16 %v345
  %v693 = vunpack.c.h.b16 %v345
  %v694 = vunpack.c.l.b16 %v346
  %v695 = vunpack.c.h.b16 %v346
  %v696 = vunpack.c.l.b16 %v347
  %v697 = vunpack.c.h.b16 %v347
  %v698 = vunpack.c.l.b16 %v348
  %v699 = vunpack.c.h.b16 %v348
  %v700 = vunpack.c.l.b16 %v349
  %v701 = vunpack.c.h.b16 %v349
  %v702 = vpack.c.b16 %v522, %v510
  %v703 = vpack.c.b16 %v523, %v511
  %v704 = vpack.c.b16 %v524, %v512
  %v705 = vpack.c.b16 %v525, %v513
  %v706 = vpack.c.b16 %v526, %v514
  %v707 = vpack.c.b16 %v527, %v515
  %v708 = vpack.c.b16 %v528, %v516
  %v709 = vpack.c.b16 %v529, %v517
  %v710 = vpack.c.b16 %v530, %v518
  %v711 = vpack.c.b16 %v531, %v519
  %v712 = vpack.c.b16 %v532, %v520
  %v713 = vpack.c.b16 %v533, %v521
  %v714 = vpack.c.b16 %v546, %v534
  %v715 = vpack.c.b16 %v547, %v535
  %v716 = vpack.c.b16 %v548, %v536
  %v717 = vpack.c.b16 %v549, %v537
  %v718 = vpack.c.b16 %v550, %v538
  %v719 = vpack.c.b16 %v551, %v539
  %v720 = vpack.c.b16 %v552, %v540
  %v721 = vpack.c.b16 %v553, %v541
  %v722 = vpack.c.b16 %v554, %v542
  %v723 = vpack.c.b16 %v555, %v543
  %v724 = vpack.c.b16 %v556, %v544
  %v725 = vpack.c.b16 %v557, %v545
  %v726 = vpack.c.b16 %v570, %v558
  %v727 = vpack.c.b16 %v571, %v559
  %v728 = vpack.c.b16 %v572, %v560
  %v729 = vpack.c.b16 %v573, %v561
  %v730 = vpack.c.b16 %v574, %v562
  %v731 = vpack.c.b16 %v575, %v563
  %v732 = vpack.c.b16 %v576, %v564
  %v733 = vpack.c.b16 %v577, %v565
  %v734 = vpack.c.b16 %v578, %v566
  %v735 = vpack.c.b16 %v579, %v567
  %v736 = vpack.c.b16 %v580, %v568
  %v737 = vpack.c.b16 %v581, %v569
  %v738 = vpack.c.b16 %v594, %v582
  %v739 = vpack.c.b16 %v595, %v583
  %v740 = vpack.c.b16 %v596, %v584
  %v741 = vpack.c.b16 %v597, %v585
  %v742 = vpack.c.b16 %v598, %v586
  %v743 = vpack.c.b16 %v599, %v587
  %v744 = vpack.c.b16 %v600, %v588
  %v745 = vpack.c.b16 %v601, %v589
  %v746 = vpack.c.b16 %v602, %v590
  %v747 = vpack.c.b16 %v603, %v591
  %v748 = vpack.c.b16 %v604, %v592
  %v749 = vpack.c.b16 %v605, %v593
  %v750 = vpack.c.b16 %v618, %v606
  %v751 = vpack.c.b16 %v619, %v607
  %v752 = vpack.c.b16 %v620, %v608
  %v753 = vpack.c.b16 %v621, %v609
  %v754 = vpack.c.b16 %v622, %v610
  %v755 = vpack.c.b16 %v623, %v611
  %v756 = vpack.c.b16 %v624, %v612
  %v757 = vpack.c.b16 %v625, %v613
  %v758 = vpack.c.b16 %v626, %v614
  %v759 = vpack.c.b16 %v627, %v615
  %v760 = vpack.c.b16 %v628, %v616
  %v761 = vpack.c.b16 %v629, %v617
  %v762 = vpack.c.b16 %v642, %v630
  %v763 = vpack.c.b16 %v643, %v631
  %v764 = vpack.c.b16 %v644, %v632
  %v765 = vpack.c.b16 %v645, %v633
  %v766 = vpack.c.b16 %v646, %v634
  %v767 = vpack.c.b16 %v647, %v635
  %v768 = vpack.c.b16 %v648, %v636
  %v769 = vpack.c.b16 %v649, %v637
  %v770 = vpack.c.b16 %v650, %v638
  %v771 = vpack.c.b16 %v651, %v639
  %v772 = vpack.c.b16 %v652, %v640
  %v773 = vpack.c.b16 %v653, %v641
  %v774 = vpack.c.b16 %v666, %v654
  %v775 = vpack.c.b16 %v667, %v655
  %v776 = vpack.c.b16 %v668, %v656
  %v777 = vpack.c.b16 %v669, %v657
  %v778 = vpack.c.b16 %v670, %v658
  %v779 = vpack.c.b16 %v671, %v659
  %v780 = vpack.c.b16 %v672, %v660
  %v781 = vpack.c.b16 %v673, %v661
  %v782 = vpack.c.b16 %v674, %v662
  %v783 = vpack.c.b16 %v675, %v663
  %v784 = vpack.c.b16 %v676, %v664
  %v785 = vpack.c.b16 %v677, %v665
  %v786 = vpack.c.b16 %v690, %v678
  %v787 = vpack.c.b16 %v691, %v679
  %v788 = vpack.c.b16 %v692, %v680
  %v789 = vpack.c.b16 %v693, %v681
  %v790 = vpack.c.b16 %v694, %v682
  %v791 = vpack.c.b16 %v695, %v683
  %v792 = vpack.c.b16 %v696, %v684
  %v793 = vpack.c.b16 %v697, %v685
  %v794 = vpack.c.b16 %v698, %v686
  %v795 = vpack.c.b16 %v699, %v687
  %v796 = vpack.c.b16 %v700, %v688
  %v797 = vpack.c.b16 %v701, %v689
  %894 = vmatprep.subr.bf16.mxu0 %v703
  %895 = vmatpush1.bf16.msra.mxu0 %v702
  %896 = vmatprep.subr.bf16.mxu0 %v715
  %897 = vmatpush1.bf16.msra.mxu0 %v714
  %898 = vmatprep.subr.bf16.mxu0 %v727
  %899 = vmatpush1.bf16.msra.mxu0 %v726
  %900 = vmatprep.subr.bf16.mxu0 %v739
  %901 = vmatpush1.bf16.msra.mxu0 %v738
  %902 = vmatprep.subr.bf16.mxu0 %v751
  %903 = vmatpush1.bf16.msra.mxu0 %v750
  %904 = vmatprep.subr.bf16.mxu0 %v763
  %905 = vmatpush1.bf16.msra.mxu0 %v762
  %906 = vmatprep.subr.bf16.mxu0 %v775
  %907 = vmatpush1.bf16.msra.mxu0 %v774
  %908 = vmatprep.subr.bf16.mxu0 %v787
  %909 = vmatpush1.bf16.msra.mxu0 %v786
  %910 = vmatprep.subr.bf16.mxu0 0
  %911 = vmatpush1.bf16.msra.mxu0 0
  %912 = vmatprep.subr.bf16.mxu0 0
  %913 = vmatpush1.bf16.msra.mxu0 0
  %914 = vmatprep.subr.bf16.mxu0 0
  %915 = vmatpush1.bf16.msra.mxu0 0
  %916 = vmatprep.subr.bf16.mxu0 0
  %917 = vmatpush1.bf16.msra.mxu0 0
  %918 = vmatprep.subr.bf16.mxu0 0
  %919 = vmatpush1.bf16.msra.mxu0 0
  %920 = vmatprep.subr.bf16.mxu0 0
  %921 = vmatpush1.bf16.msra.mxu0 0
  %922 = vmatprep.subr.bf16.mxu0 0
  %923 = vmatpush1.bf16.msra.mxu0 0
  %924 = vmatprep.subr.bf16.mxu0 0
  %925 = vmatpush1.bf16.msra.mxu0 0
  %926 = vmatprep.mubr.bf16.mxu0 0
  %927 = vmatmul.mubr.bf16.gmra.mrb[0].mxu0 %v253
  %v928 = vpop.f32.mrb[0].mxu0
  %v929 = vadd.f32 %v357, %v928
  %v930 = vpop.f32.mrb[0].mxu0
  %v931 = vadd.f32 %v361, %v930
  %v932 = vpop.f32.mrb[0].mxu0
  %v933 = vadd.f32 %v357, %v932
  %v934 = vpop.f32.mrb[0].mxu0
  %v935 = vadd.f32 %v361, %v934
  %936 = vdwg.mxu0
  %937 = vmatprep.subr.bf16.mxu0 %v705
  %938 = vmatpush1.bf16.msra.mxu0 %v704
  %939 = vmatprep.subr.bf16.mxu0 %v717
  %940 = vmatpush1.bf16.msra.mxu0 %v716
  %941 = vmatprep.subr.bf16.mxu0 %v729
  %942 = vmatpush1.bf16.msra.mxu0 %v728
  %943 = vmatprep.subr.bf16.mxu0 %v741
  %944 = vmatpush1.bf16.msra.mxu0 %v740
  %945 = vmatprep.subr.bf16.mxu0 %v753
  %946 = vmatpush1.bf16.msra.mxu0 %v752
  %947 = vmatprep.subr.bf16.mxu0 %v765
  %948 = vmatpush1.bf16.msra.mxu0 %v764
  %949 = vmatprep.subr.bf16.mxu0 %v777
  %950 = vmatpush1.bf16.msra.mxu0 %v776
  %951 = vmatprep.subr.bf16.mxu0 %v789
  %952 = vmatpush1.bf16.msra.mxu0 %v788
  %953 = vmatprep.subr.bf16.mxu0 0
  %954 = vmatpush1.bf16.msra.mxu0 0
  %955 = vmatprep.subr.bf16.mxu0 0
  %956 = vmatpush1.bf16.msra.mxu0 0
  %957 = vmatprep.subr.bf16.mxu0 0
  %958 = vmatpush1.bf16.msra.mxu0 0
  %959 = vmatprep.subr.bf16.mxu0 0
  %960 = vmatpush1.bf16.msra.mxu0 0
  %961 = vmatprep.subr.bf16.mxu0 0
  %962 = vmatpush1.bf16.msra.mxu0 0
  %963 = vmatprep.subr.bf16.mxu0 0
  %964 = vmatpush1.bf16.msra.mxu0 0
  %965 = vmatprep.subr.bf16.mxu0 0
  %966 = vmatpush1.bf16.msra.mxu0 0
  %967 = vmatprep.subr.bf16.mxu0 0
  %968 = vmatpush1.bf16.msra.mxu0 0
  %969 = vmatprep.mubr.bf16.mxu0 0
  %970 = vmatmul.mubr.bf16.gmra.mrb[0].mxu0 %v253
  %v971 = vpop.f32.mrb[0].mxu0
  %v972 = vadd.f32 %v365, %v971
  %v973 = vpop.f32.mrb[0].mxu0
  %v974 = vadd.f32 %v369, %v973
  %v975 = vpop.f32.mrb[0].mxu0
  %v976 = vadd.f32 %v365, %v975
  %v977 = vpop.f32.mrb[0].mxu0
  %v978 = vadd.f32 %v369, %v977
  %979 = vdwg.mxu0
  %980 = vmatprep.subr.bf16.mxu0 %v707
  %981 = vmatpush1.bf16.msra.mxu0 %v706
  %982 = vmatprep.subr.bf16.mxu0 %v719
  %983 = vmatpush1.bf16.msra.mxu0 %v718
  %984 = vmatprep.subr.bf16.mxu0 %v731
  %985 = vmatpush1.bf16.msra.mxu0 %v730
  %986 = vmatprep.subr.bf16.mxu0 %v743
  %987 = vmatpush1.bf16.msra.mxu0 %v742
  %988 = vmatprep.subr.bf16.mxu0 %v755
  %989 = vmatpush1.bf16.msra.mxu0 %v754
  %990 = vmatprep.subr.bf16.mxu0 %v767
  %991 = vmatpush1.bf16.msra.mxu0 %v766
  %992 = vmatprep.subr.bf16.mxu0 %v779
  %993 = vmatpush1.bf16.msra.mxu0 %v778
  %994 = vmatprep.subr.bf16.mxu0 %v791
  %995 = vmatpush1.bf16.msra.mxu0 %v790
  %996 = vmatprep.subr.bf16.mxu0 0
  %997 = vmatpush1.bf16.msra.mxu0 0
  %998 = vmatprep.subr.bf16.mxu0 0
  %999 = vmatpush1.bf16.msra.mxu0 0
  %1000 = vmatprep.subr.bf16.mxu0 0
  %1001 = vmatpush1.bf16.msra.mxu0 0
  %1002 = vmatprep.subr.bf16.mxu0 0
  %1003 = vmatpush1.bf16.msra.mxu0 0
  %1004 = vmatprep.subr.bf16.mxu0 0
  %1005 = vmatpush1.bf16.msra.mxu0 0
  %1006 = vmatprep.subr.bf16.mxu0 0
  %1007 = vmatpush1.bf16.msra.mxu0 0
  %1008 = vmatprep.subr.bf16.mxu0 0
  %1009 = vmatpush1.bf16.msra.mxu0 0
  %1010 = vmatprep.subr.bf16.mxu0 0
  %1011 = vmatpush1.bf16.msra.mxu0 0
  %1012 = vmatprep.mubr.bf16.mxu0 0
  %1013 = vmatmul.mubr.bf16.gmra.mrb[0].mxu0 %v253
  %v1014 = vpop.f32.mrb[0].mxu0
  %v1015 = vadd.f32 %v373, %v1014
  %v1016 = vpop.f32.mrb[0].mxu0
  %v1017 = vadd.f32 %v377, %v1016
  %v1018 = vpop.f32.mrb[0].mxu0
  %v1019 = vadd.f32 %v373, %v1018
  %v1020 = vpop.f32.mrb[0].mxu0
  %v1021 = vadd.f32 %v377, %v1020
  %1022 = vdwg.mxu0
  %1023 = vmatprep.subr.bf16.mxu0 %v709
  %1024 = vmatpush1.bf16.msra.mxu0 %v708
  %1025 = vmatprep.subr.bf16.mxu0 %v721
  %1026 = vmatpush1.bf16.msra.mxu0 %v720
  %1027 = vmatprep.subr.bf16.mxu0 %v733
  %1028 = vmatpush1.bf16.msra.mxu0 %v732
  %1029 = vmatprep.subr.bf16.mxu0 %v745
  %1030 = vmatpush1.bf16.msra.mxu0 %v744
  %1031 = vmatprep.subr.bf16.mxu0 %v757
  %1032 = vmatpush1.bf16.msra.mxu0 %v756
  %1033 = vmatprep.subr.bf16.mxu0 %v769
  %1034 = vmatpush1.bf16.msra.mxu0 %v768
  %1035 = vmatprep.subr.bf16.mxu0 %v781
  %1036 = vmatpush1.bf16.msra.mxu0 %v780
  %1037 = vmatprep.subr.bf16.mxu0 %v793
  %1038 = vmatpush1.bf16.msra.mxu0 %v792
  %1039 = vmatprep.subr.bf16.mxu0 0
  %1040 = vmatpush1.bf16.msra.mxu0 0
  %1041 = vmatprep.subr.bf16.mxu0 0
  %1042 = vmatpush1.bf16.msra.mxu0 0
  %1043 = vmatprep.subr.bf16.mxu0 0
  %1044 = vmatpush1.bf16.msra.mxu0 0
  %1045 = vmatprep.subr.bf16.mxu0 0
  %1046 = vmatpush1.bf16.msra.mxu0 0
  %1047 = vmatprep.subr.bf16.mxu0 0
  %1048 = vmatpush1.bf16.msra.mxu0 0
  %1049 = vmatprep.subr.bf16.mxu0 0
  %1050 = vmatpush1.bf16.msra.mxu0 0
  %1051 = vmatprep.subr.bf16.mxu0 0
  %1052 = vmatpush1.bf16.msra.mxu0 0
  %1053 = vmatprep.subr.bf16.mxu0 0
  %1054 = vmatpush1.bf16.msra.mxu0 0
  %1055 = vmatprep.mubr.bf16.mxu0 0
  %1056 = vmatmul.mubr.bf16.gmra.mrb[0].mxu0 %v253
  %v1057 = vpop.f32.mrb[0].mxu0
  %v1058 = vadd.f32 %v381, %v1057
  %v1059 = vpop.f32.mrb[0].mxu0
  %v1060 = vadd.f32 %v385, %v1059
  %v1061 = vpop.f32.mrb[0].mxu0
  %v1062 = vadd.f32 %v381, %v1061
  %v1063 = vpop.f32.mrb[0].mxu0
  %v1064 = vadd.f32 %v385, %v1063
  %1065 = vdwg.mxu0
  %1066 = vmatprep.subr.bf16.mxu0 %v711
  %1067 = vmatpush1.bf16.msra.mxu0 %v710
  %1068 = vmatprep.subr.bf16.mxu0 %v723
  %1069 = vmatpush1.bf16.msra.mxu0 %v722
  %1070 = vmatprep.subr.bf16.mxu0 %v735
  %1071 = vmatpush1.bf16.msra.mxu0 %v734
  %1072 = vmatprep.subr.bf16.mxu0 %v747
  %1073 = vmatpush1.bf16.msra.mxu0 %v746
  %1074 = vmatprep.subr.bf16.mxu0 %v759
  %1075 = vmatpush1.bf16.msra.mxu0 %v758
  %1076 = vmatprep.subr.bf16.mxu0 %v771
  %1077 = vmatpush1.bf16.msra.mxu0 %v770
  %1078 = vmatprep.subr.bf16.mxu0 %v783
  %1079 = vmatpush1.bf16.msra.mxu0 %v782
  %1080 = vmatprep.subr.bf16.mxu0 %v795
  %1081 = vmatpush1.bf16.msra.mxu0 %v794
  %1082 = vmatprep.subr.bf16.mxu0 0
  %1083 = vmatpush1.bf16.msra.mxu0 0
  %1084 = vmatprep.subr.bf16.mxu0 0
  %1085 = vmatpush1.bf16.msra.mxu0 0
  %1086 = vmatprep.subr.bf16.mxu0 0
  %1087 = vmatpush1.bf16.msra.mxu0 0
  %1088 = vmatprep.subr.bf16.mxu0 0
  %1089 = vmatpush1.bf16.msra.mxu0 0
  %1090 = vmatprep.subr.bf16.mxu0 0
  %1091 = vmatpush1.bf16.msra.mxu0 0
  %1092 = vmatprep.subr.bf16.mxu0 0
  %1093 = vmatpush1.bf16.msra.mxu0 0
  %1094 = vmatprep.subr.bf16.mxu0 0
  %1095 = vmatpush1.bf16.msra.mxu0 0
  %1096 = vmatprep.subr.bf16.mxu0 0
  %1097 = vmatpush1.bf16.msra.mxu0 0
  %1098 = vmatprep.mubr.bf16.mxu0 0
  %1099 = vmatmul.mubr.bf16.gmra.mrb[0].mxu0 %v253
  %v1100 = vpop.f32.mrb[0].mxu0
  %v1101 = vadd.f32 %v389, %v1100
  %v1102 = vpop.f32.mrb[0].mxu0
  %v1103 = vadd.f32 %v393, %v1102
  %v1104 = vpop.f32.mrb[0].mxu0
  %v1105 = vadd.f32 %v389, %v1104
  %v1106 = vpop.f32.mrb[0].mxu0
  %v1107 = vadd.f32 %v393, %v1106
  %1108 = vdwg.mxu0
  %1109 = vmatprep.subr.bf16.mxu0 %v713
  %1110 = vmatpush1.bf16.msra.mxu0 %v712
  %1111 = vmatprep.subr.bf16.mxu0 %v725
  %1112 = vmatpush1.bf16.msra.mxu0 %v724
  %1113 = vmatprep.subr.bf16.mxu0 %v737
  %1114 = vmatpush1.bf16.msra.mxu0 %v736
  %1115 = vmatprep.subr.bf16.mxu0 %v749
  %1116 = vmatpush1.bf16.msra.mxu0 %v748
  %1117 = vmatprep.subr.bf16.mxu0 %v761
  %1118 = vmatpush1.bf16.msra.mxu0 %v760
  %1119 = vmatprep.subr.bf16.mxu0 %v773
  %1120 = vmatpush1.bf16.msra.mxu0 %v772
  %1121 = vmatprep.subr.bf16.mxu0 %v785
  %1122 = vmatpush1.bf16.msra.mxu0 %v784
  %1123 = vmatprep.subr.bf16.mxu0 %v797
  %1124 = vmatpush1.bf16.msra.mxu0 %v796
  %1125 = vmatprep.subr.bf16.mxu0 0
  %1126 = vmatpush1.bf16.msra.mxu0 0
  %1127 = vmatprep.subr.bf16.mxu0 0
  %1128 = vmatpush1.bf16.msra.mxu0 0
  %1129 = vmatprep.subr.bf16.mxu0 0
  %1130 = vmatpush1.bf16.msra.mxu0 0
  %1131 = vmatprep.subr.bf16.mxu0 0
  %1132 = vmatpush1.bf16.msra.mxu0 0
  %1133 = vmatprep.subr.bf16.mxu0 0
  %1134 = vmatpush1.bf16.msra.mxu0 0
  %1135 = vmatprep.subr.bf16.mxu0 0
  %1136 = vmatpush1.bf16.msra.mxu0 0
  %1137 = vmatprep.subr.bf16.mxu0 0
  %1138 = vmatpush1.bf16.msra.mxu0 0
  %1139 = vmatprep.subr.bf16.mxu0 0
  %1140 = vmatpush1.bf16.msra.mxu0 0
  %1141 = vmatprep.mubr.bf16.mxu0 0
  %1142 = vmatmul.mubr.bf16.gmra.mrb[0].mxu0 %v253
  %v1143 = vpop.f32.mrb[0].mxu0
  %v1144 = vadd.f32 %v397, %v1143
  %v1145 = vpop.f32.mrb[0].mxu0
  %v1146 = vadd.f32 %v401, %v1145
  %v1147 = vpop.f32.mrb[0].mxu0
  %v1148 = vadd.f32 %v397, %v1147
  %v1149 = vpop.f32.mrb[0].mxu0
  %v1150 = vadd.f32 %v401, %v1149
  %1151 = vdwg.mxu0
  %v1152 = vpack.c.bf16 %v252, %v251
  %v1153 = vld [vmem:[%s7] sm:$0xff]
  %v1154 = vld [vmem:[%s7 + $0x8] sm:$0xff]
  %v1155 = vld [vmem:[%s7 + $0x10] sm:$0xff]
  %v1156 = vld [vmem:[%s7 + $0x18] sm:$0xff]
  %v1157 = vld [vmem:[%s7 + $0x20] sm:$0xff]
  %v1158 = vld [vmem:[%s7 + $0x28] sm:$0xff]
  %v1159 = vld [vmem:[%s7 + $0x30] sm:$0xff]
  %v1160 = vld [vmem:[%s7 + $0x38] sm:$0xff]
  %v1161 = vld [vmem:[%s7 + $0x40] sm:$0xff]
  %v1162 = vld [vmem:[%s7 + $0x48] sm:$0xff]
  %v1163 = vld [vmem:[%s7 + $0x50] sm:$0xff]
  %v1164 = vld [vmem:[%s7 + $0x58] sm:$0xff]
  %v1165 = vld [vmem:[%s7 + $0x60] sm:$0xff]
  %v1166 = vld [vmem:[%s7 + $0x68] sm:$0xff]
  %v1167 = vld [vmem:[%s7 + $0x70] sm:$0xff]
  %v1168 = vld [vmem:[%s7 + $0x78] sm:$0xff]
  %v1169 = vld [vmem:[%s7 + $0x80] sm:$0xff]
  %v1170 = vld [vmem:[%s7 + $0x88] sm:$0xff]
  %v1171 = vld [vmem:[%s7 + $0x90] sm:$0xff]
  %v1172 = vld [vmem:[%s7 + $0x98] sm:$0xff]
  %v1173 = vld [vmem:[%s7 + $0xa0] sm:$0xff]
  %v1174 = vld [vmem:[%s7 + $0xa8] sm:$0xff]
  %v1175 = vld [vmem:[%s7 + $0xb0] sm:$0xff]
  %v1176 = vld [vmem:[%s7 + $0xb8] sm:$0xff]
  %v1177 = vld [vmem:[%s7 + $0xc0] sm:$0xff]
  %v1178 = vld [vmem:[%s7 + $0xc8] sm:$0xff]
  %v1179 = vld [vmem:[%s7 + $0xd0] sm:$0xff]
  %v1180 = vld [vmem:[%s7 + $0xd8] sm:$0xff]
  %v1181 = vld [vmem:[%s7 + $0xe0] sm:$0xff]
  %v1182 = vld [vmem:[%s7 + $0xe8] sm:$0xff]
  %v1183 = vld [vmem:[%s7 + $0xf0] sm:$0xff]
  %v1184 = vld [vmem:[%s7 + $0xf8] sm:$0xff]
  %v1185 = vld [vmem:[%s7 + $0x100] sm:$0xff]
  %v1186 = vld [vmem:[%s7 + $0x108] sm:$0xff]
  %v1187 = vld [vmem:[%s7 + $0x110] sm:$0xff]
  %v1188 = vld [vmem:[%s7 + $0x118] sm:$0xff]
  %v1189 = vld [vmem:[%s7 + $0x120] sm:$0xff]
  %v1190 = vld [vmem:[%s7 + $0x128] sm:$0xff]
  %v1191 = vld [vmem:[%s7 + $0x130] sm:$0xff]
  %v1192 = vld [vmem:[%s7 + $0x138] sm:$0xff]
  %v1193 = vld [vmem:[%s7 + $0x140] sm:$0xff]
  %v1194 = vld [vmem:[%s7 + $0x148] sm:$0xff]
  %v1195 = vld [vmem:[%s7 + $0x150] sm:$0xff]
  %v1196 = vld [vmem:[%s7 + $0x158] sm:$0xff]
  %v1197 = vld [vmem:[%s7 + $0x160] sm:$0xff]
  %v1198 = vld [vmem:[%s7 + $0x168] sm:$0xff]
  %v1199 = vld [vmem:[%s7 + $0x170] sm:$0xff]
  %v1200 = vld [vmem:[%s7 + $0x178] sm:$0xff]
  %v1201 = vld [vmem:[%s7 + $0x180] sm:$0xff]
  %v1202 = vld [vmem:[%s7 + $0x188] sm:$0xff]
  %v1203 = vld [vmem:[%s7 + $0x190] sm:$0xff]
  %v1204 = vld [vmem:[%s7 + $0x198] sm:$0xff]
  %v1205 = vld [vmem:[%s7 + $0x1a0] sm:$0xff]
  %v1206 = vld [vmem:[%s7 + $0x1a8] sm:$0xff]
  %v1207 = vld [vmem:[%s7 + $0x1b0] sm:$0xff]
  %v1208 = vld [vmem:[%s7 + $0x1b8] sm:$0xff]
  %v1209 = vld [vmem:[%s7 + $0x1c0] sm:$0xff]
  %v1210 = vld [vmem:[%s7 + $0x1c8] sm:$0xff]
  %v1211 = vld [vmem:[%s7 + $0x1d0] sm:$0xff]
  %v1212 = vld [vmem:[%s7 + $0x1d8] sm:$0xff]
  %v1213 = vld [vmem:[%s7 + $0x1e0] sm:$0xff]
  %v1214 = vld [vmem:[%s7 + $0x1e8] sm:$0xff]
  %v1215 = vld [vmem:[%s7 + $0x1f0] sm:$0xff]
  %v1216 = vld [vmem:[%s7 + $0x1f8] sm:$0xff]
  %v1217 = vld [vmem:[%s7 + $0x200] sm:$0xff]
  %v1218 = vld [vmem:[%s7 + $0x208] sm:$0xff]
  %v1219 = vld [vmem:[%s7 + $0x210] sm:$0xff]
  %v1220 = vld [vmem:[%s7 + $0x218] sm:$0xff]
  %v1221 = vld [vmem:[%s7 + $0x220] sm:$0xff]
  %v1222 = vld [vmem:[%s7 + $0x228] sm:$0xff]
  %v1223 = vld [vmem:[%s7 + $0x230] sm:$0xff]
  %v1224 = vld [vmem:[%s7 + $0x238] sm:$0xff]
  %v1225 = vld [vmem:[%s7 + $0x240] sm:$0xff]
  %v1226 = vld [vmem:[%s7 + $0x248] sm:$0xff]
  %v1227 = vld [vmem:[%s7 + $0x250] sm:$0xff]
  %v1228 = vld [vmem:[%s7 + $0x258] sm:$0xff]
  %v1229 = vld [vmem:[%s7 + $0x260] sm:$0xff]
  %v1230 = vld [vmem:[%s7 + $0x268] sm:$0xff]
  %v1231 = vld [vmem:[%s7 + $0x270] sm:$0xff]
  %v1232 = vld [vmem:[%s7 + $0x278] sm:$0xff]
  %v1233 = vld [vmem:[%s7 + $0x280] sm:$0xff]
  %v1234 = vld [vmem:[%s7 + $0x288] sm:$0xff]
  %v1235 = vld [vmem:[%s7 + $0x290] sm:$0xff]
  %v1236 = vld [vmem:[%s7 + $0x298] sm:$0xff]
  %v1237 = vld [vmem:[%s7 + $0x2a0] sm:$0xff]
  %v1238 = vld [vmem:[%s7 + $0x2a8] sm:$0xff]
  %v1239 = vld [vmem:[%s7 + $0x2b0] sm:$0xff]
  %v1240 = vld [vmem:[%s7 + $0x2b8] sm:$0xff]
  %v1241 = vld [vmem:[%s7 + $0x2c0] sm:$0xff]
  %v1242 = vld [vmem:[%s7 + $0x2c8] sm:$0xff]
  %v1243 = vld [vmem:[%s7 + $0x2d0] sm:$0xff]
  %v1244 = vld [vmem:[%s7 + $0x2d8] sm:$0xff]
  %v1245 = vld [vmem:[%s7 + $0x2e0] sm:$0xff]
  %v1246 = vld [vmem:[%s7 + $0x2e8] sm:$0xff]
  %v1247 = vld [vmem:[%s7 + $0x2f0] sm:$0xff]
  %v1248 = vld [vmem:[%s7 + $0x2f8] sm:$0xff]
  %v1249 = vld [vmem:[%s8] sm:$0xff]
  %v1250 = vld [vmem:[%s8 + $0x8] sm:$0xf]
  %v1253 = vlaneseq
  %v1254 = vshrl.u32 %v1253, 7
  %v1255 = vsub.s32 0, %v1254
  %v1256 = vrot.slane %v1249, %v1255
  %v1257 = vlaneseq
  %v1258 = vshrl.u32 %v1257, 7
  %v1259 = vsub.s32 1, %v1258
  %v1260 = vrot.slane %v1249, %v1259
  %v1261 = vlaneseq
  %v1262 = vshrl.u32 %v1261, 7
  %v1263 = vsub.s32 2, %v1262
  %v1264 = vrot.slane %v1249, %v1263
  %v1265 = vlaneseq
  %v1266 = vshrl.u32 %v1265, 7
  %v1267 = vsub.s32 3, %v1266
  %v1268 = vrot.slane %v1249, %v1267
  %v1269 = vlaneseq
  %v1270 = vshrl.u32 %v1269, 7
  %v1271 = vsub.s32 4, %v1270
  %v1272 = vrot.slane %v1249, %v1271
  %v1273 = vlaneseq
  %v1274 = vshrl.u32 %v1273, 7
  %v1275 = vsub.s32 5, %v1274
  %v1276 = vrot.slane %v1249, %v1275
  %v1277 = vlaneseq
  %v1278 = vshrl.u32 %v1277, 7
  %v1279 = vsub.s32 6, %v1278
  %v1280 = vrot.slane %v1249, %v1279
  %v1281 = vlaneseq
  %v1282 = vshrl.u32 %v1281, 7
  %v1283 = vsub.s32 7, %v1282
  %v1284 = vrot.slane %v1249, %v1283
  %v1285 = vlaneseq
  %v1286 = vshrl.u32 %v1285, 7
  %v1287 = vsub.s32 0, %v1286
  %v1288 = vrot.slane %v1250, %v1287
  %v1289 = vlaneseq
  %v1290 = vshrl.u32 %v1289, 7
  %v1291 = vsub.s32 1, %v1290
  %v1292 = vrot.slane %v1250, %v1291
  %v1293 = vlaneseq
  %v1294 = vshrl.u32 %v1293, 7
  %v1295 = vsub.s32 2, %v1294
  %v1296 = vrot.slane %v1250, %v1295
  %v1297 = vlaneseq
  %v1298 = vshrl.u32 %v1297, 7
  %v1299 = vsub.s32 3, %v1298
  %v1300 = vrot.slane %v1250, %v1299
  %v1409 = vunpack.c.l.b16 %v1153
  %v1410 = vunpack.c.h.b16 %v1153
  %v1411 = vunpack.c.l.b16 %v1154
  %v1412 = vunpack.c.h.b16 %v1154
  %v1413 = vunpack.c.l.b16 %v1155
  %v1414 = vunpack.c.h.b16 %v1155
  %v1415 = vunpack.c.l.b16 %v1156
  %v1416 = vunpack.c.h.b16 %v1156
  %v1417 = vunpack.c.l.b16 %v1157
  %v1418 = vunpack.c.h.b16 %v1157
  %v1419 = vunpack.c.l.b16 %v1158
  %v1420 = vunpack.c.h.b16 %v1158
  %v1421 = vunpack.c.l.b16 %v1159
  %v1422 = vunpack.c.h.b16 %v1159
  %v1423 = vunpack.c.l.b16 %v1160
  %v1424 = vunpack.c.h.b16 %v1160
  %v1425 = vunpack.c.l.b16 %v1161
  %v1426 = vunpack.c.h.b16 %v1161
  %v1427 = vunpack.c.l.b16 %v1162
  %v1428 = vunpack.c.h.b16 %v1162
  %v1429 = vunpack.c.l.b16 %v1163
  %v1430 = vunpack.c.h.b16 %v1163
  %v1431 = vunpack.c.l.b16 %v1164
  %v1432 = vunpack.c.h.b16 %v1164
  %v1433 = vunpack.c.l.b16 %v1165
  %v1434 = vunpack.c.h.b16 %v1165
  %v1435 = vunpack.c.l.b16 %v1166
  %v1436 = vunpack.c.h.b16 %v1166
  %v1437 = vunpack.c.l.b16 %v1167
  %v1438 = vunpack.c.h.b16 %v1167
  %v1439 = vunpack.c.l.b16 %v1168
  %v1440 = vunpack.c.h.b16 %v1168
  %v1441 = vunpack.c.l.b16 %v1169
  %v1442 = vunpack.c.h.b16 %v1169
  %v1443 = vunpack.c.l.b16 %v1170
  %v1444 = vunpack.c.h.b16 %v1170
  %v1445 = vunpack.c.l.b16 %v1171
  %v1446 = vunpack.c.h.b16 %v1171
  %v1447 = vunpack.c.l.b16 %v1172
  %v1448 = vunpack.c.h.b16 %v1172
  %v1449 = vunpack.c.l.b16 %v1173
  %v1450 = vunpack.c.h.b16 %v1173
  %v1451 = vunpack.c.l.b16 %v1174
  %v1452 = vunpack.c.h.b16 %v1174
  %v1453 = vunpack.c.l.b16 %v1175
  %v1454 = vunpack.c.h.b16 %v1175
  %v1455 = vunpack.c.l.b16 %v1176
  %v1456 = vunpack.c.h.b16 %v1176
  %v1457 = vunpack.c.l.b16 %v1177
  %v1458 = vunpack.c.h.b16 %v1177
  %v1459 = vunpack.c.l.b16 %v1178
  %v1460 = vunpack.c.h.b16 %v1178
  %v1461 = vunpack.c.l.b16 %v1179
  %v1462 = vunpack.c.h.b16 %v1179
  %v1463 = vunpack.c.l.b16 %v1180
  %v1464 = vunpack.c.h.b16 %v1180
  %v1465 = vunpack.c.l.b16 %v1181
  %v1466 = vunpack.c.h.b16 %v1181
  %v1467 = vunpack.c.l.b16 %v1182
  %v1468 = vunpack.c.h.b16 %v1182
  %v1469 = vunpack.c.l.b16 %v1183
  %v1470 = vunpack.c.h.b16 %v1183
  %v1471 = vunpack.c.l.b16 %v1184
  %v1472 = vunpack.c.h.b16 %v1184
  %v1473 = vunpack.c.l.b16 %v1185
  %v1474 = vunpack.c.h.b16 %v1185
  %v1475 = vunpack.c.l.b16 %v1186
  %v1476 = vunpack.c.h.b16 %v1186
  %v1477 = vunpack.c.l.b16 %v1187
  %v1478 = vunpack.c.h.b16 %v1187
  %v1479 = vunpack.c.l.b16 %v1188
  %v1480 = vunpack.c.h.b16 %v1188
  %v1481 = vunpack.c.l.b16 %v1189
  %v1482 = vunpack.c.h.b16 %v1189
  %v1483 = vunpack.c.l.b16 %v1190
  %v1484 = vunpack.c.h.b16 %v1190
  %v1485 = vunpack.c.l.b16 %v1191
  %v1486 = vunpack.c.h.b16 %v1191
  %v1487 = vunpack.c.l.b16 %v1192
  %v1488 = vunpack.c.h.b16 %v1192
  %v1489 = vunpack.c.l.b16 %v1193
  %v1490 = vunpack.c.h.b16 %v1193
  %v1491 = vunpack.c.l.b16 %v1194
  %v1492 = vunpack.c.h.b16 %v1194
  %v1493 = vunpack.c.l.b16 %v1195
  %v1494 = vunpack.c.h.b16 %v1195
  %v1495 = vunpack.c.l.b16 %v1196
  %v1496 = vunpack.c.h.b16 %v1196
  %v1497 = vunpack.c.l.b16 %v1197
  %v1498 = vunpack.c.h.b16 %v1197
  %v1499 = vunpack.c.l.b16 %v1198
  %v1500 = vunpack.c.h.b16 %v1198
  %v1501 = vunpack.c.l.b16 %v1199
  %v1502 = vunpack.c.h.b16 %v1199
  %v1503 = vunpack.c.l.b16 %v1200
  %v1504 = vunpack.c.h.b16 %v1200
  %v1505 = vunpack.c.l.b16 %v1201
  %v1506 = vunpack.c.h.b16 %v1201
  %v1507 = vunpack.c.l.b16 %v1202
  %v1508 = vunpack.c.h.b16 %v1202
  %v1509 = vunpack.c.l.b16 %v1203
  %v1510 = vunpack.c.h.b16 %v1203
  %v1511 = vunpack.c.l.b16 %v1204
  %v1512 = vunpack.c.h.b16 %v1204
  %v1513 = vunpack.c.l.b16 %v1205
  %v1514 = vunpack.c.h.b16 %v1205
  %v1515 = vunpack.c.l.b16 %v1206
  %v1516 = vunpack.c.h.b16 %v1206
  %v1517 = vunpack.c.l.b16 %v1207
  %v1518 = vunpack.c.h.b16 %v1207
  %v1519 = vunpack.c.l.b16 %v1208
  %v1520 = vunpack.c.h.b16 %v1208
  %v1521 = vunpack.c.l.b16 %v1209
  %v1522 = vunpack.c.h.b16 %v1209
  %v1523 = vunpack.c.l.b16 %v1210
  %v1524 = vunpack.c.h.b16 %v1210
  %v1525 = vunpack.c.l.b16 %v1211
  %v1526 = vunpack.c.h.b16 %v1211
  %v1527 = vunpack.c.l.b16 %v1212
  %v1528 = vunpack.c.h.b16 %v1212
  %v1529 = vunpack.c.l.b16 %v1213
  %v1530 = vunpack.c.h.b16 %v1213
  %v1531 = vunpack.c.l.b16 %v1214
  %v1532 = vunpack.c.h.b16 %v1214
  %v1533 = vunpack.c.l.b16 %v1215
  %v1534 = vunpack.c.h.b16 %v1215
  %v1535 = vunpack.c.l.b16 %v1216
  %v1536 = vunpack.c.h.b16 %v1216
  %v1537 = vunpack.c.l.b16 %v1217
  %v1538 = vunpack.c.h.b16 %v1217
  %v1539 = vunpack.c.l.b16 %v1218
  %v1540 = vunpack.c.h.b16 %v1218
  %v1541 = vunpack.c.l.b16 %v1219
  %v1542 = vunpack.c.h.b16 %v1219
  %v1543 = vunpack.c.l.b16 %v1220
  %v1544 = vunpack.c.h.b16 %v1220
  %v1545 = vunpack.c.l.b16 %v1221
  %v1546 = vunpack.c.h.b16 %v1221
  %v1547 = vunpack.c.l.b16 %v1222
  %v1548 = vunpack.c.h.b16 %v1222
  %v1549 = vunpack.c.l.b16 %v1223
  %v1550 = vunpack.c.h.b16 %v1223
  %v1551 = vunpack.c.l.b16 %v1224
  %v1552 = vunpack.c.h.b16 %v1224
  %v1553 = vunpack.c.l.b16 %v1225
  %v1554 = vunpack.c.h.b16 %v1225
  %v1555 = vunpack.c.l.b16 %v1226
  %v1556 = vunpack.c.h.b16 %v1226
  %v1557 = vunpack.c.l.b16 %v1227
  %v1558 = vunpack.c.h.b16 %v1227
  %v1559 = vunpack.c.l.b16 %v1228
  %v1560 = vunpack.c.h.b16 %v1228
  %v1561 = vunpack.c.l.b16 %v1229
  %v1562 = vunpack.c.h.b16 %v1229
  %v1563 = vunpack.c.l.b16 %v1230
  %v1564 = vunpack.c.h.b16 %v1230
  %v1565 = vunpack.c.l.b16 %v1231
  %v1566 = vunpack.c.h.b16 %v1231
  %v1567 = vunpack.c.l.b16 %v1232
  %v1568 = vunpack.c.h.b16 %v1232
  %v1569 = vunpack.c.l.b16 %v1233
  %v1570 = vunpack.c.h.b16 %v1233
  %v1571 = vunpack.c.l.b16 %v1234
  %v1572 = vunpack.c.h.b16 %v1234
  %v1573 = vunpack.c.l.b16 %v1235
  %v1574 = vunpack.c.h.b16 %v1235
  %v1575 = vunpack.c.l.b16 %v1236
  %v1576 = vunpack.c.h.b16 %v1236
  %v1577 = vunpack.c.l.b16 %v1237
  %v1578 = vunpack.c.h.b16 %v1237
  %v1579 = vunpack.c.l.b16 %v1238
  %v1580 = vunpack.c.h.b16 %v1238
  %v1581 = vunpack.c.l.b16 %v1239
  %v1582 = vunpack.c.h.b16 %v1239
  %v1583 = vunpack.c.l.b16 %v1240
  %v1584 = vunpack.c.h.b16 %v1240
  %v1585 = vunpack.c.l.b16 %v1241
  %v1586 = vunpack.c.h.b16 %v1241
  %v1587 = vunpack.c.l.b16 %v1242
  %v1588 = vunpack.c.h.b16 %v1242
  %v1589 = vunpack.c.l.b16 %v1243
  %v1590 = vunpack.c.h.b16 %v1243
  %v1591 = vunpack.c.l.b16 %v1244
  %v1592 = vunpack.c.h.b16 %v1244
  %v1593 = vunpack.c.l.b16 %v1245
  %v1594 = vunpack.c.h.b16 %v1245
  %v1595 = vunpack.c.l.b16 %v1246
  %v1596 = vunpack.c.h.b16 %v1246
  %v1597 = vunpack.c.l.b16 %v1247
  %v1598 = vunpack.c.h.b16 %v1247
  %v1599 = vunpack.c.l.b16 %v1248
  %v1600 = vunpack.c.h.b16 %v1248
  %v1601 = vpack.c.b16 %v1421, %v1409
  %v1602 = vpack.c.b16 %v1422, %v1410
  %v1603 = vpack.c.b16 %v1423, %v1411
  %v1604 = vpack.c.b16 %v1424, %v1412
  %v1605 = vpack.c.b16 %v1425, %v1413
  %v1606 = vpack.c.b16 %v1426, %v1414
  %v1607 = vpack.c.b16 %v1427, %v1415
  %v1608 = vpack.c.b16 %v1428, %v1416
  %v1609 = vpack.c.b16 %v1429, %v1417
  %v1610 = vpack.c.b16 %v1430, %v1418
  %v1611 = vpack.c.b16 %v1431, %v1419
  %v1612 = vpack.c.b16 %v1432, %v1420
  %v1613 = vpack.c.b16 %v1445, %v1433
  %v1614 = vpack.c.b16 %v1446, %v1434
  %v1615 = vpack.c.b16 %v1447, %v1435
  %v1616 = vpack.c.b16 %v1448, %v1436
  %v1617 = vpack.c.b16 %v1449, %v1437
  %v1618 = vpack.c.b16 %v1450, %v1438
  %v1619 = vpack.c.b16 %v1451, %v1439
  %v1620 = vpack.c.b16 %v1452, %v1440
  %v1621 = vpack.c.b16 %v1453, %v1441
  %v1622 = vpack.c.b16 %v1454, %v1442
  %v1623 = vpack.c.b16 %v1455, %v1443
  %v1624 = vpack.c.b16 %v1456, %v1444
  %v1625 = vpack.c.b16 %v1469, %v1457
  %v1626 = vpack.c.b16 %v1470, %v1458
  %v1627 = vpack.c.b16 %v1471, %v1459
  %v1628 = vpack.c.b16 %v1472, %v1460
  %v1629 = vpack.c.b16 %v1473, %v1461
  %v1630 = vpack.c.b16 %v1474, %v1462
  %v1631 = vpack.c.b16 %v1475, %v1463
  %v1632 = vpack.c.b16 %v1476, %v1464
  %v1633 = vpack.c.b16 %v1477, %v1465
  %v1634 = vpack.c.b16 %v1478, %v1466
  %v1635 = vpack.c.b16 %v1479, %v1467
  %v1636 = vpack.c.b16 %v1480, %v1468
  %v1637 = vpack.c.b16 %v1493, %v1481
  %v1638 = vpack.c.b16 %v1494, %v1482
  %v1639 = vpack.c.b16 %v1495, %v1483
  %v1640 = vpack.c.b16 %v1496, %v1484
  %v1641 = vpack.c.b16 %v1497, %v1485
  %v1642 = vpack.c.b16 %v1498, %v1486
  %v1643 = vpack.c.b16 %v1499, %v1487
  %v1644 = vpack.c.b16 %v1500, %v1488
  %v1645 = vpack.c.b16 %v1501, %v1489
  %v1646 = vpack.c.b16 %v1502, %v1490
  %v1647 = vpack.c.b16 %v1503, %v1491
  %v1648 = vpack.c.b16 %v1504, %v1492
  %v1649 = vpack.c.b16 %v1517, %v1505
  %v1650 = vpack.c.b16 %v1518, %v1506
  %v1651 = vpack.c.b16 %v1519, %v1507
  %v1652 = vpack.c.b16 %v1520, %v1508
  %v1653 = vpack.c.b16 %v1521, %v1509
  %v1654 = vpack.c.b16 %v1522, %v1510
  %v1655 = vpack.c.b16 %v1523, %v1511
  %v1656 = vpack.c.b16 %v1524, %v1512
  %v1657 = vpack.c.b16 %v1525, %v1513
  %v1658 = vpack.c.b16 %v1526, %v1514
  %v1659 = vpack.c.b16 %v1527, %v1515
  %v1660 = vpack.c.b16 %v1528, %v1516
  %v1661 = vpack.c.b16 %v1541, %v1529
  %v1662 = vpack.c.b16 %v1542, %v1530
  %v1663 = vpack.c.b16 %v1543, %v1531
  %v1664 = vpack.c.b16 %v1544, %v1532
  %v1665 = vpack.c.b16 %v1545, %v1533
  %v1666 = vpack.c.b16 %v1546, %v1534
  %v1667 = vpack.c.b16 %v1547, %v1535
  %v1668 = vpack.c.b16 %v1548, %v1536
  %v1669 = vpack.c.b16 %v1549, %v1537
  %v1670 = vpack.c.b16 %v1550, %v1538
  %v1671 = vpack.c.b16 %v1551, %v1539
  %v1672 = vpack.c.b16 %v1552, %v1540
  %v1673 = vpack.c.b16 %v1565, %v1553
  %v1674 = vpack.c.b16 %v1566, %v1554
  %v1675 = vpack.c.b16 %v1567, %v1555
  %v1676 = vpack.c.b16 %v1568, %v1556
  %v1677 = vpack.c.b16 %v1569, %v1557
  %v1678 = vpack.c.b16 %v1570, %v1558
  %v1679 = vpack.c.b16 %v1571, %v1559
  %v1680 = vpack.c.b16 %v1572, %v1560
  %v1681 = vpack.c.b16 %v1573, %v1561
  %v1682 = vpack.c.b16 %v1574, %v1562
  %v1683 = vpack.c.b16 %v1575, %v1563
  %v1684 = vpack.c.b16 %v1576, %v1564
  %v1685 = vpack.c.b16 %v1589, %v1577
  %v1686 = vpack.c.b16 %v1590, %v1578
  %v1687 = vpack.c.b16 %v1591, %v1579
  %v1688 = vpack.c.b16 %v1592, %v1580
  %v1689 = vpack.c.b16 %v1593, %v1581
  %v1690 = vpack.c.b16 %v1594, %v1582
  %v1691 = vpack.c.b16 %v1595, %v1583
  %v1692 = vpack.c.b16 %v1596, %v1584
  %v1693 = vpack.c.b16 %v1597, %v1585
  %v1694 = vpack.c.b16 %v1598, %v1586
  %v1695 = vpack.c.b16 %v1599, %v1587
  %v1696 = vpack.c.b16 %v1600, %v1588
  %1793 = vmatprep.subr.bf16.mxu0 %v1602
  %1794 = vmatpush1.bf16.msra.mxu0 %v1601
  %1795 = vmatprep.subr.bf16.mxu0 %v1614
  %1796 = vmatpush1.bf16.msra.mxu0 %v1613
  %1797 = vmatprep.subr.bf16.mxu0 %v1626
  %1798 = vmatpush1.bf16.msra.mxu0 %v1625
  %1799 = vmatprep.subr.bf16.mxu0 %v1638
  %1800 = vmatpush1.bf16.msra.mxu0 %v1637
  %1801 = vmatprep.subr.bf16.mxu0 %v1650
  %1802 = vmatpush1.bf16.msra.mxu0 %v1649
  %1803 = vmatprep.subr.bf16.mxu0 %v1662
  %1804 = vmatpush1.bf16.msra.mxu0 %v1661
  %1805 = vmatprep.subr.bf16.mxu0 %v1674
  %1806 = vmatpush1.bf16.msra.mxu0 %v1673
  %1807 = vmatprep.subr.bf16.mxu0 %v1686
  %1808 = vmatpush1.bf16.msra.mxu0 %v1685
  %1809 = vmatprep.subr.bf16.mxu0 0
  %1810 = vmatpush1.bf16.msra.mxu0 0
  %1811 = vmatprep.subr.bf16.mxu0 0
  %1812 = vmatpush1.bf16.msra.mxu0 0
  %1813 = vmatprep.subr.bf16.mxu0 0
  %1814 = vmatpush1.bf16.msra.mxu0 0
  %1815 = vmatprep.subr.bf16.mxu0 0
  %1816 = vmatpush1.bf16.msra.mxu0 0
  %1817 = vmatprep.subr.bf16.mxu0 0
  %1818 = vmatpush1.bf16.msra.mxu0 0
  %1819 = vmatprep.subr.bf16.mxu0 0
  %1820 = vmatpush1.bf16.msra.mxu0 0
  %1821 = vmatprep.subr.bf16.mxu0 0
  %1822 = vmatpush1.bf16.msra.mxu0 0
  %1823 = vmatprep.subr.bf16.mxu0 0
  %1824 = vmatpush1.bf16.msra.mxu0 0
  %1825 = vmatprep.mubr.bf16.mxu0 0
  %1826 = vmatmul.mubr.bf16.gmra.mrb[0].mxu0 %v1152
  %v1827 = vpop.f32.mrb[0].mxu0
  %v1828 = vadd.f32 %v1256, %v1827
  %v1829 = vpop.f32.mrb[0].mxu0
  %v1830 = vadd.f32 %v1260, %v1829
  %v1831 = vpop.f32.mrb[0].mxu0
  %v1832 = vadd.f32 %v1256, %v1831
  %v1833 = vpop.f32.mrb[0].mxu0
  %v1834 = vadd.f32 %v1260, %v1833
  %1835 = vdwg.mxu0
  %1836 = vmatprep.subr.bf16.mxu0 %v1604
  %1837 = vmatpush1.bf16.msra.mxu0 %v1603
  %1838 = vmatprep.subr.bf16.mxu0 %v1616
  %1839 = vmatpush1.bf16.msra.mxu0 %v1615
  %1840 = vmatprep.subr.bf16.mxu0 %v1628
  %1841 = vmatpush1.bf16.msra.mxu0 %v1627
  %1842 = vmatprep.subr.bf16.mxu0 %v1640
  %1843 = vmatpush1.bf16.msra.mxu0 %v1639
  %1844 = vmatprep.subr.bf16.mxu0 %v1652
  %1845 = vmatpush1.bf16.msra.mxu0 %v1651
  %1846 = vmatprep.subr.bf16.mxu0 %v1664
  %1847 = vmatpush1.bf16.msra.mxu0 %v1663
  %1848 = vmatprep.subr.bf16.mxu0 %v1676
  %1849 = vmatpush1.bf16.msra.mxu0 %v1675
  %1850 = vmatprep.subr.bf16.mxu0 %v1688
  %1851 = vmatpush1.bf16.msra.mxu0 %v1687
  %1852 = vmatprep.subr.bf16.mxu0 0
  %1853 = vmatpush1.bf16.msra.mxu0 0
  %1854 = vmatprep.subr.bf16.mxu0 0
  %1855 = vmatpush1.bf16.msra.mxu0 0
  %1856 = vmatprep.subr.bf16.mxu0 0
  %1857 = vmatpush1.bf16.msra.mxu0 0
  %1858 = vmatprep.subr.bf16.mxu0 0
  %1859 = vmatpush1.bf16.msra.mxu0 0
  %1860 = vmatprep.subr.bf16.mxu0 0
  %1861 = vmatpush1.bf16.msra.mxu0 0
  %1862 = vmatprep.subr.bf16.mxu0 0
  %1863 = vmatpush1.bf16.msra.mxu0 0
  %1864 = vmatprep.subr.bf16.mxu0 0
  %1865 = vmatpush1.bf16.msra.mxu0 0
  %1866 = vmatprep.subr.bf16.mxu0 0
  %1867 = vmatpush1.bf16.msra.mxu0 0
  %1868 = vmatprep.mubr.bf16.mxu0 0
  %1869 = vmatmul.mubr.bf16.gmra.mrb[0].mxu0 %v1152
  %v1870 = vpop.f32.mrb[0].mxu0
  %v1871 = vadd.f32 %v1264, %v1870
  %v1872 = vpop.f32.mrb[0].mxu0
  %v1873 = vadd.f32 %v1268, %v1872
  %v1874 = vpop.f32.mrb[0].mxu0
  %v1875 = vadd.f32 %v1264, %v1874
  %v1876 = vpop.f32.mrb[0].mxu0
  %v1877 = vadd.f32 %v1268, %v1876
  %1878 = vdwg.mxu0
  %1879 = vmatprep.subr.bf16.mxu0 %v1606
  %1880 = vmatpush1.bf16.msra.mxu0 %v1605
  %1881 = vmatprep.subr.bf16.mxu0 %v1618
  %1882 = vmatpush1.bf16.msra.mxu0 %v1617
  %1883 = vmatprep.subr.bf16.mxu0 %v1630
  %1884 = vmatpush1.bf16.msra.mxu0 %v1629
  %1885 = vmatprep.subr.bf16.mxu0 %v1642
  %1886 = vmatpush1.bf16.msra.mxu0 %v1641
  %1887 = vmatprep.subr.bf16.mxu0 %v1654
  %1888 = vmatpush1.bf16.msra.mxu0 %v1653
  %1889 = vmatprep.subr.bf16.mxu0 %v1666
  %1890 = vmatpush1.bf16.msra.mxu0 %v1665
  %1891 = vmatprep.subr.bf16.mxu0 %v1678
  %1892 = vmatpush1.bf16.msra.mxu0 %v1677
  %1893 = vmatprep.subr.bf16.mxu0 %v1690
  %1894 = vmatpush1.bf16.msra.mxu0 %v1689
  %1895 = vmatprep.subr.bf16.mxu0 0
  %1896 = vmatpush1.bf16.msra.mxu0 0
  %1897 = vmatprep.subr.bf16.mxu0 0
  %1898 = vmatpush1.bf16.msra.mxu0 0
  %1899 = vmatprep.subr.bf16.mxu0 0
  %1900 = vmatpush1.bf16.msra.mxu0 0
  %1901 = vmatprep.subr.bf16.mxu0 0
  %1902 = vmatpush1.bf16.msra.mxu0 0
  %1903 = vmatprep.subr.bf16.mxu0 0
  %1904 = vmatpush1.bf16.msra.mxu0 0
  %1905 = vmatprep.subr.bf16.mxu0 0
  %1906 = vmatpush1.bf16.msra.mxu0 0
  %1907 = vmatprep.subr.bf16.mxu0 0
  %1908 = vmatpush1.bf16.msra.mxu0 0
  %1909 = vmatprep.subr.bf16.mxu0 0
  %1910 = vmatpush1.bf16.msra.mxu0 0
  %1911 = vmatprep.mubr.bf16.mxu0 0
  %1912 = vmatmul.mubr.bf16.gmra.mrb[0].mxu0 %v1152
  %v1913 = vpop.f32.mrb[0].mxu0
  %v1914 = vadd.f32 %v1272, %v1913
  %v1915 = vpop.f32.mrb[0].mxu0
  %v1916 = vadd.f32 %v1276, %v1915
  %v1917 = vpop.f32.mrb[0].mxu0
  %v1918 = vadd.f32 %v1272, %v1917
  %v1919 = vpop.f32.mrb[0].mxu0
  %v1920 = vadd.f32 %v1276, %v1919
  %1921 = vdwg.mxu0
  %1922 = vmatprep.subr.bf16.mxu0 %v1608
  %1923 = vmatpush1.bf16.msra.mxu0 %v1607
  %1924 = vmatprep.subr.bf16.mxu0 %v1620
  %1925 = vmatpush1.bf16.msra.mxu0 %v1619
  %1926 = vmatprep.subr.bf16.mxu0 %v1632
  %1927 = vmatpush1.bf16.msra.mxu0 %v1631
  %1928 = vmatprep.subr.bf16.mxu0 %v1644
  %1929 = vmatpush1.bf16.msra.mxu0 %v1643
  %1930 = vmatprep.subr.bf16.mxu0 %v1656
  %1931 = vmatpush1.bf16.msra.mxu0 %v1655
  %1932 = vmatprep.subr.bf16.mxu0 %v1668
  %1933 = vmatpush1.bf16.msra.mxu0 %v1667
  %1934 = vmatprep.subr.bf16.mxu0 %v1680
  %1935 = vmatpush1.bf16.msra.mxu0 %v1679
  %1936 = vmatprep.subr.bf16.mxu0 %v1692
  %1937 = vmatpush1.bf16.msra.mxu0 %v1691
  %1938 = vmatprep.subr.bf16.mxu0 0
  %1939 = vmatpush1.bf16.msra.mxu0 0
  %1940 = vmatprep.subr.bf16.mxu0 0
  %1941 = vmatpush1.bf16.msra.mxu0 0
  %1942 = vmatprep.subr.bf16.mxu0 0
  %1943 = vmatpush1.bf16.msra.mxu0 0
  %1944 = vmatprep.subr.bf16.mxu0 0
  %1945 = vmatpush1.bf16.msra.mxu0 0
  %1946 = vmatprep.subr.bf16.mxu0 0
  %1947 = vmatpush1.bf16.msra.mxu0 0
  %1948 = vmatprep.subr.bf16.mxu0 0
  %1949 = vmatpush1.bf16.msra.mxu0 0
  %1950 = vmatprep.subr.bf16.mxu0 0
  %1951 = vmatpush1.bf16.msra.mxu0 0
  %1952 = vmatprep.subr.bf16.mxu0 0
  %1953 = vmatpush1.bf16.msra.mxu0 0
  %1954 = vmatprep.mubr.bf16.mxu0 0
  %1955 = vmatmul.mubr.bf16.gmra.mrb[0].mxu0 %v1152
  %v1956 = vpop.f32.mrb[0].mxu0
  %v1957 = vadd.f32 %v1280, %v1956
  %v1958 = vpop.f32.mrb[0].mxu0
  %v1959 = vadd.f32 %v1284, %v1958
  %v1960 = vpop.f32.mrb[0].mxu0
  %v1961 = vadd.f32 %v1280, %v1960
  %v1962 = vpop.f32.mrb[0].mxu0
  %v1963 = vadd.f32 %v1284, %v1962
  %1964 = vdwg.mxu0
  %1965 = vmatprep.subr.bf16.mxu0 %v1610
  %1966 = vmatpush1.bf16.msra.mxu0 %v1609
  %1967 = vmatprep.subr.bf16.mxu0 %v1622
  %1968 = vmatpush1.bf16.msra.mxu0 %v1621
  %1969 = vmatprep.subr.bf16.mxu0 %v1634
  %1970 = vmatpush1.bf16.msra.mxu0 %v1633
  %1971 = vmatprep.subr.bf16.mxu0 %v1646
  %1972 = vmatpush1.bf16.msra.mxu0 %v1645
  %1973 = vmatprep.subr.bf16.mxu0 %v1658
  %1974 = vmatpush1.bf16.msra.mxu0 %v1657
  %1975 = vmatprep.subr.bf16.mxu0 %v1670
  %1976 = vmatpush1.bf16.msra.mxu0 %v1669
  %1977 = vmatprep.subr.bf16.mxu0 %v1682
  %1978 = vmatpush1.bf16.msra.mxu0 %v1681
  %1979 = vmatprep.subr.bf16.mxu0 %v1694
  %1980 = vmatpush1.bf16.msra.mxu0 %v1693
  %1981 = vmatprep.subr.bf16.mxu0 0
  %1982 = vmatpush1.bf16.msra.mxu0 0
  %1983 = vmatprep.subr.bf16.mxu0 0
  %1984 = vmatpush1.bf16.msra.mxu0 0
  %1985 = vmatprep.subr.bf16.mxu0 0
  %1986 = vmatpush1.bf16.msra.mxu0 0
  %1987 = vmatprep.subr.bf16.mxu0 0
  %1988 = vmatpush1.bf16.msra.mxu0 0
  %1989 = vmatprep.subr.bf16.mxu0 0
  %1990 = vmatpush1.bf16.msra.mxu0 0
  %1991 = vmatprep.subr.bf16.mxu0 0
  %1992 = vmatpush1.bf16.msra.mxu0 0
  %1993 = vmatprep.subr.bf16.mxu0 0
  %1994 = vmatpush1.bf16.msra.mxu0 0
  %1995 = vmatprep.subr.bf16.mxu0 0
  %1996 = vmatpush1.bf16.msra.mxu0 0
  %1997 = vmatprep.mubr.bf16.mxu0 0
  %1998 = vmatmul.mubr.bf16.gmra.mrb[0].mxu0 %v1152
  %v1999 = vpop.f32.mrb[0].mxu0
  %v2000 = vadd.f32 %v1288, %v1999
  %v2001 = vpop.f32.mrb[0].mxu0
  %v2002 = vadd.f32 %v1292, %v2001
  %v2003 = vpop.f32.mrb[0].mxu0
  %v2004 = vadd.f32 %v1288, %v2003
  %v2005 = vpop.f32.mrb[0].mxu0
  %v2006 = vadd.f32 %v1292, %v2005
  %2007 = vdwg.mxu0
  %2008 = vmatprep.subr.bf16.mxu0 %v1612
  %2009 = vmatpush1.bf16.msra.mxu0 %v1611
  %2010 = vmatprep.subr.bf16.mxu0 %v1624
  %2011 = vmatpush1.bf16.msra.mxu0 %v1623
  %2012 = vmatprep.subr.bf16.mxu0 %v1636
  %2013 = vmatpush1.bf16.msra.mxu0 %v1635
  %2014 = vmatprep.subr.bf16.mxu0 %v1648
  %2015 = vmatpush1.bf16.msra.mxu0 %v1647
  %2016 = vmatprep.subr.bf16.mxu0 %v1660
  %2017 = vmatpush1.bf16.msra.mxu0 %v1659
  %2018 = vmatprep.subr.bf16.mxu0 %v1672
  %2019 = vmatpush1.bf16.msra.mxu0 %v1671
  %2020 = vmatprep.subr.bf16.mxu0 %v1684
  %2021 = vmatpush1.bf16.msra.mxu0 %v1683
  %2022 = vmatprep.subr.bf16.mxu0 %v1696
  %2023 = vmatpush1.bf16.msra.mxu0 %v1695
  %2024 = vmatprep.subr.bf16.mxu0 0
  %2025 = vmatpush1.bf16.msra.mxu0 0
  %2026 = vmatprep.subr.bf16.mxu0 0
  %2027 = vmatpush1.bf16.msra.mxu0 0
  %2028 = vmatprep.subr.bf16.mxu0 0
  %2029 = vmatpush1.bf16.msra.mxu0 0
  %2030 = vmatprep.subr.bf16.mxu0 0
  %2031 = vmatpush1.bf16.msra.mxu0 0
  %2032 = vmatprep.subr.bf16.mxu0 0
  %2033 = vmatpush1.bf16.msra.mxu0 0
  %2034 = vmatprep.subr.bf16.mxu0 0
  %2035 = vmatpush1.bf16.msra.mxu0 0
  %2036 = vmatprep.subr.bf16.mxu0 0
  %2037 = vmatpush1.bf16.msra.mxu0 0
  %2038 = vmatprep.subr.bf16.mxu0 0
  %2039 = vmatpush1.bf16.msra.mxu0 0
  %2040 = vmatprep.mubr.bf16.mxu0 0
  %2041 = vmatmul.mubr.bf16.gmra.mrb[0].mxu0 %v1152
  %v2042 = vpop.f32.mrb[0].mxu0
  %v2043 = vadd.f32 %v1296, %v2042
  %v2044 = vpop.f32.mrb[0].mxu0
  %v2045 = vadd.f32 %v1300, %v2044
  %v2046 = vpop.f32.mrb[0].mxu0
  %v2047 = vadd.f32 %v1296, %v2046
  %v2048 = vpop.f32.mrb[0].mxu0
  %v2049 = vadd.f32 %v1300, %v2048
  %2050 = vdwg.mxu0
  %vm2051 = vcmp.ge.f32.partialorder %v1828, 0.0
  %vm2052 = vcmp.ge.f32.partialorder %v1830, 0.0
  %vm2053 = vcmp.ge.f32.partialorder %v1871, 0.0
  %vm2054 = vcmp.ge.f32.partialorder %v1873, 0.0
  %vm2055 = vcmp.ge.f32.partialorder %v1914, 0.0
  %vm2056 = vcmp.ge.f32.partialorder %v1916, 0.0
  %vm2057 = vcmp.ge.f32.partialorder %v1957, 0.0
  %vm2058 = vcmp.ge.f32.partialorder %v1959, 0.0
  %vm2059 = vcmp.ge.f32.partialorder %v2000, 0.0
  %vm2060 = vcmp.ge.f32.partialorder %v2002, 0.0
  %vm2061 = vcmp.ge.f32.partialorder %v2043, 0.0
  %vm2062 = vcmp.ge.f32.partialorder %v2045, 0.0
  %vm2063 = vcmp.ge.f32.partialorder %v1832, 0.0
  %vm2064 = vcmp.ge.f32.partialorder %v1834, 0.0
  %vm2065 = vcmp.ge.f32.partialorder %v1875, 0.0
  %vm2066 = vcmp.ge.f32.partialorder %v1877, 0.0
  %vm2067 = vcmp.ge.f32.partialorder %v1918, 0.0
  %vm2068 = vcmp.ge.f32.partialorder %v1920, 0.0
  %vm2069 = vcmp.ge.f32.partialorder %v1961, 0.0
  %vm2070 = vcmp.ge.f32.partialorder %v1963, 0.0
  %vm2071 = vcmp.ge.f32.partialorder %v2004, 0.0
  %vm2072 = vcmp.ge.f32.partialorder %v2006, 0.0
  %vm2073 = vcmp.ge.f32.partialorder %v2047, 0.0
  %vm2074 = vcmp.ge.f32.partialorder %v2049, 0.0
  %v2075 = vmul.f32 %v1828, 0.2
  %v2076 = vmul.f32 %v1830, 0.2
  %v2077 = vmul.f32 %v1871, 0.2
  %v2078 = vmul.f32 %v1873, 0.2
  %v2079 = vmul.f32 %v1914, 0.2
  %v2080 = vmul.f32 %v1916, 0.2
  %v2081 = vmul.f32 %v1957, 0.2
  %v2082 = vmul.f32 %v1959, 0.2
  %v2083 = vmul.f32 %v2000, 0.2
  %v2084 = vmul.f32 %v2002, 0.2
  %v2085 = vmul.f32 %v2043, 0.2
  %v2086 = vmul.f32 %v2045, 0.2
  %v2087 = vmul.f32 %v1832, 0.2
  %v2088 = vmul.f32 %v1834, 0.2
  %v2089 = vmul.f32 %v1875, 0.2
  %v2090 = vmul.f32 %v1877, 0.2
  %v2091 = vmul.f32 %v1918, 0.2
  %v2092 = vmul.f32 %v1920, 0.2
  %v2093 = vmul.f32 %v1961, 0.2
  %v2094 = vmul.f32 %v1963, 0.2
  %v2095 = vmul.f32 %v2004, 0.2
  %v2096 = vmul.f32 %v2006, 0.2
  %v2097 = vmul.f32 %v2047, 0.2
  %v2098 = vmul.f32 %v2049, 0.2
  %v2099 = vsel %vm2051, %v1828, %v2075
  %v2100 = vsel %vm2052, %v1830, %v2076
  %v2101 = vsel %vm2053, %v1871, %v2077
  %v2102 = vsel %vm2054, %v1873, %v2078
  %v2103 = vsel %vm2055, %v1914, %v2079
  %v2104 = vsel %vm2056, %v1916, %v2080
  %v2105 = vsel %vm2057, %v1957, %v2081
  %v2106 = vsel %vm2058, %v1959, %v2082
  %v2107 = vsel %vm2059, %v2000, %v2083
  %v2108 = vsel %vm2060, %v2002, %v2084
  %v2109 = vsel %vm2061, %v2043, %v2085
  %v2110 = vsel %vm2062, %v2045, %v2086
  %v2111 = vsel %vm2063, %v1832, %v2087
  %v2112 = vsel %vm2064, %v1834, %v2088
  %v2113 = vsel %vm2065, %v1875, %v2089
  %v2114 = vsel %vm2066, %v1877, %v2090
  %v2115 = vsel %vm2067, %v1918, %v2091
  %v2116 = vsel %vm2068, %v1920, %v2092
  %v2117 = vsel %vm2069, %v1961, %v2093
  %v2118 = vsel %vm2070, %v1963, %v2094
  %v2119 = vsel %vm2071, %v2004, %v2095
  %v2120 = vsel %vm2072, %v2006, %v2096
  %v2121 = vsel %vm2073, %v2047, %v2097
  %v2122 = vsel %vm2074, %v2049, %v2098
  %v2123 = vadd.f32 %v929, %v933
  %v2124 = vrot.slane %v2123, 4
  %v2125 = vadd.f32 %v2123, %v2124
  %v2126 = vrot.slane %v2125, 2
  %v2127 = vadd.f32 %v2125, %v2126
  %v2128 = vrot.slane %v2127, 1
  %v2129 = vadd.f32 %v2127, %v2128
  %v2130 = vadd.f32 %v931, %v935
  %v2131 = vrot.slane %v2130, 4
  %v2132 = vadd.f32 %v2130, %v2131
  %v2133 = vrot.slane %v2132, 2
  %v2134 = vadd.f32 %v2132, %v2133
  %v2135 = vrot.slane %v2134, 1
  %v2136 = vadd.f32 %v2134, %v2135
  %v2137 = vadd.f32 %v972, %v976
  %v2138 = vrot.slane %v2137, 4
  %v2139 = vadd.f32 %v2137, %v2138
  %v2140 = vrot.slane %v2139, 2
  %v2141 = vadd.f32 %v2139, %v2140
  %v2142 = vrot.slane %v2141, 1
  %v2143 = vadd.f32 %v2141, %v2142
  %v2144 = vadd.f32 %v974, %v978
  %v2145 = vrot.slane %v2144, 4
  %v2146 = vadd.f32 %v2144, %v2145
  %v2147 = vrot.slane %v2146, 2
  %v2148 = vadd.f32 %v2146, %v2147
  %v2149 = vrot.slane %v2148, 1
  %v2150 = vadd.f32 %v2148, %v2149
  %v2151 = vadd.f32 %v1015, %v1019
  %v2152 = vrot.slane %v2151, 4
  %v2153 = vadd.f32 %v2151, %v2152
  %v2154 = vrot.slane %v2153, 2
  %v2155 = vadd.f32 %v2153, %v2154
  %v2156 = vrot.slane %v2155, 1
  %v2157 = vadd.f32 %v2155, %v2156
  %v2158 = vadd.f32 %v1017, %v1021
  %v2159 = vrot.slane %v2158, 4
  %v2160 = vadd.f32 %v2158, %v2159
  %v2161 = vrot.slane %v2160, 2
  %v2162 = vadd.f32 %v2160, %v2161
  %v2163 = vrot.slane %v2162, 1
  %v2164 = vadd.f32 %v2162, %v2163
  %v2165 = vadd.f32 %v1058, %v1062
  %v2166 = vrot.slane %v2165, 4
  %v2167 = vadd.f32 %v2165, %v2166
  %v2168 = vrot.slane %v2167, 2
  %v2169 = vadd.f32 %v2167, %v2168
  %v2170 = vrot.slane %v2169, 1
  %v2171 = vadd.f32 %v2169, %v2170
  %v2172 = vadd.f32 %v1060, %v1064
  %v2173 = vrot.slane %v2172, 4
  %v2174 = vadd.f32 %v2172, %v2173
  %v2175 = vrot.slane %v2174, 2
  %v2176 = vadd.f32 %v2174, %v2175
  %v2177 = vrot.slane %v2176, 1
  %v2178 = vadd.f32 %v2176, %v2177
  %v2179 = vadd.f32 %v1101, %v1105
  %v2180 = vrot.slane %v2179, 4
  %v2181 = vadd.f32 %v2179, %v2180
  %v2182 = vrot.slane %v2181, 2
  %v2183 = vadd.f32 %v2181, %v2182
  %v2184 = vrot.slane %v2183, 1
  %v2185 = vadd.f32 %v2183, %v2184
  %v2186 = vadd.f32 %v1103, %v1107
  %v2187 = vrot.slane %v2186, 4
  %v2188 = vadd.f32 %v2186, %v2187
  %v2189 = vrot.slane %v2188, 2
  %v2190 = vadd.f32 %v2188, %v2189
  %v2191 = vrot.slane %v2190, 1
  %v2192 = vadd.f32 %v2190, %v2191
  %v2193 = vadd.f32 %v1144, %v1148
  %v2194 = vrot.slane %v2193, 4
  %v2195 = vadd.f32 %v2193, %v2194
  %v2196 = vrot.slane %v2195, 2
  %v2197 = vadd.f32 %v2195, %v2196
  %v2198 = vrot.slane %v2197, 1
  %v2199 = vadd.f32 %v2197, %v2198
  %v2200 = vadd.f32 %v1146, %v1150
  %v2201 = vrot.slane %v2200, 4
  %v2202 = vadd.f32 %v2200, %v2201
  %v2203 = vrot.slane %v2202, 2
  %v2204 = vadd.f32 %v2202, %v2203
  %v2205 = vrot.slane %v2204, 1
  %v2206 = vadd.f32 %v2204, %v2205
  %v2207 = vmul.f32 %v929, %v929
  %v2208 = vmul.f32 %v931, %v931
  %v2209 = vmul.f32 %v972, %v972
  %v2210 = vmul.f32 %v974, %v974
  %v2211 = vmul.f32 %v1015, %v1015
  %v2212 = vmul.f32 %v1017, %v1017
  %v2213 = vmul.f32 %v1058, %v1058
  %v2214 = vmul.f32 %v1060, %v1060
  %v2215 = vmul.f32 %v1101, %v1101
  %v2216 = vmul.f32 %v1103, %v1103
  %v2217 = vmul.f32 %v1144, %v1144
  %v2218 = vmul.f32 %v1146, %v1146
  %v2219 = vmul.f32 %v933, %v933
  %v2220 = vmul.f32 %v935, %v935
  %v2221 = vmul.f32 %v976, %v976
  %v2222 = vmul.f32 %v978, %v978
  %v2223 = vmul.f32 %v1019, %v1019
  %v2224 = vmul.f32 %v1021, %v1021
  %v2225 = vmul.f32 %v1062, %v1062
  %v2226 = vmul.f32 %v1064, %v1064
  %v2227 = vmul.f32 %v1105, %v1105
  %v2228 = vmul.f32 %v1107, %v1107
  %v2229 = vmul.f32 %v1148, %v1148
  %v2230 = vmul.f32 %v1150, %v1150
  %v2231 = vadd.f32 %v2207, %v2219
  %v2232 = vrot.slane %v2231, 4
  %v2233 = vadd.f32 %v2231, %v2232
  %v2234 = vrot.slane %v2233, 2
  %v2235 = vadd.f32 %v2233, %v2234
  %v2236 = vrot.slane %v2235, 1
  %v2237 = vadd.f32 %v2235, %v2236
  %v2238 = vadd.f32 %v2208, %v2220
  %v2239 = vrot.slane %v2238, 4
  %v2240 = vadd.f32 %v2238, %v2239
  %v2241 = vrot.slane %v2240, 2
  %v2242 = vadd.f32 %v2240, %v2241
  %v2243 = vrot.slane %v2242, 1
  %v2244 = vadd.f32 %v2242, %v2243
  %v2245 = vadd.f32 %v2209, %v2221
  %v2246 = vrot.slane %v2245, 4
  %v2247 = vadd.f32 %v2245, %v2246
  %v2248 = vrot.slane %v2247, 2
  %v2249 = vadd.f32 %v2247, %v2248
  %v2250 = vrot.slane %v2249, 1
  %v2251 = vadd.f32 %v2249, %v2250
  %v2252 = vadd.f32 %v2210, %v2222
  %v2253 = vrot.slane %v2252, 4
  %v2254 = vadd.f32 %v2252, %v2253
  %v2255 = vrot.slane %v2254, 2
  %v2256 = vadd.f32 %v2254, %v2255
  %v2257 = vrot.slane %v2256, 1
  %v2258 = vadd.f32 %v2256, %v2257
  %v2259 = vadd.f32 %v2211, %v2223
  %v2260 = vrot.slane %v2259, 4
  %v2261 = vadd.f32 %v2259, %v2260
  %v2262 = vrot.slane %v2261, 2
  %v2263 = vadd.f32 %v2261, %v2262
  %v2264 = vrot.slane %v2263, 1
  %v2265 = vadd.f32 %v2263, %v2264
  %v2266 = vadd.f32 %v2212, %v2224
  %v2267 = vrot.slane %v2266, 4
  %v2268 = vadd.f32 %v2266, %v2267
  %v2269 = vrot.slane %v2268, 2
  %v2270 = vadd.f32 %v2268, %v2269
  %v2271 = vrot.slane %v2270, 1
  %v2272 = vadd.f32 %v2270, %v2271
  %v2273 = vadd.f32 %v2213, %v2225
  %v2274 = vrot.slane %v2273, 4
  %v2275 = vadd.f32 %v2273, %v2274
  %v2276 = vrot.slane %v2275, 2
  %v2277 = vadd.f32 %v2275, %v2276
  %v2278 = vrot.slane %v2277, 1
  %v2279 = vadd.f32 %v2277, %v2278
  %v2280 = vadd.f32 %v2214, %v2226
  %v2281 = vrot.slane %v2280, 4
  %v2282 = vadd.f32 %v2280, %v2281
  %v2283 = vrot.slane %v2282, 2
  %v2284 = vadd.f32 %v2282, %v2283
  %v2285 = vrot.slane %v2284, 1
  %v2286 = vadd.f32 %v2284, %v2285
  %v2287 = vadd.f32 %v2215, %v2227
  %v2288 = vrot.slane %v2287, 4
  %v2289 = vadd.f32 %v2287, %v2288
  %v2290 = vrot.slane %v2289, 2
  %v2291 = vadd.f32 %v2289, %v2290
  %v2292 = vrot.slane %v2291, 1
  %v2293 = vadd.f32 %v2291, %v2292
  %v2294 = vadd.f32 %v2216, %v2228
  %v2295 = vrot.slane %v2294, 4
  %v2296 = vadd.f32 %v2294, %v2295
  %v2297 = vrot.slane %v2296, 2
  %v2298 = vadd.f32 %v2296, %v2297
  %v2299 = vrot.slane %v2298, 1
  %v2300 = vadd.f32 %v2298, %v2299
  %v2301 = vadd.f32 %v2217, %v2229
  %v2302 = vrot.slane %v2301, 4
  %v2303 = vadd.f32 %v2301, %v2302
  %v2304 = vrot.slane %v2303, 2
  %v2305 = vadd.f32 %v2303, %v2304
  %v2306 = vrot.slane %v2305, 1
  %v2307 = vadd.f32 %v2305, %v2306
  %v2308 = vadd.f32 %v2218, %v2230
  %v2309 = vrot.slane %v2308, 4
  %v2310 = vadd.f32 %v2308, %v2309
  %v2311 = vrot.slane %v2310, 2
  %v2312 = vadd.f32 %v2310, %v2311
  %v2313 = vrot.slane %v2312, 1
  %v2314 = vadd.f32 %v2312, %v2313
  %v2315 = vadd.f32 %v2129, %v2143
  %v2316 = vadd.f32 %v2136, %v2150
  %v2317 = vadd.f32 %v2237, %v2251
  %v2318 = vadd.f32 %v2244, %v2258
  %v2319 = vadd.f32 %v2315, %v2157
  %v2320 = vadd.f32 %v2316, %v2164
  %v2321 = vadd.f32 %v2317, %v2265
  %v2322 = vadd.f32 %v2318, %v2272
  %v2323 = vadd.f32 %v2319, %v2171
  %v2324 = vadd.f32 %v2320, %v2178
  %v2325 = vadd.f32 %v2321, %v2279
  %v2326 = vadd.f32 %v2322, %v2286
  %v2327 = vadd.f32 %v2323, %v2185
  %v2328 = vadd.f32 %v2324, %v2192
  %v2329 = vadd.f32 %v2325, %v2293
  %v2330 = vadd.f32 %v2326, %v2300
  %v2331 = vadd.f32 %v2327, %v2199
  %v2332 = vadd.f32 %v2328, %v2206
  %v2333 = vadd.f32 %v2329, %v2307
  %v2334 = vadd.f32 %v2330, %v2314
  %vm2335 = vcmask 1040384
  %v2336 = vsel %vm2335, %v2331, %v2333
  %v2337 = vsel %vm2335, %v2332, %v2334
  %v2338 = vld [vmem:[%s9] sm:$0xff]
  %v2339 = vld [vmem:[%s9 + $0x8] sm:$0xff]
  %v2340 = vld [vmem:[%s9 + $0x10] sm:$0xff]
  %v2341 = vld [vmem:[%s9 + $0x18] sm:$0xff]
  %v2342 = vld [vmem:[%s9 + $0x20] sm:$0xff]
  %v2343 = vld [vmem:[%s9 + $0x28] sm:$0xff]
  %v2344 = vld [vmem:[%s9 + $0x30] sm:$0xff]
  %v2345 = vld [vmem:[%s9 + $0x38] sm:$0xff]
  %v2346 = vld [vmem:[%s9 + $0x40] sm:$0xff]
  %v2347 = vld [vmem:[%s9 + $0x48] sm:$0xff]
  %v2348 = vld [vmem:[%s9 + $0x50] sm:$0xff]
  %v2349 = vld [vmem:[%s9 + $0x58] sm:$0xff]
  %v2350 = vld [vmem:[%s9 + $0x60] sm:$0xff]
  %v2351 = vld [vmem:[%s9 + $0x68] sm:$0xff]
  %v2352 = vld [vmem:[%s9 + $0x70] sm:$0xff]
  %v2353 = vld [vmem:[%s9 + $0x78] sm:$0xff]
  %v2354 = vld [vmem:[%s9 + $0x80] sm:$0xff]
  %v2355 = vld [vmem:[%s9 + $0x88] sm:$0xff]
  %v2356 = vld [vmem:[%s9 + $0x90] sm:$0xff]
  %v2357 = vld [vmem:[%s9 + $0x98] sm:$0xff]
  %v2358 = vld [vmem:[%s9 + $0xa0] sm:$0xff]
  %v2359 = vld [vmem:[%s9 + $0xa8] sm:$0xff]
  %v2360 = vld [vmem:[%s9 + $0xb0] sm:$0xff]
  %v2361 = vld [vmem:[%s9 + $0xb8] sm:$0xff]
  %v2362 = vld [vmem:[%s9 + $0xc0] sm:$0xff]
  %v2363 = vld [vmem:[%s9 + $0xc8] sm:$0xff]
  %v2364 = vld [vmem:[%s9 + $0xd0] sm:$0xff]
  %v2365 = vld [vmem:[%s9 + $0xd8] sm:$0xff]
  %v2366 = vld [vmem:[%s9 + $0xe0] sm:$0xff]
  %v2367 = vld [vmem:[%s9 + $0xe8] sm:$0xff]
  %v2368 = vld [vmem:[%s9 + $0xf0] sm:$0xff]
  %v2369 = vld [vmem:[%s9 + $0xf8] sm:$0xff]
  %2370 = vmatprep.subr.mxu0 0.0
  %2371 = vmatpush1.msra.mxu0 %v2338
  %2372 = vmatprep.subr.mxu0 0.0
  %2373 = vmatpush1.msra.mxu0 %v2339
  %2374 = vmatprep.subr.mxu0 0.0
  %2375 = vmatpush1.msra.mxu0 %v2340
  %2376 = vmatprep.subr.mxu0 0.0
  %2377 = vmatpush1.msra.mxu0 %v2341
  %2378 = vmatprep.subr.mxu0 0.0
  %2379 = vmatpush1.msra.mxu0 %v2342
  %2380 = vmatprep.subr.mxu0 0.0
  %2381 = vmatpush1.msra.mxu0 %v2343
  %2382 = vmatprep.subr.mxu0 0.0
  %2383 = vmatpush1.msra.mxu0 %v2344
  %2384 = vmatprep.subr.mxu0 0.0
  %2385 = vmatpush1.msra.mxu0 %v2345
  %2386 = vmatprep.subr.mxu0 0.0
  %2387 = vmatpush1.msra.mxu0 %v2346
  %2388 = vmatprep.subr.mxu0 0.0
  %2389 = vmatpush1.msra.mxu0 %v2347
  %2390 = vmatprep.subr.mxu0 0.0
  %2391 = vmatpush1.msra.mxu0 %v2348
  %2392 = vmatprep.subr.mxu0 0.0
  %2393 = vmatpush1.msra.mxu0 %v2349
  %2394 = vmatprep.subr.mxu0 0.0
  %2395 = vmatpush1.msra.mxu0 %v2350
  %2396 = vmatprep.subr.mxu0 0.0
  %2397 = vmatpush1.msra.mxu0 %v2351
  %2398 = vmatprep.subr.mxu0 0.0
  %2399 = vmatpush1.msra.mxu0 %v2352
  %2400 = vmatprep.subr.mxu0 0.0
  %2401 = vmatpush1.msra.mxu0 %v2353
  %2402 = vmatprep.subr.mxu0 0.0
  %2403 = vmatpush1.msra.mxu0 %v2354
  %2404 = vmatprep.subr.mxu0 0.0
  %2405 = vmatpush1.msra.mxu0 %v2355
  %2406 = vmatprep.subr.mxu0 0.0
  %2407 = vmatpush1.msra.mxu0 %v2356
  %2408 = vmatprep.subr.mxu0 0.0
  %2409 = vmatpush1.msra.mxu0 %v2357
  %2410 = vmatprep.subr.mxu0 0.0
  %2411 = vmatpush1.msra.mxu0 %v2358
  %2412 = vmatprep.subr.mxu0 0.0
  %2413 = vmatpush1.msra.mxu0 %v2359
  %2414 = vmatprep.subr.mxu0 0.0
  %2415 = vmatpush1.msra.mxu0 %v2360
  %2416 = vmatprep.subr.mxu0 0.0
  %2417 = vmatpush1.msra.mxu0 %v2361
  %2418 = vmatprep.subr.mxu0 0.0
  %2419 = vmatpush1.msra.mxu0 %v2362
  %2420 = vmatprep.subr.mxu0 0.0
  %2421 = vmatpush1.msra.mxu0 %v2363
  %2422 = vmatprep.subr.mxu0 0.0
  %2423 = vmatpush1.msra.mxu0 %v2364
  %2424 = vmatprep.subr.mxu0 0.0
  %2425 = vmatpush1.msra.mxu0 %v2365
  %2426 = vmatprep.subr.mxu0 0.0
  %2427 = vmatpush1.msra.mxu0 %v2366
  %2428 = vmatprep.subr.mxu0 0.0
  %2429 = vmatpush1.msra.mxu0 %v2367
  %2430 = vmatprep.subr.mxu0 0.0
  %2431 = vmatpush1.msra.mxu0 %v2368
  %2432 = vmatprep.subr.mxu0 0.0
  %2433 = vmatpush1.msra.mxu0 %v2369
  %2434 = vmatprep.mubr.f32.mxu0 %v2337
  %2435 = vmatmul.mubr.f32.gmra.mrb[0].mxu0 %v2336
  %v2436 = vpop.f32.mrb[0].mxu0
  %v2437 = vadd.f32 0.0, %v2436
  %v2438 = vpop.f32.mrb[0].mxu0
  %2439 = vdwg.mxu0
  %v2440 = vmul.f32 %v2437, 0.0020833334
  %v2441 = vmul.f32 %v2440, %v2440
  %v2443 = vrot.slane %v2441, 7
  %v2445 = vsub.f32 %v2440, %v2443
  %v2446 = vmax.f32 %v2445, 0.0
  %v2447 = vld [vmem:[%s11] sm:$0x1]
  %v2448 = vadd.f32 %v2446, 1e-05
  %v2449 = vrsqrt.pop %v2448
  %v2452 = vunpack.c.l.s4 1966171168
  %v2453 = vunpack.c.0.s8 %v2452
  %v2454 = vlaneseq
  %v2455 = vshrl.u32 %v2454, 7
  %v2456 = vsub.s32 %v2453, %v2455
  %v2457 = vrot.slane %v2449, %v2456
  %v2458 = vcombine.high %v2457, %v2457
  %v2460 = vunpack.c.l.s4 1966171168
  %v2461 = vunpack.c.0.s8 %v2460
  %v2462 = vlaneseq
  %v2463 = vshrl.u32 %v2462, 7
  %v2464 = vsub.s32 %v2461, %v2463
  %v2465 = vrot.slane %v2458, %v2464
  %v2467 = vmul.f32 %v2447, %v2465
  %v2468 = vld [vmem:[%s12] sm:$0x1]
  %v2469 = vmul.f32 %v2440, %v2467
  %v2470 = vsub.f32 %v2468, %v2469
  %v2472 = vlaneseq
  %v2473 = vshrl.u32 %v2472, 7
  %v2474 = vsub.s32 0, %v2473
  %v2475 = vrot.slane %v2470, %v2474
  %v2477 = vsel %vm2335, %v2467, %v2475
  %v2478 = vld [vmem:[%s10] sm:$0xff]
  %v2479 = vld [vmem:[%s10 + $0x8] sm:$0xff]
  %v2480 = vld [vmem:[%s10 + $0x10] sm:$0xff]
  %v2481 = vld [vmem:[%s10 + $0x18] sm:$0xff]
  %v2482 = vld [vmem:[%s10 + $0x20] sm:$0xff]
  %v2483 = vld [vmem:[%s10 + $0x28] sm:$0xff]
  %v2484 = vld [vmem:[%s10 + $0x30] sm:$0xff]
  %v2485 = vld [vmem:[%s10 + $0x38] sm:$0xff]
  %v2486 = vld [vmem:[%s10 + $0x40] sm:$0xff]
  %v2487 = vld [vmem:[%s10 + $0x48] sm:$0xff]
  %v2488 = vld [vmem:[%s10 + $0x50] sm:$0xff]
  %v2489 = vld [vmem:[%s10 + $0x58] sm:$0xff]
  %v2490 = vld [vmem:[%s10 + $0x60] sm:$0xff]
  %v2491 = vld [vmem:[%s10 + $0x68] sm:$0xff]
  %v2492 = vld [vmem:[%s10 + $0x70] sm:$0xff]
  %v2493 = vld [vmem:[%s10 + $0x78] sm:$0xff]
  %vm2494 = vcmask 523264
  %v2496 = vsel %vm2494, %v2477, 0
  %2498 = vmatprep.subr.mxu0 %v2479
  %2499 = vmatpush1.msra.mxu0 %v2478
  %2500 = vmatprep.subr.mxu0 %v2481
  %2501 = vmatpush1.msra.mxu0 %v2480
  %2502 = vmatprep.subr.mxu0 %v2483
  %2503 = vmatpush1.msra.mxu0 %v2482
  %2504 = vmatprep.subr.mxu0 %v2485
  %2505 = vmatpush1.msra.mxu0 %v2484
  %2506 = vmatprep.subr.mxu0 %v2487
  %2507 = vmatpush1.msra.mxu0 %v2486
  %2508 = vmatprep.subr.mxu0 %v2489
  %2509 = vmatpush1.msra.mxu0 %v2488
  %2510 = vmatprep.subr.mxu0 %v2491
  %2511 = vmatpush1.msra.mxu0 %v2490
  %2512 = vmatprep.subr.mxu0 %v2493
  %2513 = vmatpush1.msra.mxu0 %v2492
  %2514 = vmatprep.subr.mxu0 0.0
  %2515 = vmatpush1.msra.mxu0 0.0
  %2516 = vmatprep.subr.mxu0 0.0
  %2517 = vmatpush1.msra.mxu0 0.0
  %2518 = vmatprep.subr.mxu0 0.0
  %2519 = vmatpush1.msra.mxu0 0.0
  %2520 = vmatprep.subr.mxu0 0.0
  %2521 = vmatpush1.msra.mxu0 0.0
  %2522 = vmatprep.subr.mxu0 0.0
  %2523 = vmatpush1.msra.mxu0 0.0
  %2524 = vmatprep.subr.mxu0 0.0
  %2525 = vmatpush1.msra.mxu0 0.0
  %2526 = vmatprep.subr.mxu0 0.0
  %2527 = vmatpush1.msra.mxu0 0.0
  %2528 = vmatprep.subr.mxu0 0.0
  %2529 = vmatpush1.msra.mxu0 0.0
  %2530 = vmatprep.subr.mxu0 0.0
  %2531 = vmatpush1.msra.mxu0 0.0
  %2532 = vmatprep.subr.mxu0 0.0
  %2533 = vmatpush1.msra.mxu0 0.0
  %2534 = vmatprep.subr.mxu0 0.0
  %2535 = vmatpush1.msra.mxu0 0.0
  %2536 = vmatprep.subr.mxu0 0.0
  %2537 = vmatpush1.msra.mxu0 0.0
  %2538 = vmatprep.subr.mxu0 0.0
  %2539 = vmatpush1.msra.mxu0 0.0
  %2540 = vmatprep.subr.mxu0 0.0
  %2541 = vmatpush1.msra.mxu0 0.0
  %2542 = vmatprep.subr.mxu0 0.0
  %2543 = vmatpush1.msra.mxu0 0.0
  %2544 = vmatprep.subr.mxu0 0.0
  %2545 = vmatpush1.msra.mxu0 0.0
  %2546 = vmatprep.subr.mxu0 0.0
  %2547 = vmatpush1.msra.mxu0 0.0
  %2548 = vmatprep.subr.mxu0 0.0
  %2549 = vmatpush1.msra.mxu0 0.0
  %2550 = vmatprep.subr.mxu0 0.0
  %2551 = vmatpush1.msra.mxu0 0.0
  %2552 = vmatprep.subr.mxu0 0.0
  %2553 = vmatpush1.msra.mxu0 0.0
  %2554 = vmatprep.subr.mxu0 0.0
  %2555 = vmatpush1.msra.mxu0 0.0
  %2556 = vmatprep.subr.mxu0 0.0
  %2557 = vmatpush1.msra.mxu0 0.0
  %2558 = vmatprep.subr.mxu0 0.0
  %2559 = vmatpush1.msra.mxu0 0.0
  %2560 = vmatprep.subr.mxu0 0.0
  %2561 = vmatpush1.msra.mxu0 0.0
  %2562 = vmatprep.mubr.f32.mxu0 0.0
  %2563 = vmatmul.mubr.f32.gmra.mrb[0].mxu0 %v2496
  %v2564 = vpop.f32.mrb[0].mxu0
  %v2565 = vadd.f32 0.0, %v2564
  %v2566 = vpop.f32.mrb[0].mxu0
  %v2567 = vadd.f32 0.0, %v2566
  %2568 = vdwg.mxu0
  %v2569 = vlaneseq
  %v2570 = vshrl.u32 %v2569, 7
  %v2571 = vsub.s32 0, %v2570
  %v2572 = vrot.slane %v2565, %v2571
  %v2573 = vlaneseq
  %v2574 = vshrl.u32 %v2573, 7
  %v2575 = vsub.s32 0, %v2574
  %v2576 = vrot.slane %v2567, %v2575
  %v2577 = vmul.f32 %v929, %v2572
  %v2578 = vmul.f32 %v931, %v2576
  %v2579 = vmul.f32 %v972, %v2572
  %v2580 = vmul.f32 %v974, %v2576
  %v2581 = vmul.f32 %v1015, %v2572
  %v2582 = vmul.f32 %v1017, %v2576
  %v2583 = vmul.f32 %v1058, %v2572
  %v2584 = vmul.f32 %v1060, %v2576
  %v2585 = vmul.f32 %v1101, %v2572
  %v2586 = vmul.f32 %v1103, %v2576
  %v2587 = vmul.f32 %v1144, %v2572
  %v2588 = vmul.f32 %v1146, %v2576
  %v2589 = vmul.f32 %v933, %v2572
  %v2590 = vmul.f32 %v935, %v2576
  %v2591 = vmul.f32 %v976, %v2572
  %v2592 = vmul.f32 %v978, %v2576
  %v2593 = vmul.f32 %v1019, %v2572
  %v2594 = vmul.f32 %v1021, %v2576
  %v2595 = vmul.f32 %v1062, %v2572
  %v2596 = vmul.f32 %v1064, %v2576
  %v2597 = vmul.f32 %v1105, %v2572
  %v2598 = vmul.f32 %v1107, %v2576
  %v2599 = vmul.f32 %v1148, %v2572
  %v2600 = vmul.f32 %v1150, %v2576
  %v2601 = vlaneseq
  %v2602 = vshrl.u32 %v2601, 7
  %v2603 = vsub.s32 1, %v2602
  %v2604 = vrot.slane %v2565, %v2603
  %v2605 = vlaneseq
  %v2606 = vshrl.u32 %v2605, 7
  %v2607 = vsub.s32 1, %v2606
  %v2608 = vrot.slane %v2567, %v2607
  %v2609 = vadd.f32 %v2577, %v2604
  %v2610 = vadd.f32 %v2578, %v2608
  %v2611 = vadd.f32 %v2579, %v2604
  %v2612 = vadd.f32 %v2580, %v2608
  %v2613 = vadd.f32 %v2581, %v2604
  %v2614 = vadd.f32 %v2582, %v2608
  %v2615 = vadd.f32 %v2583, %v2604
  %v2616 = vadd.f32 %v2584, %v2608
  %v2617 = vadd.f32 %v2585, %v2604
  %v2618 = vadd.f32 %v2586, %v2608
  %v2619 = vadd.f32 %v2587, %v2604
  %v2620 = vadd.f32 %v2588, %v2608
  %v2621 = vadd.f32 %v2589, %v2604
  %v2622 = vadd.f32 %v2590, %v2608
  %v2623 = vadd.f32 %v2591, %v2604
  %v2624 = vadd.f32 %v2592, %v2608
  %v2625 = vadd.f32 %v2593, %v2604
  %v2626 = vadd.f32 %v2594, %v2608
  %v2627 = vadd.f32 %v2595, %v2604
  %v2628 = vadd.f32 %v2596, %v2608
  %v2629 = vadd.f32 %v2597, %v2604
  %v2630 = vadd.f32 %v2598, %v2608
  %v2631 = vadd.f32 %v2599, %v2604
  %v2632 = vadd.f32 %v2600, %v2608
  %vm2633 = vcmp.ge.f32.partialorder %v2609, 0.0
  %vm2634 = vcmp.ge.f32.partialorder %v2610, 0.0
  %vm2635 = vcmp.ge.f32.partialorder %v2611, 0.0
  %vm2636 = vcmp.ge.f32.partialorder %v2612, 0.0
  %vm2637 = vcmp.ge.f32.partialorder %v2613, 0.0
  %vm2638 = vcmp.ge.f32.partialorder %v2614, 0.0
  %vm2639 = vcmp.ge.f32.partialorder %v2615, 0.0
  %vm2640 = vcmp.ge.f32.partialorder %v2616, 0.0
  %vm2641 = vcmp.ge.f32.partialorder %v2617, 0.0
  %vm2642 = vcmp.ge.f32.partialorder %v2618, 0.0
  %vm2643 = vcmp.ge.f32.partialorder %v2619, 0.0
  %vm2644 = vcmp.ge.f32.partialorder %v2620, 0.0
  %vm2645 = vcmp.ge.f32.partialorder %v2621, 0.0
  %vm2646 = vcmp.ge.f32.partialorder %v2622, 0.0
  %vm2647 = vcmp.ge.f32.partialorder %v2623, 0.0
  %vm2648 = vcmp.ge.f32.partialorder %v2624, 0.0
  %vm2649 = vcmp.ge.f32.partialorder %v2625, 0.0
  %vm2650 = vcmp.ge.f32.partialorder %v2626, 0.0
  %vm2651 = vcmp.ge.f32.partialorder %v2627, 0.0
  %vm2652 = vcmp.ge.f32.partialorder %v2628, 0.0
  %vm2653 = vcmp.ge.f32.partialorder %v2629, 0.0
  %vm2654 = vcmp.ge.f32.partialorder %v2630, 0.0
  %vm2655 = vcmp.ge.f32.partialorder %v2631, 0.0
  %vm2656 = vcmp.ge.f32.partialorder %v2632, 0.0
  %v2657 = vmul.f32 %v2609, 0.2
  %v2658 = vmul.f32 %v2610, 0.2
  %v2659 = vmul.f32 %v2611, 0.2
  %v2660 = vmul.f32 %v2612, 0.2
  %v2661 = vmul.f32 %v2613, 0.2
  %v2662 = vmul.f32 %v2614, 0.2
  %v2663 = vmul.f32 %v2615, 0.2
  %v2664 = vmul.f32 %v2616, 0.2
  %v2665 = vmul.f32 %v2617, 0.2
  %v2666 = vmul.f32 %v2618, 0.2
  %v2667 = vmul.f32 %v2619, 0.2
  %v2668 = vmul.f32 %v2620, 0.2
  %v2669 = vmul.f32 %v2621, 0.2
  %v2670 = vmul.f32 %v2622, 0.2
  %v2671 = vmul.f32 %v2623, 0.2
  %v2672 = vmul.f32 %v2624, 0.2
  %v2673 = vmul.f32 %v2625, 0.2
  %v2674 = vmul.f32 %v2626, 0.2
  %v2675 = vmul.f32 %v2627, 0.2
  %v2676 = vmul.f32 %v2628, 0.2
  %v2677 = vmul.f32 %v2629, 0.2
  %v2678 = vmul.f32 %v2630, 0.2
  %v2679 = vmul.f32 %v2631, 0.2
  %v2680 = vmul.f32 %v2632, 0.2
  %v2681 = vsel %vm2633, %v2609, %v2657
  %v2682 = vsel %vm2634, %v2610, %v2658
  %v2683 = vsel %vm2635, %v2611, %v2659
  %v2684 = vsel %vm2636, %v2612, %v2660
  %v2685 = vsel %vm2637, %v2613, %v2661
  %v2686 = vsel %vm2638, %v2614, %v2662
  %v2687 = vsel %vm2639, %v2615, %v2663
  %v2688 = vsel %vm2640, %v2616, %v2664
  %v2689 = vsel %vm2641, %v2617, %v2665
  %v2690 = vsel %vm2642, %v2618, %v2666
  %v2691 = vsel %vm2643, %v2619, %v2667
  %v2692 = vsel %vm2644, %v2620, %v2668
  %v2693 = vsel %vm2645, %v2621, %v2669
  %v2694 = vsel %vm2646, %v2622, %v2670
  %v2695 = vsel %vm2647, %v2623, %v2671
  %v2696 = vsel %vm2648, %v2624, %v2672
  %v2697 = vsel %vm2649, %v2625, %v2673
  %v2698 = vsel %vm2650, %v2626, %v2674
  %v2699 = vsel %vm2651, %v2627, %v2675
  %v2700 = vsel %vm2652, %v2628, %v2676
  %v2701 = vsel %vm2653, %v2629, %v2677
  %v2702 = vsel %vm2654, %v2630, %v2678
  %v2703 = vsel %vm2655, %v2631, %v2679
  %v2704 = vsel %vm2656, %v2632, %v2680
  %v2705 = vpack.c.bf16 %v2693, %v2681
  %v2706 = vpack.c.bf16 %v2694, %v2682
  %v2707 = vpack.c.bf16 %v2695, %v2683
  %v2708 = vpack.c.bf16 %v2696, %v2684
  %v2709 = vpack.c.bf16 %v2697, %v2685
  %v2710 = vpack.c.bf16 %v2698, %v2686
  %v2711 = vpack.c.bf16 %v2699, %v2687
  %v2712 = vpack.c.bf16 %v2700, %v2688
  %v2713 = vpack.c.bf16 %v2701, %v2689
  %v2714 = vpack.c.bf16 %v2702, %v2690
  %v2715 = vpack.c.bf16 %v2703, %v2691
  %v2716 = vpack.c.bf16 %v2704, %v2692
  %v2717 = vpack.c.bf16 %v2111, %v2099
  %v2718 = vpack.c.bf16 %v2112, %v2100
  %v2719 = vpack.c.bf16 %v2113, %v2101
  %v2720 = vpack.c.bf16 %v2114, %v2102
  %v2721 = vpack.c.bf16 %v2115, %v2103
  %v2722 = vpack.c.bf16 %v2116, %v2104
  %v2723 = vpack.c.bf16 %v2117, %v2105
  %v2724 = vpack.c.bf16 %v2118, %v2106
  %v2725 = vpack.c.bf16 %v2119, %v2107
  %v2726 = vpack.c.bf16 %v2120, %v2108
  %v2727 = vpack.c.bf16 %v2121, %v2109
  %v2728 = vpack.c.bf16 %v2122, %v2110
  %v2729 = vld [vmem:[%s13] sm:$0xf]
  %v2730 = vld [vmem:[%s13 + $0x4] sm:$0xf]
  %v2731 = vld [vmem:[%s13 + $0x8] sm:$0xf]
  %v2732 = vld [vmem:[%s13 + $0xc] sm:$0xf]
  %v2733 = vld [vmem:[%s13 + $0x10] sm:$0xf]
  %v2734 = vld [vmem:[%s13 + $0x14] sm:$0xf]
  %v2735 = vld [vmem:[%s13 + $0x18] sm:$0xf]
  %v2736 = vld [vmem:[%s13 + $0x1c] sm:$0xf]
  %v2737 = vld [vmem:[%s13 + $0x20] sm:$0xf]
  %v2738 = vld [vmem:[%s13 + $0x24] sm:$0xf]
  %v2739 = vld [vmem:[%s13 + $0x28] sm:$0xf]
  %v2740 = vld [vmem:[%s13 + $0x2c] sm:$0xf]
  %v2741 = vld [vmem:[%s13 + $0x30] sm:$0xf]
  %v2742 = vld [vmem:[%s13 + $0x34] sm:$0xf]
  %v2743 = vld [vmem:[%s13 + $0x38] sm:$0xf]
  %v2744 = vld [vmem:[%s13 + $0x3c] sm:$0xf]
  %v2745 = vld [vmem:[%s13 + $0x40] sm:$0xf]
  %v2746 = vld [vmem:[%s13 + $0x44] sm:$0xf]
  %v2747 = vld [vmem:[%s13 + $0x48] sm:$0xf]
  %v2748 = vld [vmem:[%s13 + $0x4c] sm:$0xf]
  %v2749 = vld [vmem:[%s13 + $0x50] sm:$0xf]
  %v2750 = vld [vmem:[%s13 + $0x54] sm:$0xf]
  %v2751 = vld [vmem:[%s13 + $0x58] sm:$0xf]
  %v2752 = vld [vmem:[%s13 + $0x5c] sm:$0xf]
  %v2753 = vld [vmem:[%s13 + $0x60] sm:$0xf]
  %v2754 = vld [vmem:[%s13 + $0x64] sm:$0xf]
  %v2755 = vld [vmem:[%s13 + $0x68] sm:$0xf]
  %v2756 = vld [vmem:[%s13 + $0x6c] sm:$0xf]
  %v2757 = vld [vmem:[%s13 + $0x70] sm:$0xf]
  %v2758 = vld [vmem:[%s13 + $0x74] sm:$0xf]
  %v2759 = vld [vmem:[%s13 + $0x78] sm:$0xf]
  %v2760 = vld [vmem:[%s13 + $0x7c] sm:$0xf]
  %v2761 = vld [vmem:[%s13 + $0x80] sm:$0xf]
  %v2762 = vld [vmem:[%s13 + $0x84] sm:$0xf]
  %v2763 = vld [vmem:[%s13 + $0x88] sm:$0xf]
  %v2764 = vld [vmem:[%s13 + $0x8c] sm:$0xf]
  %v2765 = vld [vmem:[%s13 + $0x90] sm:$0xf]
  %v2766 = vld [vmem:[%s13 + $0x94] sm:$0xf]
  %v2767 = vld [vmem:[%s13 + $0x98] sm:$0xf]
  %v2768 = vld [vmem:[%s13 + $0x9c] sm:$0xf]
  %v2769 = vld [vmem:[%s13 + $0xa0] sm:$0xf]
  %v2770 = vld [vmem:[%s13 + $0xa4] sm:$0xf]
  %v2771 = vld [vmem:[%s13 + $0xa8] sm:$0xf]
  %v2772 = vld [vmem:[%s13 + $0xac] sm:$0xf]
  %v2773 = vld [vmem:[%s13 + $0xb0] sm:$0xf]
  %v2774 = vld [vmem:[%s13 + $0xb4] sm:$0xf]
  %v2775 = vld [vmem:[%s13 + $0xb8] sm:$0xf]
  %v2776 = vld [vmem:[%s13 + $0xbc] sm:$0xf]
  %v2777 = vld [vmem:[%s13 + $0xc0] sm:$0xf]
  %v2778 = vld [vmem:[%s13 + $0xc4] sm:$0xf]
  %v2779 = vld [vmem:[%s13 + $0xc8] sm:$0xf]
  %v2780 = vld [vmem:[%s13 + $0xcc] sm:$0xf]
  %v2781 = vld [vmem:[%s13 + $0xd0] sm:$0xf]
  %v2782 = vld [vmem:[%s13 + $0xd4] sm:$0xf]
  %v2783 = vld [vmem:[%s13 + $0xd8] sm:$0xf]
  %v2784 = vld [vmem:[%s13 + $0xdc] sm:$0xf]
  %v2785 = vld [vmem:[%s13 + $0xe0] sm:$0xf]
  %v2786 = vld [vmem:[%s13 + $0xe4] sm:$0xf]
  %v2787 = vld [vmem:[%s13 + $0xe8] sm:$0xf]
  %v2788 = vld [vmem:[%s13 + $0xec] sm:$0xf]
  %v2789 = vld [vmem:[%s13 + $0xf0] sm:$0xf]
  %v2790 = vld [vmem:[%s13 + $0xf4] sm:$0xf]
  %v2791 = vld [vmem:[%s13 + $0xf8] sm:$0xf]
  %v2792 = vld [vmem:[%s13 + $0xfc] sm:$0xf]
  %v2793 = vld [vmem:[%s13 + $0x100] sm:$0xf]
  %v2794 = vld [vmem:[%s13 + $0x104] sm:$0xf]
  %v2795 = vld [vmem:[%s13 + $0x108] sm:$0xf]
  %v2796 = vld [vmem:[%s13 + $0x10c] sm:$0xf]
  %v2797 = vld [vmem:[%s13 + $0x110] sm:$0xf]
  %v2798 = vld [vmem:[%s13 + $0x114] sm:$0xf]
  %v2799 = vld [vmem:[%s13 + $0x118] sm:$0xf]
  %v2800 = vld [vmem:[%s13 + $0x11c] sm:$0xf]
  %v2801 = vld [vmem:[%s13 + $0x120] sm:$0xf]
  %v2802 = vld [vmem:[%s13 + $0x124] sm:$0xf]
  %v2803 = vld [vmem:[%s13 + $0x128] sm:$0xf]
  %v2804 = vld [vmem:[%s13 + $0x12c] sm:$0xf]
  %v2805 = vld [vmem:[%s13 + $0x130] sm:$0xf]
  %v2806 = vld [vmem:[%s13 + $0x134] sm:$0xf]
  %v2807 = vld [vmem:[%s13 + $0x138] sm:$0xf]
  %v2808 = vld [vmem:[%s13 + $0x13c] sm:$0xf]
  %v2809 = vld [vmem:[%s13 + $0x140] sm:$0xf]
  %v2810 = vld [vmem:[%s13 + $0x144] sm:$0xf]
  %v2811 = vld [vmem:[%s13 + $0x148] sm:$0xf]
  %v2812 = vld [vmem:[%s13 + $0x14c] sm:$0xf]
  %v2813 = vld [vmem:[%s13 + $0x150] sm:$0xf]
  %v2814 = vld [vmem:[%s13 + $0x154] sm:$0xf]
  %v2815 = vld [vmem:[%s13 + $0x158] sm:$0xf]
  %v2816 = vld [vmem:[%s13 + $0x15c] sm:$0xf]
  %v2817 = vld [vmem:[%s13 + $0x160] sm:$0xf]
  %v2818 = vld [vmem:[%s13 + $0x164] sm:$0xf]
  %v2819 = vld [vmem:[%s13 + $0x168] sm:$0xf]
  %v2820 = vld [vmem:[%s13 + $0x16c] sm:$0xf]
  %v2821 = vld [vmem:[%s13 + $0x170] sm:$0xf]
  %v2822 = vld [vmem:[%s13 + $0x174] sm:$0xf]
  %v2823 = vld [vmem:[%s13 + $0x178] sm:$0xf]
  %v2824 = vld [vmem:[%s13 + $0x17c] sm:$0xf]
  %v2825 = vld [vmem:[%s13 + $0x180] sm:$0xf]
  %v2826 = vld [vmem:[%s13 + $0x184] sm:$0xf]
  %v2827 = vld [vmem:[%s13 + $0x188] sm:$0xf]
  %v2828 = vld [vmem:[%s13 + $0x18c] sm:$0xf]
  %v2829 = vld [vmem:[%s13 + $0x190] sm:$0xf]
  %v2830 = vld [vmem:[%s13 + $0x194] sm:$0xf]
  %v2831 = vld [vmem:[%s13 + $0x198] sm:$0xf]
  %v2832 = vld [vmem:[%s13 + $0x19c] sm:$0xf]
  %v2833 = vld [vmem:[%s13 + $0x1a0] sm:$0xf]
  %v2834 = vld [vmem:[%s13 + $0x1a4] sm:$0xf]
  %v2835 = vld [vmem:[%s13 + $0x1a8] sm:$0xf]
  %v2836 = vld [vmem:[%s13 + $0x1ac] sm:$0xf]
  %v2837 = vld [vmem:[%s13 + $0x1b0] sm:$0xf]
  %v2838 = vld [vmem:[%s13 + $0x1b4] sm:$0xf]
  %v2839 = vld [vmem:[%s13 + $0x1b8] sm:$0xf]
  %v2840 = vld [vmem:[%s13 + $0x1bc] sm:$0xf]
  %v2841 = vld [vmem:[%s13 + $0x1c0] sm:$0xf]
  %v2842 = vld [vmem:[%s13 + $0x1c4] sm:$0xf]
  %v2843 = vld [vmem:[%s13 + $0x1c8] sm:$0xf]
  %v2844 = vld [vmem:[%s13 + $0x1cc] sm:$0xf]
  %v2845 = vld [vmem:[%s13 + $0x1d0] sm:$0xf]
  %v2846 = vld [vmem:[%s13 + $0x1d4] sm:$0xf]
  %v2847 = vld [vmem:[%s13 + $0x1d8] sm:$0xf]
  %v2848 = vld [vmem:[%s13 + $0x1dc] sm:$0xf]
  %v2849 = vld [vmem:[%s13 + $0x1e0] sm:$0xf]
  %v2850 = vld [vmem:[%s13 + $0x1e4] sm:$0xf]
  %v2851 = vld [vmem:[%s13 + $0x1e8] sm:$0xf]
  %v2852 = vld [vmem:[%s13 + $0x1ec] sm:$0xf]
  %v2853 = vld [vmem:[%s13 + $0x1f0] sm:$0xf]
  %v2854 = vld [vmem:[%s13 + $0x1f4] sm:$0xf]
  %v2855 = vld [vmem:[%s13 + $0x1f8] sm:$0xf]
  %v2856 = vld [vmem:[%s13 + $0x1fc] sm:$0xf]
  %v2857 = vld [vmem:[%s13 + $0x200] sm:$0xf]
  %v2858 = vld [vmem:[%s13 + $0x204] sm:$0xf]
  %v2859 = vld [vmem:[%s13 + $0x208] sm:$0xf]
  %v2860 = vld [vmem:[%s13 + $0x20c] sm:$0xf]
  %v2861 = vld [vmem:[%s13 + $0x210] sm:$0xf]
  %v2862 = vld [vmem:[%s13 + $0x214] sm:$0xf]
  %v2863 = vld [vmem:[%s13 + $0x218] sm:$0xf]
  %v2864 = vld [vmem:[%s13 + $0x21c] sm:$0xf]
  %v2865 = vld [vmem:[%s13 + $0x220] sm:$0xf]
  %v2866 = vld [vmem:[%s13 + $0x224] sm:$0xf]
  %v2867 = vld [vmem:[%s13 + $0x228] sm:$0xf]
  %v2868 = vld [vmem:[%s13 + $0x22c] sm:$0xf]
  %v2869 = vld [vmem:[%s13 + $0x230] sm:$0xf]
  %v2870 = vld [vmem:[%s13 + $0x234] sm:$0xf]
  %v2871 = vld [vmem:[%s13 + $0x238] sm:$0xf]
  %v2872 = vld [vmem:[%s13 + $0x23c] sm:$0xf]
  %v2873 = vld [vmem:[%s13 + $0x240] sm:$0xf]
  %v2874 = vld [vmem:[%s13 + $0x244] sm:$0xf]
  %v2875 = vld [vmem:[%s13 + $0x248] sm:$0xf]
  %v2876 = vld [vmem:[%s13 + $0x24c] sm:$0xf]
  %v2877 = vld [vmem:[%s13 + $0x250] sm:$0xf]
  %v2878 = vld [vmem:[%s13 + $0x254] sm:$0xf]
  %v2879 = vld [vmem:[%s13 + $0x258] sm:$0xf]
  %v2880 = vld [vmem:[%s13 + $0x25c] sm:$0xf]
  %v2881 = vld [vmem:[%s13 + $0x260] sm:$0xf]
  %v2882 = vld [vmem:[%s13 + $0x264] sm:$0xf]
  %v2883 = vld [vmem:[%s13 + $0x268] sm:$0xf]
  %v2884 = vld [vmem:[%s13 + $0x26c] sm:$0xf]
  %v2885 = vld [vmem:[%s13 + $0x270] sm:$0xf]
  %v2886 = vld [vmem:[%s13 + $0x274] sm:$0xf]
  %v2887 = vld [vmem:[%s13 + $0x278] sm:$0xf]
  %v2888 = vld [vmem:[%s13 + $0x27c] sm:$0xf]
  %v2889 = vld [vmem:[%s13 + $0x280] sm:$0xf]
  %v2890 = vld [vmem:[%s13 + $0x284] sm:$0xf]
  %v2891 = vld [vmem:[%s13 + $0x288] sm:$0xf]
  %v2892 = vld [vmem:[%s13 + $0x28c] sm:$0xf]
  %v2893 = vld [vmem:[%s13 + $0x290] sm:$0xf]
  %v2894 = vld [vmem:[%s13 + $0x294] sm:$0xf]
  %v2895 = vld [vmem:[%s13 + $0x298] sm:$0xf]
  %v2896 = vld [vmem:[%s13 + $0x29c] sm:$0xf]
  %v2897 = vld [vmem:[%s13 + $0x2a0] sm:$0xf]
  %v2898 = vld [vmem:[%s13 + $0x2a4] sm:$0xf]
  %v2899 = vld [vmem:[%s13 + $0x2a8] sm:$0xf]
  %v2900 = vld [vmem:[%s13 + $0x2ac] sm:$0xf]
  %v2901 = vld [vmem:[%s13 + $0x2b0] sm:$0xf]
  %v2902 = vld [vmem:[%s13 + $0x2b4] sm:$0xf]
  %v2903 = vld [vmem:[%s13 + $0x2b8] sm:$0xf]
  %v2904 = vld [vmem:[%s13 + $0x2bc] sm:$0xf]
  %v2905 = vld [vmem:[%s13 + $0x2c0] sm:$0xf]
  %v2906 = vld [vmem:[%s13 + $0x2c4] sm:$0xf]
  %v2907 = vld [vmem:[%s13 + $0x2c8] sm:$0xf]
  %v2908 = vld [vmem:[%s13 + $0x2cc] sm:$0xf]
  %v2909 = vld [vmem:[%s13 + $0x2d0] sm:$0xf]
  %v2910 = vld [vmem:[%s13 + $0x2d4] sm:$0xf]
  %v2911 = vld [vmem:[%s13 + $0x2d8] sm:$0xf]
  %v2912 = vld [vmem:[%s13 + $0x2dc] sm:$0xf]
  %v2913 = vld [vmem:[%s13 + $0x2e0] sm:$0xf]
  %v2914 = vld [vmem:[%s13 + $0x2e4] sm:$0xf]
  %v2915 = vld [vmem:[%s13 + $0x2e8] sm:$0xf]
  %v2916 = vld [vmem:[%s13 + $0x2ec] sm:$0xf]
  %v2917 = vld [vmem:[%s13 + $0x2f0] sm:$0xf]
  %v2918 = vld [vmem:[%s13 + $0x2f4] sm:$0xf]
  %v2919 = vld [vmem:[%s13 + $0x2f8] sm:$0xf]
  %v2920 = vld [vmem:[%s13 + $0x2fc] sm:$0xf]
  %v2921 = vld [vmem:[%s13 + $0x300] sm:$0xf]
  %v2922 = vld [vmem:[%s13 + $0x304] sm:$0xf]
  %v2923 = vld [vmem:[%s13 + $0x308] sm:$0xf]
  %v2924 = vld [vmem:[%s13 + $0x30c] sm:$0xf]
  %v2925 = vld [vmem:[%s13 + $0x310] sm:$0xf]
  %v2926 = vld [vmem:[%s13 + $0x314] sm:$0xf]
  %v2927 = vld [vmem:[%s13 + $0x318] sm:$0xf]
  %v2928 = vld [vmem:[%s13 + $0x31c] sm:$0xf]
  %v2929 = vld [vmem:[%s13 + $0x320] sm:$0xf]
  %v2930 = vld [vmem:[%s13 + $0x324] sm:$0xf]
  %v2931 = vld [vmem:[%s13 + $0x328] sm:$0xf]
  %v2932 = vld [vmem:[%s13 + $0x32c] sm:$0xf]
  %v2933 = vld [vmem:[%s13 + $0x330] sm:$0xf]
  %v2934 = vld [vmem:[%s13 + $0x334] sm:$0xf]
  %v2935 = vld [vmem:[%s13 + $0x338] sm:$0xf]
  %v2936 = vld [vmem:[%s13 + $0x33c] sm:$0xf]
  %v2937 = vld [vmem:[%s13 + $0x340] sm:$0xf]
  %v2938 = vld [vmem:[%s13 + $0x344] sm:$0xf]
  %v2939 = vld [vmem:[%s13 + $0x348] sm:$0xf]
  %v2940 = vld [vmem:[%s13 + $0x34c] sm:$0xf]
  %v2941 = vld [vmem:[%s13 + $0x350] sm:$0xf]
  %v2942 = vld [vmem:[%s13 + $0x354] sm:$0xf]
  %v2943 = vld [vmem:[%s13 + $0x358] sm:$0xf]
  %v2944 = vld [vmem:[%s13 + $0x35c] sm:$0xf]
  %v2945 = vld [vmem:[%s13 + $0x360] sm:$0xf]
  %v2946 = vld [vmem:[%s13 + $0x364] sm:$0xf]
  %v2947 = vld [vmem:[%s13 + $0x368] sm:$0xf]
  %v2948 = vld [vmem:[%s13 + $0x36c] sm:$0xf]
  %v2949 = vld [vmem:[%s13 + $0x370] sm:$0xf]
  %v2950 = vld [vmem:[%s13 + $0x374] sm:$0xf]
  %v2951 = vld [vmem:[%s13 + $0x378] sm:$0xf]
  %v2952 = vld [vmem:[%s13 + $0x37c] sm:$0xf]
  %v2953 = vld [vmem:[%s13 + $0x380] sm:$0xf]
  %v2954 = vld [vmem:[%s13 + $0x384] sm:$0xf]
  %v2955 = vld [vmem:[%s13 + $0x388] sm:$0xf]
  %v2956 = vld [vmem:[%s13 + $0x38c] sm:$0xf]
  %v2957 = vld [vmem:[%s13 + $0x390] sm:$0xf]
  %v2958 = vld [vmem:[%s13 + $0x394] sm:$0xf]
  %v2959 = vld [vmem:[%s13 + $0x398] sm:$0xf]
  %v2960 = vld [vmem:[%s13 + $0x39c] sm:$0xf]
  %v2961 = vld [vmem:[%s13 + $0x3a0] sm:$0xf]
  %v2962 = vld [vmem:[%s13 + $0x3a4] sm:$0xf]
  %v2963 = vld [vmem:[%s13 + $0x3a8] sm:$0xf]
  %v2964 = vld [vmem:[%s13 + $0x3ac] sm:$0xf]
  %v2965 = vld [vmem:[%s13 + $0x3b0] sm:$0xf]
  %v2966 = vld [vmem:[%s13 + $0x3b4] sm:$0xf]
  %v2967 = vld [vmem:[%s13 + $0x3b8] sm:$0xf]
  %v2968 = vld [vmem:[%s13 + $0x3bc] sm:$0xf]
  %v2969 = vld [vmem:[%s13 + $0x3c0] sm:$0xf]
  %v2970 = vld [vmem:[%s13 + $0x3c4] sm:$0xf]
  %v2971 = vld [vmem:[%s13 + $0x3c8] sm:$0xf]
  %v2972 = vld [vmem:[%s13 + $0x3cc] sm:$0xf]
  %v2973 = vld [vmem:[%s13 + $0x3d0] sm:$0xf]
  %v2974 = vld [vmem:[%s13 + $0x3d4] sm:$0xf]
  %v2975 = vld [vmem:[%s13 + $0x3d8] sm:$0xf]
  %v2976 = vld [vmem:[%s13 + $0x3dc] sm:$0xf]
  %v2977 = vld [vmem:[%s13 + $0x3e0] sm:$0xf]
  %v2978 = vld [vmem:[%s13 + $0x3e4] sm:$0xf]
  %v2979 = vld [vmem:[%s13 + $0x3e8] sm:$0xf]
  %v2980 = vld [vmem:[%s13 + $0x3ec] sm:$0xf]
  %v2981 = vld [vmem:[%s13 + $0x3f0] sm:$0xf]
  %v2982 = vld [vmem:[%s13 + $0x3f4] sm:$0xf]
  %v2983 = vld [vmem:[%s13 + $0x3f8] sm:$0xf]
  %v2984 = vld [vmem:[%s13 + $0x3fc] sm:$0xf]
  %v2985 = vld [vmem:[%s13 + $0x400] sm:$0xf]
  %v2986 = vld [vmem:[%s13 + $0x404] sm:$0xf]
  %v2987 = vld [vmem:[%s13 + $0x408] sm:$0xf]
  %v2988 = vld [vmem:[%s13 + $0x40c] sm:$0xf]
  %v2989 = vld [vmem:[%s13 + $0x410] sm:$0xf]
  %v2990 = vld [vmem:[%s13 + $0x414] sm:$0xf]
  %v2991 = vld [vmem:[%s13 + $0x418] sm:$0xf]
  %v2992 = vld [vmem:[%s13 + $0x41c] sm:$0xf]
  %v2993 = vld [vmem:[%s13 + $0x420] sm:$0xf]
  %v2994 = vld [vmem:[%s13 + $0x424] sm:$0xf]
  %v2995 = vld [vmem:[%s13 + $0x428] sm:$0xf]
  %v2996 = vld [vmem:[%s13 + $0x42c] sm:$0xf]
  %v2997 = vld [vmem:[%s13 + $0x430] sm:$0xf]
  %v2998 = vld [vmem:[%s13 + $0x434] sm:$0xf]
  %v2999 = vld [vmem:[%s13 + $0x438] sm:$0xf]
  %v3000 = vld [vmem:[%s13 + $0x43c] sm:$0xf]
  %v3001 = vld [vmem:[%s13 + $0x440] sm:$0xf]
  %v3002 = vld [vmem:[%s13 + $0x444] sm:$0xf]
  %v3003 = vld [vmem:[%s13 + $0x448] sm:$0xf]
  %v3004 = vld [vmem:[%s13 + $0x44c] sm:$0xf]
  %v3005 = vld [vmem:[%s13 + $0x450] sm:$0xf]
  %v3006 = vld [vmem:[%s13 + $0x454] sm:$0xf]
  %v3007 = vld [vmem:[%s13 + $0x458] sm:$0xf]
  %v3008 = vld [vmem:[%s13 + $0x45c] sm:$0xf]
  %v3009 = vld [vmem:[%s13 + $0x460] sm:$0xf]
  %v3010 = vld [vmem:[%s13 + $0x464] sm:$0xf]
  %v3011 = vld [vmem:[%s13 + $0x468] sm:$0xf]
  %v3012 = vld [vmem:[%s13 + $0x46c] sm:$0xf]
  %v3013 = vld [vmem:[%s13 + $0x470] sm:$0xf]
  %v3014 = vld [vmem:[%s13 + $0x474] sm:$0xf]
  %v3015 = vld [vmem:[%s13 + $0x478] sm:$0xf]
  %v3016 = vld [vmem:[%s13 + $0x47c] sm:$0xf]
  %v3017 = vld [vmem:[%s13 + $0x480] sm:$0xf]
  %v3018 = vld [vmem:[%s13 + $0x484] sm:$0xf]
  %v3019 = vld [vmem:[%s13 + $0x488] sm:$0xf]
  %v3020 = vld [vmem:[%s13 + $0x48c] sm:$0xf]
  %v3021 = vld [vmem:[%s13 + $0x490] sm:$0xf]
  %v3022 = vld [vmem:[%s13 + $0x494] sm:$0xf]
  %v3023 = vld [vmem:[%s13 + $0x498] sm:$0xf]
  %v3024 = vld [vmem:[%s13 + $0x49c] sm:$0xf]
  %v3025 = vld [vmem:[%s13 + $0x4a0] sm:$0xf]
  %v3026 = vld [vmem:[%s13 + $0x4a4] sm:$0xf]
  %v3027 = vld [vmem:[%s13 + $0x4a8] sm:$0xf]
  %v3028 = vld [vmem:[%s13 + $0x4ac] sm:$0xf]
  %v3029 = vld [vmem:[%s13 + $0x4b0] sm:$0xf]
  %v3030 = vld [vmem:[%s13 + $0x4b4] sm:$0xf]
  %v3031 = vld [vmem:[%s13 + $0x4b8] sm:$0xf]
  %v3032 = vld [vmem:[%s13 + $0x4bc] sm:$0xf]
  %v3033 = vld [vmem:[%s13 + $0x4c0] sm:$0xf]
  %v3034 = vld [vmem:[%s13 + $0x4c4] sm:$0xf]
  %v3035 = vld [vmem:[%s13 + $0x4c8] sm:$0xf]
  %v3036 = vld [vmem:[%s13 + $0x4cc] sm:$0xf]
  %v3037 = vld [vmem:[%s13 + $0x4d0] sm:$0xf]
  %v3038 = vld [vmem:[%s13 + $0x4d4] sm:$0xf]
  %v3039 = vld [vmem:[%s13 + $0x4d8] sm:$0xf]
  %v3040 = vld [vmem:[%s13 + $0x4dc] sm:$0xf]
  %v3041 = vld [vmem:[%s13 + $0x4e0] sm:$0xf]
  %v3042 = vld [vmem:[%s13 + $0x4e4] sm:$0xf]
  %v3043 = vld [vmem:[%s13 + $0x4e8] sm:$0xf]
  %v3044 = vld [vmem:[%s13 + $0x4ec] sm:$0xf]
  %v3045 = vld [vmem:[%s13 + $0x4f0] sm:$0xf]
  %v3046 = vld [vmem:[%s13 + $0x4f4] sm:$0xf]
  %v3047 = vld [vmem:[%s13 + $0x4f8] sm:$0xf]
  %v3048 = vld [vmem:[%s13 + $0x4fc] sm:$0xf]
  %v3049 = vld [vmem:[%s13 + $0x500] sm:$0xf]
  %v3050 = vld [vmem:[%s13 + $0x504] sm:$0xf]
  %v3051 = vld [vmem:[%s13 + $0x508] sm:$0xf]
  %v3052 = vld [vmem:[%s13 + $0x50c] sm:$0xf]
  %v3053 = vld [vmem:[%s13 + $0x510] sm:$0xf]
  %v3054 = vld [vmem:[%s13 + $0x514] sm:$0xf]
  %v3055 = vld [vmem:[%s13 + $0x518] sm:$0xf]
  %v3056 = vld [vmem:[%s13 + $0x51c] sm:$0xf]
  %v3057 = vld [vmem:[%s13 + $0x520] sm:$0xf]
  %v3058 = vld [vmem:[%s13 + $0x524] sm:$0xf]
  %v3059 = vld [vmem:[%s13 + $0x528] sm:$0xf]
  %v3060 = vld [vmem:[%s13 + $0x52c] sm:$0xf]
  %v3061 = vld [vmem:[%s13 + $0x530] sm:$0xf]
  %v3062 = vld [vmem:[%s13 + $0x534] sm:$0xf]
  %v3063 = vld [vmem:[%s13 + $0x538] sm:$0xf]
  %v3064 = vld [vmem:[%s13 + $0x53c] sm:$0xf]
  %v3065 = vld [vmem:[%s13 + $0x540] sm:$0xf]
  %v3066 = vld [vmem:[%s13 + $0x544] sm:$0xf]
  %v3067 = vld [vmem:[%s13 + $0x548] sm:$0xf]
  %v3068 = vld [vmem:[%s13 + $0x54c] sm:$0xf]
  %v3069 = vld [vmem:[%s13 + $0x550] sm:$0xf]
  %v3070 = vld [vmem:[%s13 + $0x554] sm:$0xf]
  %v3071 = vld [vmem:[%s13 + $0x558] sm:$0xf]
  %v3072 = vld [vmem:[%s13 + $0x55c] sm:$0xf]
  %v3073 = vld [vmem:[%s13 + $0x560] sm:$0xf]
  %v3074 = vld [vmem:[%s13 + $0x564] sm:$0xf]
  %v3075 = vld [vmem:[%s13 + $0x568] sm:$0xf]
  %v3076 = vld [vmem:[%s13 + $0x56c] sm:$0xf]
  %v3077 = vld [vmem:[%s13 + $0x570] sm:$0xf]
  %v3078 = vld [vmem:[%s13 + $0x574] sm:$0xf]
  %v3079 = vld [vmem:[%s13 + $0x578] sm:$0xf]
  %v3080 = vld [vmem:[%s13 + $0x57c] sm:$0xf]
  %v3081 = vld [vmem:[%s13 + $0x580] sm:$0xf]
  %v3082 = vld [vmem:[%s13 + $0x584] sm:$0xf]
  %v3083 = vld [vmem:[%s13 + $0x588] sm:$0xf]
  %v3084 = vld [vmem:[%s13 + $0x58c] sm:$0xf]
  %v3085 = vld [vmem:[%s13 + $0x590] sm:$0xf]
  %v3086 = vld [vmem:[%s13 + $0x594] sm:$0xf]
  %v3087 = vld [vmem:[%s13 + $0x598] sm:$0xf]
  %v3088 = vld [vmem:[%s13 + $0x59c] sm:$0xf]
  %v3089 = vld [vmem:[%s13 + $0x5a0] sm:$0xf]
  %v3090 = vld [vmem:[%s13 + $0x5a4] sm:$0xf]
  %v3091 = vld [vmem:[%s13 + $0x5a8] sm:$0xf]
  %v3092 = vld [vmem:[%s13 + $0x5ac] sm:$0xf]
  %v3093 = vld [vmem:[%s13 + $0x5b0] sm:$0xf]
  %v3094 = vld [vmem:[%s13 + $0x5b4] sm:$0xf]
  %v3095 = vld [vmem:[%s13 + $0x5b8] sm:$0xf]
  %v3096 = vld [vmem:[%s13 + $0x5bc] sm:$0xf]
  %v3097 = vld [vmem:[%s13 + $0x5c0] sm:$0xf]
  %v3098 = vld [vmem:[%s13 + $0x5c4] sm:$0xf]
  %v3099 = vld [vmem:[%s13 + $0x5c8] sm:$0xf]
  %v3100 = vld [vmem:[%s13 + $0x5cc] sm:$0xf]
  %v3101 = vld [vmem:[%s13 + $0x5d0] sm:$0xf]
  %v3102 = vld [vmem:[%s13 + $0x5d4] sm:$0xf]
  %v3103 = vld [vmem:[%s13 + $0x5d8] sm:$0xf]
  %v3104 = vld [vmem:[%s13 + $0x5dc] sm:$0xf]
  %v3105 = vld [vmem:[%s13 + $0x5e0] sm:$0xf]
  %v3106 = vld [vmem:[%s13 + $0x5e4] sm:$0xf]
  %v3107 = vld [vmem:[%s13 + $0x5e8] sm:$0xf]
  %v3108 = vld [vmem:[%s13 + $0x5ec] sm:$0xf]
  %v3109 = vld [vmem:[%s13 + $0x5f0] sm:$0xf]
  %v3110 = vld [vmem:[%s13 + $0x5f4] sm:$0xf]
  %v3111 = vld [vmem:[%s13 + $0x5f8] sm:$0xf]
  %v3112 = vld [vmem:[%s13 + $0x5fc] sm:$0xf]
  %v3113 = vld [vmem:[%s14] sm:$0x1]
  %v3115 = vlaneseq
  %v3116 = vshrl.u32 %v3115, 7
  %v3117 = vsub.s32 0, %v3116
  %v3118 = vrot.slane %v3113, %v3117
  %v3504 = vunpack.c.l.b16 %v2729
  %v3505 = vunpack.c.l.b16 %v2730
  %v3506 = vunpack.c.l.b16 %v2731
  %v3507 = vunpack.c.l.b16 %v2732
  %v3508 = vunpack.c.l.b16 %v2733
  %v3509 = vunpack.c.l.b16 %v2734
  %v3510 = vunpack.c.l.b16 %v2735
  %v3511 = vunpack.c.l.b16 %v2736
  %v3512 = vunpack.c.l.b16 %v2737
  %v3513 = vunpack.c.l.b16 %v2738
  %v3514 = vunpack.c.l.b16 %v2739
  %v3515 = vunpack.c.l.b16 %v2740
  %v3516 = vunpack.c.l.b16 %v2741
  %v3517 = vunpack.c.l.b16 %v2742
  %v3518 = vunpack.c.l.b16 %v2743
  %v3519 = vunpack.c.l.b16 %v2744
  %v3520 = vunpack.c.l.b16 %v2745
  %v3521 = vunpack.c.l.b16 %v2746
  %v3522 = vunpack.c.l.b16 %v2747
  %v3523 = vunpack.c.l.b16 %v2748
  %v3524 = vunpack.c.l.b16 %v2749
  %v3525 = vunpack.c.l.b16 %v2750
  %v3526 = vunpack.c.l.b16 %v2751
  %v3527 = vunpack.c.l.b16 %v2752
  %v3528 = vunpack.c.l.b16 %v2753
  %v3529 = vunpack.c.l.b16 %v2754
  %v3530 = vunpack.c.l.b16 %v2755
  %v3531 = vunpack.c.l.b16 %v2756
  %v3532 = vunpack.c.l.b16 %v2757
  %v3533 = vunpack.c.l.b16 %v2758
  %v3534 = vunpack.c.l.b16 %v2759
  %v3535 = vunpack.c.l.b16 %v2760
  %v3536 = vunpack.c.l.b16 %v2761
  %v3537 = vunpack.c.l.b16 %v2762
  %v3538 = vunpack.c.l.b16 %v2763
  %v3539 = vunpack.c.l.b16 %v2764
  %v3540 = vunpack.c.l.b16 %v2765
  %v3541 = vunpack.c.l.b16 %v2766
  %v3542 = vunpack.c.l.b16 %v2767
  %v3543 = vunpack.c.l.b16 %v2768
  %v3544 = vunpack.c.l.b16 %v2769
  %v3545 = vunpack.c.l.b16 %v2770
  %v3546 = vunpack.c.l.b16 %v2771
  %v3547 = vunpack.c.l.b16 %v2772
  %v3548 = vunpack.c.l.b16 %v2773
  %v3549 = vunpack.c.l.b16 %v2774
  %v3550 = vunpack.c.l.b16 %v2775
  %v3551 = vunpack.c.l.b16 %v2776
  %v3552 = vunpack.c.l.b16 %v2777
  %v3553 = vunpack.c.l.b16 %v2778
  %v3554 = vunpack.c.l.b16 %v2779
  %v3555 = vunpack.c.l.b16 %v2780
  %v3556 = vunpack.c.l.b16 %v2781
  %v3557 = vunpack.c.l.b16 %v2782
  %v3558 = vunpack.c.l.b16 %v2783
  %v3559 = vunpack.c.l.b16 %v2784
  %v3560 = vunpack.c.l.b16 %v2785
  %v3561 = vunpack.c.l.b16 %v2786
  %v3562 = vunpack.c.l.b16 %v2787
  %v3563 = vunpack.c.l.b16 %v2788
  %v3564 = vunpack.c.l.b16 %v2789
  %v3565 = vunpack.c.l.b16 %v2790
  %v3566 = vunpack.c.l.b16 %v2791
  %v3567 = vunpack.c.l.b16 %v2792
  %v3568 = vunpack.c.l.b16 %v2793
  %v3569 = vunpack.c.l.b16 %v2794
  %v3570 = vunpack.c.l.b16 %v2795
  %v3571 = vunpack.c.l.b16 %v2796
  %v3572 = vunpack.c.l.b16 %v2797
  %v3573 = vunpack.c.l.b16 %v2798
  %v3574 = vunpack.c.l.b16 %v2799
  %v3575 = vunpack.c.l.b16 %v2800
  %v3576 = vunpack.c.l.b16 %v2801
  %v3577 = vunpack.c.l.b16 %v2802
  %v3578 = vunpack.c.l.b16 %v2803
  %v3579 = vunpack.c.l.b16 %v2804
  %v3580 = vunpack.c.l.b16 %v2805
  %v3581 = vunpack.c.l.b16 %v2806
  %v3582 = vunpack.c.l.b16 %v2807
  %v3583 = vunpack.c.l.b16 %v2808
  %v3584 = vunpack.c.l.b16 %v2809
  %v3585 = vunpack.c.l.b16 %v2810
  %v3586 = vunpack.c.l.b16 %v2811
  %v3587 = vunpack.c.l.b16 %v2812
  %v3588 = vunpack.c.l.b16 %v2813
  %v3589 = vunpack.c.l.b16 %v2814
  %v3590 = vunpack.c.l.b16 %v2815
  %v3591 = vunpack.c.l.b16 %v2816
  %v3592 = vunpack.c.l.b16 %v2817
  %v3593 = vunpack.c.l.b16 %v2818
  %v3594 = vunpack.c.l.b16 %v2819
  %v3595 = vunpack.c.l.b16 %v2820
  %v3596 = vunpack.c.l.b16 %v2821
  %v3597 = vunpack.c.l.b16 %v2822
  %v3598 = vunpack.c.l.b16 %v2823
  %v3599 = vunpack.c.l.b16 %v2824
  %v3600 = vunpack.c.l.b16 %v2825
  %v3601 = vunpack.c.l.b16 %v2826
  %v3602 = vunpack.c.l.b16 %v2827
  %v3603 = vunpack.c.l.b16 %v2828
  %v3604 = vunpack.c.l.b16 %v2829
  %v3605 = vunpack.c.l.b16 %v2830
  %v3606 = vunpack.c.l.b16 %v2831
  %v3607 = vunpack.c.l.b16 %v2832
  %v3608 = vunpack.c.l.b16 %v2833
  %v3609 = vunpack.c.l.b16 %v2834
  %v3610 = vunpack.c.l.b16 %v2835
  %v3611 = vunpack.c.l.b16 %v2836
  %v3612 = vunpack.c.l.b16 %v2837
  %v3613 = vunpack.c.l.b16 %v2838
  %v3614 = vunpack.c.l.b16 %v2839
  %v3615 = vunpack.c.l.b16 %v2840
  %v3616 = vunpack.c.l.b16 %v2841
  %v3617 = vunpack.c.l.b16 %v2842
  %v3618 = vunpack.c.l.b16 %v2843
  %v3619 = vunpack.c.l.b16 %v2844
  %v3620 = vunpack.c.l.b16 %v2845
  %v3621 = vunpack.c.l.b16 %v2846
  %v3622 = vunpack.c.l.b16 %v2847
  %v3623 = vunpack.c.l.b16 %v2848
  %v3624 = vunpack.c.l.b16 %v2849
  %v3625 = vunpack.c.l.b16 %v2850
  %v3626 = vunpack.c.l.b16 %v2851
  %v3627 = vunpack.c.l.b16 %v2852
  %v3628 = vunpack.c.l.b16 %v2853
  %v3629 = vunpack.c.l.b16 %v2854
  %v3630 = vunpack.c.l.b16 %v2855
  %v3631 = vunpack.c.l.b16 %v2856
  %v3632 = vunpack.c.l.b16 %v2857
  %v3633 = vunpack.c.l.b16 %v2858
  %v3634 = vunpack.c.l.b16 %v2859
  %v3635 = vunpack.c.l.b16 %v2860
  %v3636 = vunpack.c.l.b16 %v2861
  %v3637 = vunpack.c.l.b16 %v2862
  %v3638 = vunpack.c.l.b16 %v2863
  %v3639 = vunpack.c.l.b16 %v2864
  %v3640 = vunpack.c.l.b16 %v2865
  %v3641 = vunpack.c.l.b16 %v2866
  %v3642 = vunpack.c.l.b16 %v2867
  %v3643 = vunpack.c.l.b16 %v2868
  %v3644 = vunpack.c.l.b16 %v2869
  %v3645 = vunpack.c.l.b16 %v2870
  %v3646 = vunpack.c.l.b16 %v2871
  %v3647 = vunpack.c.l.b16 %v2872
  %v3648 = vunpack.c.l.b16 %v2873
  %v3649 = vunpack.c.l.b16 %v2874
  %v3650 = vunpack.c.l.b16 %v2875
  %v3651 = vunpack.c.l.b16 %v2876
  %v3652 = vunpack.c.l.b16 %v2877
  %v3653 = vunpack.c.l.b16 %v2878
  %v3654 = vunpack.c.l.b16 %v2879
  %v3655 = vunpack.c.l.b16 %v2880
  %v3656 = vunpack.c.l.b16 %v2881
  %v3657 = vunpack.c.l.b16 %v2882
  %v3658 = vunpack.c.l.b16 %v2883
  %v3659 = vunpack.c.l.b16 %v2884
  %v3660 = vunpack.c.l.b16 %v2885
  %v3661 = vunpack.c.l.b16 %v2886
  %v3662 = vunpack.c.l.b16 %v2887
  %v3663 = vunpack.c.l.b16 %v2888
  %v3664 = vunpack.c.l.b16 %v2889
  %v3665 = vunpack.c.l.b16 %v2890
  %v3666 = vunpack.c.l.b16 %v2891
  %v3667 = vunpack.c.l.b16 %v2892
  %v3668 = vunpack.c.l.b16 %v2893
  %v3669 = vunpack.c.l.b16 %v2894
  %v3670 = vunpack.c.l.b16 %v2895
  %v3671 = vunpack.c.l.b16 %v2896
  %v3672 = vunpack.c.l.b16 %v2897
  %v3673 = vunpack.c.l.b16 %v2898
  %v3674 = vunpack.c.l.b16 %v2899
  %v3675 = vunpack.c.l.b16 %v2900
  %v3676 = vunpack.c.l.b16 %v2901
  %v3677 = vunpack.c.l.b16 %v2902
  %v3678 = vunpack.c.l.b16 %v2903
  %v3679 = vunpack.c.l.b16 %v2904
  %v3680 = vunpack.c.l.b16 %v2905
  %v3681 = vunpack.c.l.b16 %v2906
  %v3682 = vunpack.c.l.b16 %v2907
  %v3683 = vunpack.c.l.b16 %v2908
  %v3684 = vunpack.c.l.b16 %v2909
  %v3685 = vunpack.c.l.b16 %v2910
  %v3686 = vunpack.c.l.b16 %v2911
  %v3687 = vunpack.c.l.b16 %v2912
  %v3688 = vunpack.c.l.b16 %v2913
  %v3689 = vunpack.c.l.b16 %v2914
  %v3690 = vunpack.c.l.b16 %v2915
  %v3691 = vunpack.c.l.b16 %v2916
  %v3692 = vunpack.c.l.b16 %v2917
  %v3693 = vunpack.c.l.b16 %v2918
  %v3694 = vunpack.c.l.b16 %v2919
  %v3695 = vunpack.c.l.b16 %v2920
  %v3696 = vunpack.c.l.b16 %v2921
  %v3697 = vunpack.c.l.b16 %v2922
  %v3698 = vunpack.c.l.b16 %v2923
  %v3699 = vunpack.c.l.b16 %v2924
  %v3700 = vunpack.c.l.b16 %v2925
  %v3701 = vunpack.c.l.b16 %v2926
  %v3702 = vunpack.c.l.b16 %v2927
  %v3703 = vunpack.c.l.b16 %v2928
  %v3704 = vunpack.c.l.b16 %v2929
  %v3705 = vunpack.c.l.b16 %v2930
  %v3706 = vunpack.c.l.b16 %v2931
  %v3707 = vunpack.c.l.b16 %v2932
  %v3708 = vunpack.c.l.b16 %v2933
  %v3709 = vunpack.c.l.b16 %v2934
  %v3710 = vunpack.c.l.b16 %v2935
  %v3711 = vunpack.c.l.b16 %v2936
  %v3712 = vunpack.c.l.b16 %v2937
  %v3713 = vunpack.c.l.b16 %v2938
  %v3714 = vunpack.c.l.b16 %v2939
  %v3715 = vunpack.c.l.b16 %v2940
  %v3716 = vunpack.c.l.b16 %v2941
  %v3717 = vunpack.c.l.b16 %v2942
  %v3718 = vunpack.c.l.b16 %v2943
  %v3719 = vunpack.c.l.b16 %v2944
  %v3720 = vunpack.c.l.b16 %v2945
  %v3721 = vunpack.c.l.b16 %v2946
  %v3722 = vunpack.c.l.b16 %v2947
  %v3723 = vunpack.c.l.b16 %v2948
  %v3724 = vunpack.c.l.b16 %v2949
  %v3725 = vunpack.c.l.b16 %v2950
  %v3726 = vunpack.c.l.b16 %v2951
  %v3727 = vunpack.c.l.b16 %v2952
  %v3728 = vunpack.c.l.b16 %v2953
  %v3729 = vunpack.c.l.b16 %v2954
  %v3730 = vunpack.c.l.b16 %v2955
  %v3731 = vunpack.c.l.b16 %v2956
  %v3732 = vunpack.c.l.b16 %v2957
  %v3733 = vunpack.c.l.b16 %v2958
  %v3734 = vunpack.c.l.b16 %v2959
  %v3735 = vunpack.c.l.b16 %v2960
  %v3736 = vunpack.c.l.b16 %v2961
  %v3737 = vunpack.c.l.b16 %v2962
  %v3738 = vunpack.c.l.b16 %v2963
  %v3739 = vunpack.c.l.b16 %v2964
  %v3740 = vunpack.c.l.b16 %v2965
  %v3741 = vunpack.c.l.b16 %v2966
  %v3742 = vunpack.c.l.b16 %v2967
  %v3743 = vunpack.c.l.b16 %v2968
  %v3744 = vunpack.c.l.b16 %v2969
  %v3745 = vunpack.c.l.b16 %v2970
  %v3746 = vunpack.c.l.b16 %v2971
  %v3747 = vunpack.c.l.b16 %v2972
  %v3748 = vunpack.c.l.b16 %v2973
  %v3749 = vunpack.c.l.b16 %v2974
  %v3750 = vunpack.c.l.b16 %v2975
  %v3751 = vunpack.c.l.b16 %v2976
  %v3752 = vunpack.c.l.b16 %v2977
  %v3753 = vunpack.c.l.b16 %v2978
  %v3754 = vunpack.c.l.b16 %v2979
  %v3755 = vunpack.c.l.b16 %v2980
  %v3756 = vunpack.c.l.b16 %v2981
  %v3757 = vunpack.c.l.b16 %v2982
  %v3758 = vunpack.c.l.b16 %v2983
  %v3759 = vunpack.c.l.b16 %v2984
  %v3760 = vunpack.c.l.b16 %v2985
  %v3761 = vunpack.c.l.b16 %v2986
  %v3762 = vunpack.c.l.b16 %v2987
  %v3763 = vunpack.c.l.b16 %v2988
  %v3764 = vunpack.c.l.b16 %v2989
  %v3765 = vunpack.c.l.b16 %v2990
  %v3766 = vunpack.c.l.b16 %v2991
  %v3767 = vunpack.c.l.b16 %v2992
  %v3768 = vunpack.c.l.b16 %v2993
  %v3769 = vunpack.c.l.b16 %v2994
  %v3770 = vunpack.c.l.b16 %v2995
  %v3771 = vunpack.c.l.b16 %v2996
  %v3772 = vunpack.c.l.b16 %v2997
  %v3773 = vunpack.c.l.b16 %v2998
  %v3774 = vunpack.c.l.b16 %v2999
  %v3775 = vunpack.c.l.b16 %v3000
  %v3776 = vunpack.c.l.b16 %v3001
  %v3777 = vunpack.c.l.b16 %v3002
  %v3778 = vunpack.c.l.b16 %v3003
  %v3779 = vunpack.c.l.b16 %v3004
  %v3780 = vunpack.c.l.b16 %v3005
  %v3781 = vunpack.c.l.b16 %v3006
  %v3782 = vunpack.c.l.b16 %v3007
  %v3783 = vunpack.c.l.b16 %v3008
  %v3784 = vunpack.c.l.b16 %v3009
  %v3785 = vunpack.c.l.b16 %v3010
  %v3786 = vunpack.c.l.b16 %v3011
  %v3787 = vunpack.c.l.b16 %v3012
  %v3788 = vunpack.c.l.b16 %v3013
  %v3789 = vunpack.c.l.b16 %v3014
  %v3790 = vunpack.c.l.b16 %v3015
  %v3791 = vunpack.c.l.b16 %v3016
  %v3792 = vunpack.c.l.b16 %v3017
  %v3793 = vunpack.c.l.b16 %v3018
  %v3794 = vunpack.c.l.b16 %v3019
  %v3795 = vunpack.c.l.b16 %v3020
  %v3796 = vunpack.c.l.b16 %v3021
  %v3797 = vunpack.c.l.b16 %v3022
  %v3798 = vunpack.c.l.b16 %v3023
  %v3799 = vunpack.c.l.b16 %v3024
  %v3800 = vunpack.c.l.b16 %v3025
  %v3801 = vunpack.c.l.b16 %v3026
  %v3802 = vunpack.c.l.b16 %v3027
  %v3803 = vunpack.c.l.b16 %v3028
  %v3804 = vunpack.c.l.b16 %v3029
  %v3805 = vunpack.c.l.b16 %v3030
  %v3806 = vunpack.c.l.b16 %v3031
  %v3807 = vunpack.c.l.b16 %v3032
  %v3808 = vunpack.c.l.b16 %v3033
  %v3809 = vunpack.c.l.b16 %v3034
  %v3810 = vunpack.c.l.b16 %v3035
  %v3811 = vunpack.c.l.b16 %v3036
  %v3812 = vunpack.c.l.b16 %v3037
  %v3813 = vunpack.c.l.b16 %v3038
  %v3814 = vunpack.c.l.b16 %v3039
  %v3815 = vunpack.c.l.b16 %v3040
  %v3816 = vunpack.c.l.b16 %v3041
  %v3817 = vunpack.c.l.b16 %v3042
  %v3818 = vunpack.c.l.b16 %v3043
  %v3819 = vunpack.c.l.b16 %v3044
  %v3820 = vunpack.c.l.b16 %v3045
  %v3821 = vunpack.c.l.b16 %v3046
  %v3822 = vunpack.c.l.b16 %v3047
  %v3823 = vunpack.c.l.b16 %v3048
  %v3824 = vunpack.c.l.b16 %v3049
  %v3825 = vunpack.c.l.b16 %v3050
  %v3826 = vunpack.c.l.b16 %v3051
  %v3827 = vunpack.c.l.b16 %v3052
  %v3828 = vunpack.c.l.b16 %v3053
  %v3829 = vunpack.c.l.b16 %v3054
  %v3830 = vunpack.c.l.b16 %v3055
  %v3831 = vunpack.c.l.b16 %v3056
  %v3832 = vunpack.c.l.b16 %v3057
  %v3833 = vunpack.c.l.b16 %v3058
  %v3834 = vunpack.c.l.b16 %v3059
  %v3835 = vunpack.c.l.b16 %v3060
  %v3836 = vunpack.c.l.b16 %v3061
  %v3837 = vunpack.c.l.b16 %v3062
  %v3838 = vunpack.c.l.b16 %v3063
  %v3839 = vunpack.c.l.b16 %v3064
  %v3840 = vunpack.c.l.b16 %v3065
  %v3841 = vunpack.c.l.b16 %v3066
  %v3842 = vunpack.c.l.b16 %v3067
  %v3843 = vunpack.c.l.b16 %v3068
  %v3844 = vunpack.c.l.b16 %v3069
  %v3845 = vunpack.c.l.b16 %v3070
  %v3846 = vunpack.c.l.b16 %v3071
  %v3847 = vunpack.c.l.b16 %v3072
  %v3848 = vunpack.c.l.b16 %v3073
  %v3849 = vunpack.c.l.b16 %v3074
  %v3850 = vunpack.c.l.b16 %v3075
  %v3851 = vunpack.c.l.b16 %v3076
  %v3852 = vunpack.c.l.b16 %v3077
  %v3853 = vunpack.c.l.b16 %v3078
  %v3854 = vunpack.c.l.b16 %v3079
  %v3855 = vunpack.c.l.b16 %v3080
  %v3856 = vunpack.c.l.b16 %v3081
  %v3857 = vunpack.c.l.b16 %v3082
  %v3858 = vunpack.c.l.b16 %v3083
  %v3859 = vunpack.c.l.b16 %v3084
  %v3860 = vunpack.c.l.b16 %v3085
  %v3861 = vunpack.c.l.b16 %v3086
  %v3862 = vunpack.c.l.b16 %v3087
  %v3863 = vunpack.c.l.b16 %v3088
  %v3864 = vunpack.c.l.b16 %v3089
  %v3865 = vunpack.c.l.b16 %v3090
  %v3866 = vunpack.c.l.b16 %v3091
  %v3867 = vunpack.c.l.b16 %v3092
  %v3868 = vunpack.c.l.b16 %v3093
  %v3869 = vunpack.c.l.b16 %v3094
  %v3870 = vunpack.c.l.b16 %v3095
  %v3871 = vunpack.c.l.b16 %v3096
  %v3872 = vunpack.c.l.b16 %v3097
  %v3873 = vunpack.c.l.b16 %v3098
  %v3874 = vunpack.c.l.b16 %v3099
  %v3875 = vunpack.c.l.b16 %v3100
  %v3876 = vunpack.c.l.b16 %v3101
  %v3877 = vunpack.c.l.b16 %v3102
  %v3878 = vunpack.c.l.b16 %v3103
  %v3879 = vunpack.c.l.b16 %v3104
  %v3880 = vunpack.c.l.b16 %v3105
  %v3881 = vunpack.c.l.b16 %v3106
  %v3882 = vunpack.c.l.b16 %v3107
  %v3883 = vunpack.c.l.b16 %v3108
  %v3884 = vunpack.c.l.b16 %v3109
  %v3885 = vunpack.c.l.b16 %v3110
  %v3886 = vunpack.c.l.b16 %v3111
  %v3887 = vunpack.c.l.b16 %v3112
  %v3888 = vpack.c.b16 %v3505, %v3504
  %v3889 = vpack.c.b16 %v3507, %v3506
  %v3890 = vpack.c.b16 %v3509, %v3508
  %v3891 = vpack.c.b16 %v3511, %v3510
  %v3892 = vpack.c.b16 %v3513, %v3512
  %v3893 = vpack.c.b16 %v3515, %v3514
  %v3894 = vpack.c.b16 %v3517, %v3516
  %v3895 = vpack.c.b16 %v3519, %v3518
  %v3896 = vpack.c.b16 %v3521, %v3520
  %v3897 = vpack.c.b16 %v3523, %v3522
  %v3898 = vpack.c.b16 %v3525, %v3524
  %v3899 = vpack.c.b16 %v3527, %v3526
  %v3900 = vpack.c.b16 %v3529, %v3528
  %v3901 = vpack.c.b16 %v3531, %v3530
  %v3902 = vpack.c.b16 %v3533, %v3532
  %v3903 = vpack.c.b16 %v3535, %v3534
  %v3904 = vpack.c.b16 %v3537, %v3536
  %v3905 = vpack.c.b16 %v3539, %v3538
  %v3906 = vpack.c.b16 %v3541, %v3540
  %v3907 = vpack.c.b16 %v3543, %v3542
  %v3908 = vpack.c.b16 %v3545, %v3544
  %v3909 = vpack.c.b16 %v3547, %v3546
  %v3910 = vpack.c.b16 %v3549, %v3548
  %v3911 = vpack.c.b16 %v3551, %v3550
  %v3912 = vpack.c.b16 %v3553, %v3552
  %v3913 = vpack.c.b16 %v3555, %v3554
  %v3914 = vpack.c.b16 %v3557, %v3556
  %v3915 = vpack.c.b16 %v3559, %v3558
  %v3916 = vpack.c.b16 %v3561, %v3560
  %v3917 = vpack.c.b16 %v3563, %v3562
  %v3918 = vpack.c.b16 %v3565, %v3564
  %v3919 = vpack.c.b16 %v3567, %v3566
  %v3920 = vpack.c.b16 %v3569, %v3568
  %v3921 = vpack.c.b16 %v3571, %v3570
  %v3922 = vpack.c.b16 %v3573, %v3572
  %v3923 = vpack.c.b16 %v3575, %v3574
  %v3924 = vpack.c.b16 %v3577, %v3576
  %v3925 = vpack.c.b16 %v3579, %v3578
  %v3926 = vpack.c.b16 %v3581, %v3580
  %v3927 = vpack.c.b16 %v3583, %v3582
  %v3928 = vpack.c.b16 %v3585, %v3584
  %v3929 = vpack.c.b16 %v3587, %v3586
  %v3930 = vpack.c.b16 %v3589, %v3588
  %v3931 = vpack.c.b16 %v3591, %v3590
  %v3932 = vpack.c.b16 %v3593, %v3592
  %v3933 = vpack.c.b16 %v3595, %v3594
  %v3934 = vpack.c.b16 %v3597, %v3596
  %v3935 = vpack.c.b16 %v3599, %v3598
  %v3936 = vpack.c.b16 %v3601, %v3600
  %v3937 = vpack.c.b16 %v3603, %v3602
  %v3938 = vpack.c.b16 %v3605, %v3604
  %v3939 = vpack.c.b16 %v3607, %v3606
  %v3940 = vpack.c.b16 %v3609, %v3608
  %v3941 = vpack.c.b16 %v3611, %v3610
  %v3942 = vpack.c.b16 %v3613, %v3612
  %v3943 = vpack.c.b16 %v3615, %v3614
  %v3944 = vpack.c.b16 %v3617, %v3616
  %v3945 = vpack.c.b16 %v3619, %v3618
  %v3946 = vpack.c.b16 %v3621, %v3620
  %v3947 = vpack.c.b16 %v3623, %v3622
  %v3948 = vpack.c.b16 %v3625, %v3624
  %v3949 = vpack.c.b16 %v3627, %v3626
  %v3950 = vpack.c.b16 %v3629, %v3628
  %v3951 = vpack.c.b16 %v3631, %v3630
  %v3952 = vpack.c.b16 %v3633, %v3632
  %v3953 = vpack.c.b16 %v3635, %v3634
  %v3954 = vpack.c.b16 %v3637, %v3636
  %v3955 = vpack.c.b16 %v3639, %v3638
  %v3956 = vpack.c.b16 %v3641, %v3640
  %v3957 = vpack.c.b16 %v3643, %v3642
  %v3958 = vpack.c.b16 %v3645, %v3644
  %v3959 = vpack.c.b16 %v3647, %v3646
  %v3960 = vpack.c.b16 %v3649, %v3648
  %v3961 = vpack.c.b16 %v3651, %v3650
  %v3962 = vpack.c.b16 %v3653, %v3652
  %v3963 = vpack.c.b16 %v3655, %v3654
  %v3964 = vpack.c.b16 %v3657, %v3656
  %v3965 = vpack.c.b16 %v3659, %v3658
  %v3966 = vpack.c.b16 %v3661, %v3660
  %v3967 = vpack.c.b16 %v3663, %v3662
  %v3968 = vpack.c.b16 %v3665, %v3664
  %v3969 = vpack.c.b16 %v3667, %v3666
  %v3970 = vpack.c.b16 %v3669, %v3668
  %v3971 = vpack.c.b16 %v3671, %v3670
  %v3972 = vpack.c.b16 %v3673, %v3672
  %v3973 = vpack.c.b16 %v3675, %v3674
  %v3974 = vpack.c.b16 %v3677, %v3676
  %v3975 = vpack.c.b16 %v3679, %v3678
  %v3976 = vpack.c.b16 %v3681, %v3680
  %v3977 = vpack.c.b16 %v3683, %v3682
  %v3978 = vpack.c.b16 %v3685, %v3684
  %v3979 = vpack.c.b16 %v3687, %v3686
  %v3980 = vpack.c.b16 %v3689, %v3688
  %v3981 = vpack.c.b16 %v3691, %v3690
  %v3982 = vpack.c.b16 %v3693, %v3692
  %v3983 = vpack.c.b16 %v3695, %v3694
  %v3984 = vpack.c.b16 %v3697, %v3696
  %v3985 = vpack.c.b16 %v3699, %v3698
  %v3986 = vpack.c.b16 %v3701, %v3700
  %v3987 = vpack.c.b16 %v3703, %v3702
  %v3988 = vpack.c.b16 %v3705, %v3704
  %v3989 = vpack.c.b16 %v3707, %v3706
  %v3990 = vpack.c.b16 %v3709, %v3708
  %v3991 = vpack.c.b16 %v3711, %v3710
  %v3992 = vpack.c.b16 %v3713, %v3712
  %v3993 = vpack.c.b16 %v3715, %v3714
  %v3994 = vpack.c.b16 %v3717, %v3716
  %v3995 = vpack.c.b16 %v3719, %v3718
  %v3996 = vpack.c.b16 %v3721, %v3720
  %v3997 = vpack.c.b16 %v3723, %v3722
  %v3998 = vpack.c.b16 %v3725, %v3724
  %v3999 = vpack.c.b16 %v3727, %v3726
  %v4000 = vpack.c.b16 %v3729, %v3728
  %v4001 = vpack.c.b16 %v3731, %v3730
  %v4002 = vpack.c.b16 %v3733, %v3732
  %v4003 = vpack.c.b16 %v3735, %v3734
  %v4004 = vpack.c.b16 %v3737, %v3736
  %v4005 = vpack.c.b16 %v3739, %v3738
  %v4006 = vpack.c.b16 %v3741, %v3740
  %v4007 = vpack.c.b16 %v3743, %v3742
  %v4008 = vpack.c.b16 %v3745, %v3744
  %v4009 = vpack.c.b16 %v3747, %v3746
  %v4010 = vpack.c.b16 %v3749, %v3748
  %v4011 = vpack.c.b16 %v3751, %v3750
  %v4012 = vpack.c.b16 %v3753, %v3752
  %v4013 = vpack.c.b16 %v3755, %v3754
  %v4014 = vpack.c.b16 %v3757, %v3756
  %v4015 = vpack.c.b16 %v3759, %v3758
  %v4016 = vpack.c.b16 %v3761, %v3760
  %v4017 = vpack.c.b16 %v3763, %v3762
  %v4018 = vpack.c.b16 %v3765, %v3764
  %v4019 = vpack.c.b16 %v3767, %v3766
  %v4020 = vpack.c.b16 %v3769, %v3768
  %v4021 = vpack.c.b16 %v3771, %v3770
  %v4022 = vpack.c.b16 %v3773, %v3772
  %v4023 = vpack.c.b16 %v3775, %v3774
  %v4024 = vpack.c.b16 %v3777, %v3776
  %v4025 = vpack.c.b16 %v3779, %v3778
  %v4026 = vpack.c.b16 %v3781, %v3780
  %v4027 = vpack.c.b16 %v3783, %v3782
  %v4028 = vpack.c.b16 %v3785, %v3784
  %v4029 = vpack.c.b16 %v3787, %v3786
  %v4030 = vpack.c.b16 %v3789, %v3788
  %v4031 = vpack.c.b16 %v3791, %v3790
  %v4032 = vpack.c.b16 %v3793, %v3792
  %v4033 = vpack.c.b16 %v3795, %v3794
  %v4034 = vpack.c.b16 %v3797, %v3796
  %v4035 = vpack.c.b16 %v3799, %v3798
  %v4036 = vpack.c.b16 %v3801, %v3800
  %v4037 = vpack.c.b16 %v3803, %v3802
  %v4038 = vpack.c.b16 %v3805, %v3804
  %v4039 = vpack.c.b16 %v3807, %v3806
  %v4040 = vpack.c.b16 %v3809, %v3808
  %v4041 = vpack.c.b16 %v3811, %v3810
  %v4042 = vpack.c.b16 %v3813, %v3812
  %v4043 = vpack.c.b16 %v3815, %v3814
  %v4044 = vpack.c.b16 %v3817, %v3816
  %v4045 = vpack.c.b16 %v3819, %v3818
  %v4046 = vpack.c.b16 %v3821, %v3820
  %v4047 = vpack.c.b16 %v3823, %v3822
  %v4048 = vpack.c.b16 %v3825, %v3824
  %v4049 = vpack.c.b16 %v3827, %v3826
  %v4050 = vpack.c.b16 %v3829, %v3828
  %v4051 = vpack.c.b16 %v3831, %v3830
  %v4052 = vpack.c.b16 %v3833, %v3832
  %v4053 = vpack.c.b16 %v3835, %v3834
  %v4054 = vpack.c.b16 %v3837, %v3836
  %v4055 = vpack.c.b16 %v3839, %v3838
  %v4056 = vpack.c.b16 %v3841, %v3840
  %v4057 = vpack.c.b16 %v3843, %v3842
  %v4058 = vpack.c.b16 %v3845, %v3844
  %v4059 = vpack.c.b16 %v3847, %v3846
  %v4060 = vpack.c.b16 %v3849, %v3848
  %v4061 = vpack.c.b16 %v3851, %v3850
  %v4062 = vpack.c.b16 %v3853, %v3852
  %v4063 = vpack.c.b16 %v3855, %v3854
  %v4064 = vpack.c.b16 %v3857, %v3856
  %v4065 = vpack.c.b16 %v3859, %v3858
  %v4066 = vpack.c.b16 %v3861, %v3860
  %v4067 = vpack.c.b16 %v3863, %v3862
  %v4068 = vpack.c.b16 %v3865, %v3864
  %v4069 = vpack.c.b16 %v3867, %v3866
  %v4070 = vpack.c.b16 %v3869, %v3868
  %v4071 = vpack.c.b16 %v3871, %v3870
  %v4072 = vpack.c.b16 %v3873, %v3872
  %v4073 = vpack.c.b16 %v3875, %v3874
  %v4074 = vpack.c.b16 %v3877, %v3876
  %v4075 = vpack.c.b16 %v3879, %v3878
  %v4076 = vpack.c.b16 %v3881, %v3880
  %v4077 = vpack.c.b16 %v3883, %v3882
  %v4078 = vpack.c.b16 %v3885, %v3884
  %v4079 = vpack.c.b16 %v3887, %v3886
  %4272 = vmatprep.subr.bf16.mxu0 0
  %4273 = vmatpush1.bf16.msra.mxu0 %v3888
  %4274 = vmatprep.subr.bf16.mxu0 0
  %4275 = vmatpush1.bf16.msra.mxu0 %v3889
  %4276 = vmatprep.subr.bf16.mxu0 0
  %4277 = vmatpush1.bf16.msra.mxu0 %v3890
  %4278 = vmatprep.subr.bf16.mxu0 0
  %4279 = vmatpush1.bf16.msra.mxu0 %v3891
  %4280 = vmatprep.subr.bf16.mxu0 0
  %4281 = vmatpush1.bf16.msra.mxu0 %v3892
  %4282 = vmatprep.subr.bf16.mxu0 0
  %4283 = vmatpush1.bf16.msra.mxu0 %v3893
  %4284 = vmatprep.subr.bf16.mxu0 0
  %4285 = vmatpush1.bf16.msra.mxu0 %v3894
  %4286 = vmatprep.subr.bf16.mxu0 0
  %4287 = vmatpush1.bf16.msra.mxu0 %v3895
  %4288 = vmatprep.subr.bf16.mxu0 0
  %4289 = vmatpush1.bf16.msra.mxu0 %v3896
  %4290 = vmatprep.subr.bf16.mxu0 0
  %4291 = vmatpush1.bf16.msra.mxu0 %v3897
  %4292 = vmatprep.subr.bf16.mxu0 0
  %4293 = vmatpush1.bf16.msra.mxu0 %v3898
  %4294 = vmatprep.subr.bf16.mxu0 0
  %4295 = vmatpush1.bf16.msra.mxu0 %v3899
  %4296 = vmatprep.subr.bf16.mxu0 0
  %4297 = vmatpush1.bf16.msra.mxu0 %v3900
  %4298 = vmatprep.subr.bf16.mxu0 0
  %4299 = vmatpush1.bf16.msra.mxu0 %v3901
  %4300 = vmatprep.subr.bf16.mxu0 0
  %4301 = vmatpush1.bf16.msra.mxu0 %v3902
  %4302 = vmatprep.subr.bf16.mxu0 0
  %4303 = vmatpush1.bf16.msra.mxu0 %v3903
  %4304 = vmatprep.mubr.bf16.mxu0 %v2706
  %4305 = vmatmul.mubr.bf16.gmra.mrb[0].mxu0 %v2705
  %v4306 = vpop.f32.mrb[0].mxu0
  %v4307 = vadd.f32 %v3118, %v4306
  %v4308 = vpop.f32.mrb[0].mxu0
  %v4309 = vpop.f32.mrb[0].mxu0
  %v4310 = vadd.f32 %v3118, %v4309
  %v4311 = vpop.f32.mrb[0].mxu0
  %4312 = vdwg.mxu0
  %4313 = vmatprep.subr.bf16.mxu0 0
  %4314 = vmatpush1.bf16.msra.mxu0 %v3904
  %4315 = vmatprep.subr.bf16.mxu0 0
  %4316 = vmatpush1.bf16.msra.mxu0 %v3905
  %4317 = vmatprep.subr.bf16.mxu0 0
  %4318 = vmatpush1.bf16.msra.mxu0 %v3906
  %4319 = vmatprep.subr.bf16.mxu0 0
  %4320 = vmatpush1.bf16.msra.mxu0 %v3907
  %4321 = vmatprep.subr.bf16.mxu0 0
  %4322 = vmatpush1.bf16.msra.mxu0 %v3908
  %4323 = vmatprep.subr.bf16.mxu0 0
  %4324 = vmatpush1.bf16.msra.mxu0 %v3909
  %4325 = vmatprep.subr.bf16.mxu0 0
  %4326 = vmatpush1.bf16.msra.mxu0 %v3910
  %4327 = vmatprep.subr.bf16.mxu0 0
  %4328 = vmatpush1.bf16.msra.mxu0 %v3911
  %4329 = vmatprep.subr.bf16.mxu0 0
  %4330 = vmatpush1.bf16.msra.mxu0 %v3912
  %4331 = vmatprep.subr.bf16.mxu0 0
  %4332 = vmatpush1.bf16.msra.mxu0 %v3913
  %4333 = vmatprep.subr.bf16.mxu0 0
  %4334 = vmatpush1.bf16.msra.mxu0 %v3914
  %4335 = vmatprep.subr.bf16.mxu0 0
  %4336 = vmatpush1.bf16.msra.mxu0 %v3915
  %4337 = vmatprep.subr.bf16.mxu0 0
  %4338 = vmatpush1.bf16.msra.mxu0 %v3916
  %4339 = vmatprep.subr.bf16.mxu0 0
  %4340 = vmatpush1.bf16.msra.mxu0 %v3917
  %4341 = vmatprep.subr.bf16.mxu0 0
  %4342 = vmatpush1.bf16.msra.mxu0 %v3918
  %4343 = vmatprep.subr.bf16.mxu0 0
  %4344 = vmatpush1.bf16.msra.mxu0 %v3919
  %4345 = vmatprep.mubr.bf16.mxu0 %v2708
  %4346 = vmatmul.mubr.bf16.gmra.mrb[0].mxu0 %v2707
  %v4347 = vpop.f32.mrb[0].mxu0
  %v4348 = vadd.f32 %v4307, %v4347
  %v4349 = vpop.f32.mrb[0].mxu0
  %v4350 = vpop.f32.mrb[0].mxu0
  %v4351 = vadd.f32 %v4310, %v4350
  %v4352 = vpop.f32.mrb[0].mxu0
  %4353 = vdwg.mxu0
  %4354 = vmatprep.subr.bf16.mxu0 0
  %4355 = vmatpush1.bf16.msra.mxu0 %v3920
  %4356 = vmatprep.subr.bf16.mxu0 0
  %4357 = vmatpush1.bf16.msra.mxu0 %v3921
  %4358 = vmatprep.subr.bf16.mxu0 0
  %4359 = vmatpush1.bf16.msra.mxu0 %v3922
  %4360 = vmatprep.subr.bf16.mxu0 0
  %4361 = vmatpush1.bf16.msra.mxu0 %v3923
  %4362 = vmatprep.subr.bf16.mxu0 0
  %4363 = vmatpush1.bf16.msra.mxu0 %v3924
  %4364 = vmatprep.subr.bf16.mxu0 0
  %4365 = vmatpush1.bf16.msra.mxu0 %v3925
  %4366 = vmatprep.subr.bf16.mxu0 0
  %4367 = vmatpush1.bf16.msra.mxu0 %v3926
  %4368 = vmatprep.subr.bf16.mxu0 0
  %4369 = vmatpush1.bf16.msra.mxu0 %v3927
  %4370 = vmatprep.subr.bf16.mxu0 0
  %4371 = vmatpush1.bf16.msra.mxu0 %v3928
  %4372 = vmatprep.subr.bf16.mxu0 0
  %4373 = vmatpush1.bf16.msra.mxu0 %v3929
  %4374 = vmatprep.subr.bf16.mxu0 0
  %4375 = vmatpush1.bf16.msra.mxu0 %v3930
  %4376 = vmatprep.subr.bf16.mxu0 0
  %4377 = vmatpush1.bf16.msra.mxu0 %v3931
  %4378 = vmatprep.subr.bf16.mxu0 0
  %4379 = vmatpush1.bf16.msra.mxu0 %v3932
  %4380 = vmatprep.subr.bf16.mxu0 0
  %4381 = vmatpush1.bf16.msra.mxu0 %v3933
  %4382 = vmatprep.subr.bf16.mxu0 0
  %4383 = vmatpush1.bf16.msra.mxu0 %v3934
  %4384 = vmatprep.subr.bf16.mxu0 0
  %4385 = vmatpush1.bf16.msra.mxu0 %v3935
  %4386 = vmatprep.mubr.bf16.mxu0 %v2710
  %4387 = vmatmul.mubr.bf16.gmra.mrb[0].mxu0 %v2709
  %v4388 = vpop.f32.mrb[0].mxu0
  %v4389 = vadd.f32 %v4348, %v4388
  %v4390 = vpop.f32.mrb[0].mxu0
  %v4391 = vpop.f32.mrb[0].mxu0
  %v4392 = vadd.f32 %v4351, %v4391
  %v4393 = vpop.f32.mrb[0].mxu0
  %4394 = vdwg.mxu0
  %4395 = vmatprep.subr.bf16.mxu0 0
  %4396 = vmatpush1.bf16.msra.mxu0 %v3936
  %4397 = vmatprep.subr.bf16.mxu0 0
  %4398 = vmatpush1.bf16.msra.mxu0 %v3937
  %4399 = vmatprep.subr.bf16.mxu0 0
  %4400 = vmatpush1.bf16.msra.mxu0 %v3938
  %4401 = vmatprep.subr.bf16.mxu0 0
  %4402 = vmatpush1.bf16.msra.mxu0 %v3939
  %4403 = vmatprep.subr.bf16.mxu0 0
  %4404 = vmatpush1.bf16.msra.mxu0 %v3940
  %4405 = vmatprep.subr.bf16.mxu0 0
  %4406 = vmatpush1.bf16.msra.mxu0 %v3941
  %4407 = vmatprep.subr.bf16.mxu0 0
  %4408 = vmatpush1.bf16.msra.mxu0 %v3942
  %4409 = vmatprep.subr.bf16.mxu0 0
  %4410 = vmatpush1.bf16.msra.mxu0 %v3943
  %4411 = vmatprep.subr.bf16.mxu0 0
  %4412 = vmatpush1.bf16.msra.mxu0 %v3944
  %4413 = vmatprep.subr.bf16.mxu0 0
  %4414 = vmatpush1.bf16.msra.mxu0 %v3945
  %4415 = vmatprep.subr.bf16.mxu0 0
  %4416 = vmatpush1.bf16.msra.mxu0 %v3946
  %4417 = vmatprep.subr.bf16.mxu0 0
  %4418 = vmatpush1.bf16.msra.mxu0 %v3947
  %4419 = vmatprep.subr.bf16.mxu0 0
  %4420 = vmatpush1.bf16.msra.mxu0 %v3948
  %4421 = vmatprep.subr.bf16.mxu0 0
  %4422 = vmatpush1.bf16.msra.mxu0 %v3949
  %4423 = vmatprep.subr.bf16.mxu0 0
  %4424 = vmatpush1.bf16.msra.mxu0 %v3950
  %4425 = vmatprep.subr.bf16.mxu0 0
  %4426 = vmatpush1.bf16.msra.mxu0 %v3951
  %4427 = vmatprep.mubr.bf16.mxu0 %v2712
  %4428 = vmatmul.mubr.bf16.gmra.mrb[0].mxu0 %v2711
  %v4429 = vpop.f32.mrb[0].mxu0
  %v4430 = vadd.f32 %v4389, %v4429
  %v4431 = vpop.f32.mrb[0].mxu0
  %v4432 = vpop.f32.mrb[0].mxu0
  %v4433 = vadd.f32 %v4392, %v4432
  %v4434 = vpop.f32.mrb[0].mxu0
  %4435 = vdwg.mxu0
  %4436 = vmatprep.subr.bf16.mxu0 0
  %4437 = vmatpush1.bf16.msra.mxu0 %v3952
  %4438 = vmatprep.subr.bf16.mxu0 0
  %4439 = vmatpush1.bf16.msra.mxu0 %v3953
  %4440 = vmatprep.subr.bf16.mxu0 0
  %4441 = vmatpush1.bf16.msra.mxu0 %v3954
  %4442 = vmatprep.subr.bf16.mxu0 0
  %4443 = vmatpush1.bf16.msra.mxu0 %v3955
  %4444 = vmatprep.subr.bf16.mxu0 0
  %4445 = vmatpush1.bf16.msra.mxu0 %v3956
  %4446 = vmatprep.subr.bf16.mxu0 0
  %4447 = vmatpush1.bf16.msra.mxu0 %v3957
  %4448 = vmatprep.subr.bf16.mxu0 0
  %4449 = vmatpush1.bf16.msra.mxu0 %v3958
  %4450 = vmatprep.subr.bf16.mxu0 0
  %4451 = vmatpush1.bf16.msra.mxu0 %v3959
  %4452 = vmatprep.subr.bf16.mxu0 0
  %4453 = vmatpush1.bf16.msra.mxu0 %v3960
  %4454 = vmatprep.subr.bf16.mxu0 0
  %4455 = vmatpush1.bf16.msra.mxu0 %v3961
  %4456 = vmatprep.subr.bf16.mxu0 0
  %4457 = vmatpush1.bf16.msra.mxu0 %v3962
  %4458 = vmatprep.subr.bf16.mxu0 0
  %4459 = vmatpush1.bf16.msra.mxu0 %v3963
  %4460 = vmatprep.subr.bf16.mxu0 0
  %4461 = vmatpush1.bf16.msra.mxu0 %v3964
  %4462 = vmatprep.subr.bf16.mxu0 0
  %4463 = vmatpush1.bf16.msra.mxu0 %v3965
  %4464 = vmatprep.subr.bf16.mxu0 0
  %4465 = vmatpush1.bf16.msra.mxu0 %v3966
  %4466 = vmatprep.subr.bf16.mxu0 0
  %4467 = vmatpush1.bf16.msra.mxu0 %v3967
  %4468 = vmatprep.mubr.bf16.mxu0 %v2714
  %4469 = vmatmul.mubr.bf16.gmra.mrb[0].mxu0 %v2713
  %v4470 = vpop.f32.mrb[0].mxu0
  %v4471 = vadd.f32 %v4430, %v4470
  %v4472 = vpop.f32.mrb[0].mxu0
  %v4473 = vpop.f32.mrb[0].mxu0
  %v4474 = vadd.f32 %v4433, %v4473
  %v4475 = vpop.f32.mrb[0].mxu0
  %4476 = vdwg.mxu0
  %4477 = vmatprep.subr.bf16.mxu0 0
  %4478 = vmatpush1.bf16.msra.mxu0 %v3968
  %4479 = vmatprep.subr.bf16.mxu0 0
  %4480 = vmatpush1.bf16.msra.mxu0 %v3969
  %4481 = vmatprep.subr.bf16.mxu0 0
  %4482 = vmatpush1.bf16.msra.mxu0 %v3970
  %4483 = vmatprep.subr.bf16.mxu0 0
  %4484 = vmatpush1.bf16.msra.mxu0 %v3971
  %4485 = vmatprep.subr.bf16.mxu0 0
  %4486 = vmatpush1.bf16.msra.mxu0 %v3972
  %4487 = vmatprep.subr.bf16.mxu0 0
  %4488 = vmatpush1.bf16.msra.mxu0 %v3973
  %4489 = vmatprep.subr.bf16.mxu0 0
  %4490 = vmatpush1.bf16.msra.mxu0 %v3974
  %4491 = vmatprep.subr.bf16.mxu0 0
  %4492 = vmatpush1.bf16.msra.mxu0 %v3975
  %4493 = vmatprep.subr.bf16.mxu0 0
  %4494 = vmatpush1.bf16.msra.mxu0 %v3976
  %4495 = vmatprep.subr.bf16.mxu0 0
  %4496 = vmatpush1.bf16.msra.mxu0 %v3977
  %4497 = vmatprep.subr.bf16.mxu0 0
  %4498 = vmatpush1.bf16.msra.mxu0 %v3978
  %4499 = vmatprep.subr.bf16.mxu0 0
  %4500 = vmatpush1.bf16.msra.mxu0 %v3979
  %4501 = vmatprep.subr.bf16.mxu0 0
  %4502 = vmatpush1.bf16.msra.mxu0 %v3980
  %4503 = vmatprep.subr.bf16.mxu0 0
  %4504 = vmatpush1.bf16.msra.mxu0 %v3981
  %4505 = vmatprep.subr.bf16.mxu0 0
  %4506 = vmatpush1.bf16.msra.mxu0 %v3982
  %4507 = vmatprep.subr.bf16.mxu0 0
  %4508 = vmatpush1.bf16.msra.mxu0 %v3983
  %4509 = vmatprep.mubr.bf16.mxu0 %v2716
  %4510 = vmatmul.mubr.bf16.gmra.mrb[0].mxu0 %v2715
  %v4511 = vpop.f32.mrb[0].mxu0
  %v4512 = vadd.f32 %v4471, %v4511
  %v4513 = vpop.f32.mrb[0].mxu0
  %v4514 = vpop.f32.mrb[0].mxu0
  %v4515 = vadd.f32 %v4474, %v4514
  %v4516 = vpop.f32.mrb[0].mxu0
  %4517 = vdwg.mxu0
  %4518 = vmatprep.subr.bf16.mxu0 0
  %4519 = vmatpush1.bf16.msra.mxu0 %v3984
  %4520 = vmatprep.subr.bf16.mxu0 0
  %4521 = vmatpush1.bf16.msra.mxu0 %v3985
  %4522 = vmatprep.subr.bf16.mxu0 0
  %4523 = vmatpush1.bf16.msra.mxu0 %v3986
  %4524 = vmatprep.subr.bf16.mxu0 0
  %4525 = vmatpush1.bf16.msra.mxu0 %v3987
  %4526 = vmatprep.subr.bf16.mxu0 0
  %4527 = vmatpush1.bf16.msra.mxu0 %v3988
  %4528 = vmatprep.subr.bf16.mxu0 0
  %4529 = vmatpush1.bf16.msra.mxu0 %v3989
  %4530 = vmatprep.subr.bf16.mxu0 0
  %4531 = vmatpush1.bf16.msra.mxu0 %v3990
  %4532 = vmatprep.subr.bf16.mxu0 0
  %4533 = vmatpush1.bf16.msra.mxu0 %v3991
  %4534 = vmatprep.subr.bf16.mxu0 0
  %4535 = vmatpush1.bf16.msra.mxu0 %v3992
  %4536 = vmatprep.subr.bf16.mxu0 0
  %4537 = vmatpush1.bf16.msra.mxu0 %v3993
  %4538 = vmatprep.subr.bf16.mxu0 0
  %4539 = vmatpush1.bf16.msra.mxu0 %v3994
  %4540 = vmatprep.subr.bf16.mxu0 0
  %4541 = vmatpush1.bf16.msra.mxu0 %v3995
  %4542 = vmatprep.subr.bf16.mxu0 0
  %4543 = vmatpush1.bf16.msra.mxu0 %v3996
  %4544 = vmatprep.subr.bf16.mxu0 0
  %4545 = vmatpush1.bf16.msra.mxu0 %v3997
  %4546 = vmatprep.subr.bf16.mxu0 0
  %4547 = vmatpush1.bf16.msra.mxu0 %v3998
  %4548 = vmatprep.subr.bf16.mxu0 0
  %4549 = vmatpush1.bf16.msra.mxu0 %v3999
  %4550 = vmatprep.mubr.bf16.mxu0 %v2718
  %4551 = vmatmul.mubr.bf16.gmra.mrb[0].mxu0 %v2717
  %v4552 = vpop.f32.mrb[0].mxu0
  %v4553 = vadd.f32 %v4512, %v4552
  %v4554 = vpop.f32.mrb[0].mxu0
  %v4555 = vpop.f32.mrb[0].mxu0
  %v4556 = vadd.f32 %v4515, %v4555
  %v4557 = vpop.f32.mrb[0].mxu0
  %4558 = vdwg.mxu0
  %4559 = vmatprep.subr.bf16.mxu0 0
  %4560 = vmatpush1.bf16.msra.mxu0 %v4000
  %4561 = vmatprep.subr.bf16.mxu0 0
  %4562 = vmatpush1.bf16.msra.mxu0 %v4001
  %4563 = vmatprep.subr.bf16.mxu0 0
  %4564 = vmatpush1.bf16.msra.mxu0 %v4002
  %4565 = vmatprep.subr.bf16.mxu0 0
  %4566 = vmatpush1.bf16.msra.mxu0 %v4003
  %4567 = vmatprep.subr.bf16.mxu0 0
  %4568 = vmatpush1.bf16.msra.mxu0 %v4004
  %4569 = vmatprep.subr.bf16.mxu0 0
  %4570 = vmatpush1.bf16.msra.mxu0 %v4005
  %4571 = vmatprep.subr.bf16.mxu0 0
  %4572 = vmatpush1.bf16.msra.mxu0 %v4006
  %4573 = vmatprep.subr.bf16.mxu0 0
  %4574 = vmatpush1.bf16.msra.mxu0 %v4007
  %4575 = vmatprep.subr.bf16.mxu0 0
  %4576 = vmatpush1.bf16.msra.mxu0 %v4008
  %4577 = vmatprep.subr.bf16.mxu0 0
  %4578 = vmatpush1.bf16.msra.mxu0 %v4009
  %4579 = vmatprep.subr.bf16.mxu0 0
  %4580 = vmatpush1.bf16.msra.mxu0 %v4010
  %4581 = vmatprep.subr.bf16.mxu0 0
  %4582 = vmatpush1.bf16.msra.mxu0 %v4011
  %4583 = vmatprep.subr.bf16.mxu0 0
  %4584 = vmatpush1.bf16.msra.mxu0 %v4012
  %4585 = vmatprep.subr.bf16.mxu0 0
  %4586 = vmatpush1.bf16.msra.mxu0 %v4013
  %4587 = vmatprep.subr.bf16.mxu0 0
  %4588 = vmatpush1.bf16.msra.mxu0 %v4014
  %4589 = vmatprep.subr.bf16.mxu0 0
  %4590 = vmatpush1.bf16.msra.mxu0 %v4015
  %4591 = vmatprep.mubr.bf16.mxu0 %v2720
  %4592 = vmatmul.mubr.bf16.gmra.mrb[0].mxu0 %v2719
  %v4593 = vpop.f32.mrb[0].mxu0
  %v4594 = vadd.f32 %v4553, %v4593
  %v4595 = vpop.f32.mrb[0].mxu0
  %v4596 = vpop.f32.mrb[0].mxu0
  %v4597 = vadd.f32 %v4556, %v4596
  %v4598 = vpop.f32.mrb[0].mxu0
  %4599 = vdwg.mxu0
  %4600 = vmatprep.subr.bf16.mxu0 0
  %4601 = vmatpush1.bf16.msra.mxu0 %v4016
  %4602 = vmatprep.subr.bf16.mxu0 0
  %4603 = vmatpush1.bf16.msra.mxu0 %v4017
  %4604 = vmatprep.subr.bf16.mxu0 0
  %4605 = vmatpush1.bf16.msra.mxu0 %v4018
  %4606 = vmatprep.subr.bf16.mxu0 0
  %4607 = vmatpush1.bf16.msra.mxu0 %v4019
  %4608 = vmatprep.subr.bf16.mxu0 0
  %4609 = vmatpush1.bf16.msra.mxu0 %v4020
  %4610 = vmatprep.subr.bf16.mxu0 0
  %4611 = vmatpush1.bf16.msra.mxu0 %v4021
  %4612 = vmatprep.subr.bf16.mxu0 0
  %4613 = vmatpush1.bf16.msra.mxu0 %v4022
  %4614 = vmatprep.subr.bf16.mxu0 0
  %4615 = vmatpush1.bf16.msra.mxu0 %v4023
  %4616 = vmatprep.subr.bf16.mxu0 0
  %4617 = vmatpush1.bf16.msra.mxu0 %v4024
  %4618 = vmatprep.subr.bf16.mxu0 0
  %4619 = vmatpush1.bf16.msra.mxu0 %v4025
  %4620 = vmatprep.subr.bf16.mxu0 0
  %4621 = vmatpush1.bf16.msra.mxu0 %v4026
  %4622 = vmatprep.subr.bf16.mxu0 0
  %4623 = vmatpush1.bf16.msra.mxu0 %v4027
  %4624 = vmatprep.subr.bf16.mxu0 0
  %4625 = vmatpush1.bf16.msra.mxu0 %v4028
  %4626 = vmatprep.subr.bf16.mxu0 0
  %4627 = vmatpush1.bf16.msra.mxu0 %v4029
  %4628 = vmatprep.subr.bf16.mxu0 0
  %4629 = vmatpush1.bf16.msra.mxu0 %v4030
  %4630 = vmatprep.subr.bf16.mxu0 0
  %4631 = vmatpush1.bf16.msra.mxu0 %v4031
  %4632 = vmatprep.mubr.bf16.mxu0 %v2722
  %4633 = vmatmul.mubr.bf16.gmra.mrb[0].mxu0 %v2721
  %v4634 = vpop.f32.mrb[0].mxu0
  %v4635 = vadd.f32 %v4594, %v4634
  %v4636 = vpop.f32.mrb[0].mxu0
  %v4637 = vpop.f32.mrb[0].mxu0
  %v4638 = vadd.f32 %v4597, %v4637
  %v4639 = vpop.f32.mrb[0].mxu0
  %4640 = vdwg.mxu0
  %4641 = vmatprep.subr.bf16.mxu0 0
  %4642 = vmatpush1.bf16.msra.mxu0 %v4032
  %4643 = vmatprep.subr.bf16.mxu0 0
  %4644 = vmatpush1.bf16.msra.mxu0 %v4033
  %4645 = vmatprep.subr.bf16.mxu0 0
  %4646 = vmatpush1.bf16.msra.mxu0 %v4034
  %4647 = vmatprep.subr.bf16.mxu0 0
  %4648 = vmatpush1.bf16.msra.mxu0 %v4035
  %4649 = vmatprep.subr.bf16.mxu0 0
  %4650 = vmatpush1.bf16.msra.mxu0 %v4036
  %4651 = vmatprep.subr.bf16.mxu0 0
  %4652 = vmatpush1.bf16.msra.mxu0 %v4037
  %4653 = vmatprep.subr.bf16.mxu0 0
  %4654 = vmatpush1.bf16.msra.mxu0 %v4038
  %4655 = vmatprep.subr.bf16.mxu0 0
  %4656 = vmatpush1.bf16.msra.mxu0 %v4039
  %4657 = vmatprep.subr.bf16.mxu0 0
  %4658 = vmatpush1.bf16.msra.mxu0 %v4040
  %4659 = vmatprep.subr.bf16.mxu0 0
  %4660 = vmatpush1.bf16.msra.mxu0 %v4041
  %4661 = vmatprep.subr.bf16.mxu0 0
  %4662 = vmatpush1.bf16.msra.mxu0 %v4042
  %4663 = vmatprep.subr.bf16.mxu0 0
  %4664 = vmatpush1.bf16.msra.mxu0 %v4043
  %4665 = vmatprep.subr.bf16.mxu0 0
  %4666 = vmatpush1.bf16.msra.mxu0 %v4044
  %4667 = vmatprep.subr.bf16.mxu0 0
  %4668 = vmatpush1.bf16.msra.mxu0 %v4045
  %4669 = vmatprep.subr.bf16.mxu0 0
  %4670 = vmatpush1.bf16.msra.mxu0 %v4046
  %4671 = vmatprep.subr.bf16.mxu0 0
  %4672 = vmatpush1.bf16.msra.mxu0 %v4047
  %4673 = vmatprep.mubr.bf16.mxu0 %v2724
  %4674 = vmatmul.mubr.bf16.gmra.mrb[0].mxu0 %v2723
  %v4675 = vpop.f32.mrb[0].mxu0
  %v4676 = vadd.f32 %v4635, %v4675
  %v4677 = vpop.f32.mrb[0].mxu0
  %v4678 = vpop.f32.mrb[0].mxu0
  %v4679 = vadd.f32 %v4638, %v4678
  %v4680 = vpop.f32.mrb[0].mxu0
  %4681 = vdwg.mxu0
  %4682 = vmatprep.subr.bf16.mxu0 0
  %4683 = vmatpush1.bf16.msra.mxu0 %v4048
  %4684 = vmatprep.subr.bf16.mxu0 0
  %4685 = vmatpush1.bf16.msra.mxu0 %v4049
  %4686 = vmatprep.subr.bf16.mxu0 0
  %4687 = vmatpush1.bf16.msra.mxu0 %v4050
  %4688 = vmatprep.subr.bf16.mxu0 0
  %4689 = vmatpush1.bf16.msra.mxu0 %v4051
  %4690 = vmatprep.subr.bf16.mxu0 0
  %4691 = vmatpush1.bf16.msra.mxu0 %v4052
  %4692 = vmatprep.subr.bf16.mxu0 0
  %4693 = vmatpush1.bf16.msra.mxu0 %v4053
  %4694 = vmatprep.subr.bf16.mxu0 0
  %4695 = vmatpush1.bf16.msra.mxu0 %v4054
  %4696 = vmatprep.subr.bf16.mxu0 0
  %4697 = vmatpush1.bf16.msra.mxu0 %v4055
  %4698 = vmatprep.subr.bf16.mxu0 0
  %4699 = vmatpush1.bf16.msra.mxu0 %v4056
  %4700 = vmatprep.subr.bf16.mxu0 0
  %4701 = vmatpush1.bf16.msra.mxu0 %v4057
  %4702 = vmatprep.subr.bf16.mxu0 0
  %4703 = vmatpush1.bf16.msra.mxu0 %v4058
  %4704 = vmatprep.subr.bf16.mxu0 0
  %4705 = vmatpush1.bf16.msra.mxu0 %v4059
  %4706 = vmatprep.subr.bf16.mxu0 0
  %4707 = vmatpush1.bf16.msra.mxu0 %v4060
  %4708 = vmatprep.subr.bf16.mxu0 0
  %4709 = vmatpush1.bf16.msra.mxu0 %v4061
  %4710 = vmatprep.subr.bf16.mxu0 0
  %4711 = vmatpush1.bf16.msra.mxu0 %v4062
  %4712 = vmatprep.subr.bf16.mxu0 0
  %4713 = vmatpush1.bf16.msra.mxu0 %v4063
  %4714 = vmatprep.mubr.bf16.mxu0 %v2726
  %4715 = vmatmul.mubr.bf16.gmra.mrb[0].mxu0 %v2725
  %v4716 = vpop.f32.mrb[0].mxu0
  %v4717 = vadd.f32 %v4676, %v4716
  %v4718 = vpop.f32.mrb[0].mxu0
  %v4719 = vpop.f32.mrb[0].mxu0
  %v4720 = vadd.f32 %v4679, %v4719
  %v4721 = vpop.f32.mrb[0].mxu0
  %4722 = vdwg.mxu0
  %4723 = vmatprep.subr.bf16.mxu0 0
  %4724 = vmatpush1.bf16.msra.mxu0 %v4064
  %4725 = vmatprep.subr.bf16.mxu0 0
  %4726 = vmatpush1.bf16.msra.mxu0 %v4065
  %4727 = vmatprep.subr.bf16.mxu0 0
  %4728 = vmatpush1.bf16.msra.mxu0 %v4066
  %4729 = vmatprep.subr.bf16.mxu0 0
  %4730 = vmatpush1.bf16.msra.mxu0 %v4067
  %4731 = vmatprep.subr.bf16.mxu0 0
  %4732 = vmatpush1.bf16.msra.mxu0 %v4068
  %4733 = vmatprep.subr.bf16.mxu0 0
  %4734 = vmatpush1.bf16.msra.mxu0 %v4069
  %4735 = vmatprep.subr.bf16.mxu0 0
  %4736 = vmatpush1.bf16.msra.mxu0 %v4070
  %4737 = vmatprep.subr.bf16.mxu0 0
  %4738 = vmatpush1.bf16.msra.mxu0 %v4071
  %4739 = vmatprep.subr.bf16.mxu0 0
  %4740 = vmatpush1.bf16.msra.mxu0 %v4072
  %4741 = vmatprep.subr.bf16.mxu0 0
  %4742 = vmatpush1.bf16.msra.mxu0 %v4073
  %4743 = vmatprep.subr.bf16.mxu0 0
  %4744 = vmatpush1.bf16.msra.mxu0 %v4074
  %4745 = vmatprep.subr.bf16.mxu0 0
  %4746 = vmatpush1.bf16.msra.mxu0 %v4075
  %4747 = vmatprep.subr.bf16.mxu0 0
  %4748 = vmatpush1.bf16.msra.mxu0 %v4076
  %4749 = vmatprep.subr.bf16.mxu0 0
  %4750 = vmatpush1.bf16.msra.mxu0 %v4077
  %4751 = vmatprep.subr.bf16.mxu0 0
  %4752 = vmatpush1.bf16.msra.mxu0 %v4078
  %4753 = vmatprep.subr.bf16.mxu0 0
  %4754 = vmatpush1.bf16.msra.mxu0 %v4079
  %4755 = vmatprep.mubr.bf16.mxu0 %v2728
  %4756 = vmatmul.mubr.bf16.gmra.mrb[0].mxu0 %v2727
  %v4757 = vpop.f32.mrb[0].mxu0
  %v4758 = vadd.f32 %v4717, %v4757
  %v4759 = vpop.f32.mrb[0].mxu0
  %v4760 = vpop.f32.mrb[0].mxu0
  %v4761 = vadd.f32 %v4720, %v4760
  %v4762 = vpop.f32.mrb[0].mxu0
  %4763 = vdwg.mxu0
  %vm4764 = vcmp.ge.f32.partialorder %v4758, 0.0
  %vm4765 = vcmp.ge.f32.partialorder %v4761, 0.0
  %v4766 = vmul.f32 %v4758, 0.2
  %v4767 = vmul.f32 %v4761, 0.2
  %v4768 = vsel %vm4764, %v4758, %v4766
  %v4769 = vsel %vm4765, %v4761, %v4767
  %4770 = vst.msk [vmem:[%s15] sm:$0xff] %vm2494, %v4768
  %4771 = vst.msk [vmem:[%s15 + $0x8] sm:$0xff] %vm2494, %v4769
  // Predicated region
  $region62: #{resblock_pallas.1} parent=0 // pred_check
    _
  $region63: #{resblock_pallas.1} parent=0 // pred_check_branch
    %4773 = sbr.rel (0) target = $region65
  $region64: #{resblock_pallas.1} parent=0 // pred_region
    _
  $region65: #{resblock_pallas.1} parent=0 // pred_fallthru
    _
  // Predicated region
  $region66: #{resblock_pallas.1} parent=0 // pred_check
    _
  $region67: #{resblock_pallas.1} parent=0 // pred_check_branch
    %4775 = sbr.rel (0) target = $region69
  $region68: #{resblock_pallas.1} parent=0 // pred_region
    _
  $region69: #{resblock_pallas.1} parent=0 // pred_fallthru
    _

</llo_original>
